<compile_context>
chip_gen: v6e
topology: v6e:2x2x1
jax: 0.10.0
libtpu: 0.0.40
codegen_flags: <defaults>
</compile_context>

<pallas_src>
import functools

import jax
import jax.numpy as jnp
from jax import lax
from jax.experimental import pallas as pl
from jax.experimental.pallas import tpu as pltpu


def _bilstm_kernel(x_ref,                       # (T, B, Din)  f32
                   wih_f_ref, whh_f_ref, b_f_ref,   # (Din,4H), (H,4H), (1,4H)
                   wih_b_ref, b_b_ref,              # reverse dir (no whh_b needed)
                   wfc_ref, bfc_ref,                # (2H,O), (1,O)
                   out_ref,                         # (B, O)
                   gx_ref,                          # scratch (T, B, 4H) f32
                   *, mxu_dtype):
    T, B, _ = x_ref.shape
    H = whh_f_ref.shape[0]
    f32 = jnp.float32

    def mm(a, b_val):
        return jnp.dot(a.astype(mxu_dtype), b_val.astype(mxu_dtype),
                       preferred_element_type=f32)

    # --- hoisted input projection: all x_t @ wih_f + b_f before the loop ----
    # These tiny (B,Din)@(Din,4H) dots have no serial dependency, so they are
    # issued up front and removed from the recurrence's critical chain.
    for t in range(T):                              # static unroll, small T
        gx_ref[t] = mm(x_ref[t], wih_f_ref[...]) + b_f_ref[...]

    # --- backward direction: single step from zero state ---------------------
    # h0 == 0  =>  h0 @ whh_b == 0, so whh_b is never needed; c_new = i*g.
    gates_b = mm(x_ref[T - 1], wih_b_ref[...]) + b_b_ref[...]
    i_b = jax.nn.sigmoid(gates_b[:, 0 * H:1 * H])
    g_b = jnp.tanh(gates_b[:, 2 * H:3 * H])
    o_b = jax.nn.sigmoid(gates_b[:, 3 * H:4 * H])
    h_bwd = o_b * jnp.tanh(i_b * g_b)

    # --- forward recurrence: one h @ whh_f matmul per step --------------------
    def fwd_body(t, carry):
        h, c = carry
        gates = gx_ref[t] + mm(h, whh_f_ref[...])   # (B, 4H) f32
        i = jax.nn.sigmoid(gates[:, 0 * H:1 * H])
        f = jax.nn.sigmoid(gates[:, 1 * H:2 * H])
        g = jnp.tanh(gates[:, 2 * H:3 * H])
        o = jax.nn.sigmoid(gates[:, 3 * H:4 * H])
        c_new = f * c + i * g
        h_new = o * jnp.tanh(c_new)
        return h_new, c_new

    h0 = jnp.zeros((B, H), f32)
    c0 = jnp.zeros((B, H), f32)
    h_fwd, _ = lax.fori_loop(0, T, fwd_body, (h0, c0), unroll=True)

    # --- output head (dropout is identity in eval mode) ----------------------
    # Split-weight form avoids building a (B, 2H) concatenated intermediate.
    out_ref[...] = (mm(h_fwd, wfc_ref[:H, :])
                    + mm(h_bwd, wfc_ref[H:, :])
                    + bfc_ref[...])


def harmonizer_bilstm_forward(x, params, *, mxu_dtype=jnp.float32):
    """x: (B, T, Din) float32, like the PyTorch module (batch_first)."""
    B, T, Din = x.shape
    H = params["whh_f"].shape[0]
    O = params["wfc"].shape[1]
    x_tbd = jnp.transpose(x, (1, 0, 2))             # (T, B, Din)

    # Store matmul weights in the MXU dtype (bf16 halves their HBM->VMEM DMA
    # bytes on v6e/v7x); biases and all state math stay f32 (v5e-safe).
    wih_f = params["wih_f"].astype(mxu_dtype)
    whh_f = params["whh_f"].astype(mxu_dtype)
    wih_b = params["wih_b"].astype(mxu_dtype)
    wfc = params["wfc"].astype(mxu_dtype)

    vmem = pl.BlockSpec(memory_space=pltpu.MemorySpace.VMEM)
    kernel = functools.partial(_bilstm_kernel, mxu_dtype=mxu_dtype)
    # TODO(synk): for large batch on v7x, add a grid over batch tiles with
    # dimension_semantics=("parallel",) so both TensorCores are used; at B=2
    # a grid-less single invocation is the right shape (~0.6 MB working set).
    return pl.pallas_call(
        kernel,
        out_shape=jax.ShapeDtypeStruct((B, O), jnp.float32),
        in_specs=[vmem] * 8,
        out_specs=vmem,
        scratch_shapes=[pltpu.VMEM((T, B, 4 * H), jnp.float32)],
    )(x_tbd, wih_f, whh_f, params["b_f"],
      wih_b, params["b_b"], wfc, params["bfc"])


def init_params(key, input_size=3, hidden_size=128, output_size=3):
    """Deterministic synthetic parameters with PyTorch LSTM/Linear shapes
    (stored transposed for right-multiplication)."""
    H, Din, O = hidden_size, input_size, output_size
    ks = jax.random.split(key, 12)
    s = 1.0 / jnp.sqrt(jnp.float32(H))

    def u(k, shape):
        return jax.random.uniform(k, shape, jnp.float32, -s, s)

    return {
        # forward direction (torch weight_ih_l0 is (4H, Din) -> store (Din, 4H))
        "wih_f": u(ks[0], (Din, 4 * H)),
        "whh_f": u(ks[1], (H, 4 * H)),
        "b_f": u(ks[2], (1, 4 * H)) + u(ks[3], (1, 4 * H)),   # bias_ih + bias_hh
        # reverse direction (whh_b only used by the pure-JAX reference; the
        # kernel provably does not need it because the initial state is zero)
        "wih_b": u(ks[4], (Din, 4 * H)),
        "whh_b": u(ks[5], (H, 4 * H)),
        "b_b": u(ks[6], (1, 4 * H)) + u(ks[7], (1, 4 * H)),
        # fc: torch weight (O, 2H) -> store (2H, O)
        "wfc": u(ks[8], (2 * H, O)),
        "bfc": u(ks[9], (1, O)),
    }


def reference_forward(x, params):
    """Pure-JAX reference implementing torch.nn.LSTM(bidirectional) + Linear."""
    B, T, Din = x.shape
    H = params["whh_f"].shape[0]

    def run_dir(xseq_tbd, wih, whh, b):
        def step(carry, x_t):
            h, c = carry
            gates = x_t @ wih + h @ whh + b
            i = jax.nn.sigmoid(gates[:, :H])
            f = jax.nn.sigmoid(gates[:, H:2 * H])
            g = jnp.tanh(gates[:, 2 * H:3 * H])
            o = jax.nn.sigmoid(gates[:, 3 * H:])
            c = f * c + i * g
            h = o * jnp.tanh(c)
            return (h, c), h
        init = (jnp.zeros((B, H), jnp.float32), jnp.zeros((B, H), jnp.float32))
        (h_last, _), hs = lax.scan(step, init, xseq_tbd)
        return h_last, hs

    x_tbd = jnp.transpose(x, (1, 0, 2))
    h_fwd, _ = run_dir(x_tbd, params["wih_f"], params["whh_f"], params["b_f"])
    # backward direction processes reversed time; hidden at original t=T-1 is
    # the first scanned output.
    _, hs_b = run_dir(x_tbd[::-1], params["wih_b"], params["whh_b"], params["b_b"])
    feat = jnp.concatenate([h_fwd, hs_b[0]], axis=-1)
    return feat @ params["wfc"] + params["bfc"]


if __name__ == "__main__":
    key = jax.random.PRNGKey(0)
    k_x, k_p = jax.random.split(key)

    B, T, Din, H, O = 2, 8, 3, 128, 3          # module defaults: Din=3, H=128, O=3
    x = jax.random.normal(k_x, (B, T, Din), jnp.float32)
    params = init_params(k_p, input_size=Din, hidden_size=H, output_size=O)

    y_ref = reference_forward(x, params)

    # f32-MXU path: strict check against the pure-JAX reference.
    y = jax.block_until_ready(harmonizer_bilstm_forward(x, params))
    assert y.shape == (B, O)
    assert jnp.allclose(y, y_ref, atol=1e-3, rtol=1e-3), (y, y_ref)

    # bf16-at-the-MXU path (v6e/v7x): state math stays f32; looser tolerance
    # since the 8-step recurrence accumulates bf16 rounding.
    y_bf16 = jax.block_until_ready(
        harmonizer_bilstm_forward(x, params, mxu_dtype=jnp.bfloat16))
    assert jnp.allclose(y_bf16, y_ref, atol=5e-2, rtol=5e-2), (y_bf16, y_ref)

    print("KERNEL_OK")
</pallas_src>

<mosaic_0001>
module attributes {stable_mosaic.version = 11 : i64} {
  func.func @_bilstm_kernel(%arg0: memref<8x2x3xf32, #tpu.memory_space<vmem>>, %arg1: memref<3x512xf32, #tpu.memory_space<vmem>>, %arg2: memref<128x512xf32, #tpu.memory_space<vmem>>, %arg3: memref<1x512xf32, #tpu.memory_space<vmem>>, %arg4: memref<3x512xf32, #tpu.memory_space<vmem>>, %arg5: memref<1x512xf32, #tpu.memory_space<vmem>>, %arg6: memref<256x3xf32, #tpu.memory_space<vmem>>, %arg7: memref<1x3xf32, #tpu.memory_space<vmem>>, %arg8: memref<2x3xf32, #tpu.memory_space<vmem>>, %arg9: memref<8x2x512xf32, #tpu.memory_space<vmem>>) attributes {dimension_semantics = [], scalar_prefetch = 0 : i64, scratch_operands = 1 : i64, tpu.core_type = #tpu.core_type<tc>} {
    %c0 = arith.constant 0 : index
    %c0_0 = arith.constant 0 : index
    %c0_1 = arith.constant 0 : index
    %0 = vector.load %arg0[%c0, %c0_0, %c0_1] : memref<8x2x3xf32, #tpu.memory_space<vmem>>, vector<1x2x3xf32>
    %1 = vector.shape_cast %0 : vector<1x2x3xf32> to vector<2x3xf32>
    %c0_2 = arith.constant 0 : index
    %c0_3 = arith.constant 0 : index
    %2 = vector.load %arg1[%c0_2, %c0_3] : memref<3x512xf32, #tpu.memory_space<vmem>>, vector<3x512xf32>
    %cst = arith.constant dense<0.000000e+00> : vector<2x512xf32>
    %3 = tpu.matmul %1, %2, %cst {dimension_numbers = #tpu.dot_dimension_numbers<[1], [0], [0], [1], [0, 0, 1, 1], [], []>} : vector<2x3xf32>, vector<3x512xf32>, vector<2x512xf32> -> vector<2x512xf32>
    %c0_4 = arith.constant 0 : index
    %c0_5 = arith.constant 0 : index
    %4 = vector.load %arg3[%c0_4, %c0_5] : memref<1x512xf32, #tpu.memory_space<vmem>>, vector<1x512xf32>
    %5 = vector.broadcast %4 : vector<1x512xf32> to vector<2x512xf32>
    %6 = arith.addf %3, %5 : vector<2x512xf32>
    %c0_6 = arith.constant 0 : index
    %c0_7 = arith.constant 0 : index
    %c0_8 = arith.constant 0 : index
    %7 = vector.load %arg9[%c0_6, %c0_7, %c0_8] : memref<8x2x512xf32, #tpu.memory_space<vmem>>, vector<1x2x512xf32>
    %8 = vector.shape_cast %7 : vector<1x2x512xf32> to vector<2x512xf32>
    %9 = vector.shape_cast %6 : vector<2x512xf32> to vector<1x2x512xf32>
    tpu.vector_store %arg9[%c0_6, %c0_7, %c0_8], %9 {strides = array<i32>} : memref<8x2x512xf32, #tpu.memory_space<vmem>>, vector<1x2x512xf32>,
    %c1 = arith.constant 1 : index
    %c0_9 = arith.constant 0 : index
    %c0_10 = arith.constant 0 : index
    %10 = vector.load %arg0[%c1, %c0_9, %c0_10] : memref<8x2x3xf32, #tpu.memory_space<vmem>>, vector<1x2x3xf32>
    %11 = vector.shape_cast %10 : vector<1x2x3xf32> to vector<2x3xf32>
    %c0_11 = arith.constant 0 : index
    %c0_12 = arith.constant 0 : index
    %12 = vector.load %arg1[%c0_11, %c0_12] : memref<3x512xf32, #tpu.memory_space<vmem>>, vector<3x512xf32>
    %cst_13 = arith.constant dense<0.000000e+00> : vector<2x512xf32>
    %13 = tpu.matmul %11, %12, %cst_13 {dimension_numbers = #tpu.dot_dimension_numbers<[1], [0], [0], [1], [0, 0, 1, 1], [], []>} : vector<2x3xf32>, vector<3x512xf32>, vector<2x512xf32> -> vector<2x512xf32>
    %c0_14 = arith.constant 0 : index
    %c0_15 = arith.constant 0 : index
    %14 = vector.load %arg3[%c0_14, %c0_15] : memref<1x512xf32, #tpu.memory_space<vmem>>, vector<1x512xf32>
    %15 = vector.broadcast %14 : vector<1x512xf32> to vector<2x512xf32>
    %16 = arith.addf %13, %15 : vector<2x512xf32>
    %c1_16 = arith.constant 1 : index
    %c0_17 = arith.constant 0 : index
    %c0_18 = arith.constant 0 : index
    %17 = vector.load %arg9[%c1_16, %c0_17, %c0_18] : memref<8x2x512xf32, #tpu.memory_space<vmem>>, vector<1x2x512xf32>
    %18 = vector.shape_cast %17 : vector<1x2x512xf32> to vector<2x512xf32>
    %19 = vector.shape_cast %16 : vector<2x512xf32> to vector<1x2x512xf32>
    tpu.vector_store %arg9[%c1_16, %c0_17, %c0_18], %19 {strides = array<i32>} : memref<8x2x512xf32, #tpu.memory_space<vmem>>, vector<1x2x512xf32>,
    %c2 = arith.constant 2 : index
    %c0_19 = arith.constant 0 : index
    %c0_20 = arith.constant 0 : index
    %20 = vector.load %arg0[%c2, %c0_19, %c0_20] : memref<8x2x3xf32, #tpu.memory_space<vmem>>, vector<1x2x3xf32>
    %21 = vector.shape_cast %20 : vector<1x2x3xf32> to vector<2x3xf32>
    %c0_21 = arith.constant 0 : index
    %c0_22 = arith.constant 0 : index
    %22 = vector.load %arg1[%c0_21, %c0_22] : memref<3x512xf32, #tpu.memory_space<vmem>>, vector<3x512xf32>
    %cst_23 = arith.constant dense<0.000000e+00> : vector<2x512xf32>
    %23 = tpu.matmul %21, %22, %cst_23 {dimension_numbers = #tpu.dot_dimension_numbers<[1], [0], [0], [1], [0, 0, 1, 1], [], []>} : vector<2x3xf32>, vector<3x512xf32>, vector<2x512xf32> -> vector<2x512xf32>
    %c0_24 = arith.constant 0 : index
    %c0_25 = arith.constant 0 : index
    %24 = vector.load %arg3[%c0_24, %c0_25] : memref<1x512xf32, #tpu.memory_space<vmem>>, vector<1x512xf32>
    %25 = vector.broadcast %24 : vector<1x512xf32> to vector<2x512xf32>
    %26 = arith.addf %23, %25 : vector<2x512xf32>
    %c2_26 = arith.constant 2 : index
    %c0_27 = arith.constant 0 : index
    %c0_28 = arith.constant 0 : index
    %27 = vector.load %arg9[%c2_26, %c0_27, %c0_28] : memref<8x2x512xf32, #tpu.memory_space<vmem>>, vector<1x2x512xf32>
    %28 = vector.shape_cast %27 : vector<1x2x512xf32> to vector<2x512xf32>
    %29 = vector.shape_cast %26 : vector<2x512xf32> to vector<1x2x512xf32>
    tpu.vector_store %arg9[%c2_26, %c0_27, %c0_28], %29 {strides = array<i32>} : memref<8x2x512xf32, #tpu.memory_space<vmem>>, vector<1x2x512xf32>,
    %c3 = arith.constant 3 : index
    %c0_29 = arith.constant 0 : index
    %c0_30 = arith.constant 0 : index
    %30 = vector.load %arg0[%c3, %c0_29, %c0_30] : memref<8x2x3xf32, #tpu.memory_space<vmem>>, vector<1x2x3xf32>
    %31 = vector.shape_cast %30 : vector<1x2x3xf32> to vector<2x3xf32>
    %c0_31 = arith.constant 0 : index
    %c0_32 = arith.constant 0 : index
    %32 = vector.load %arg1[%c0_31, %c0_32] : memref<3x512xf32, #tpu.memory_space<vmem>>, vector<3x512xf32>
    %cst_33 = arith.constant dense<0.000000e+00> : vector<2x512xf32>
    %33 = tpu.matmul %31, %32, %cst_33 {dimension_numbers = #tpu.dot_dimension_numbers<[1], [0], [0], [1], [0, 0, 1, 1], [], []>} : vector<2x3xf32>, vector<3x512xf32>, vector<2x512xf32> -> vector<2x512xf32>
    %c0_34 = arith.constant 0 : index
    %c0_35 = arith.constant 0 : index
    %34 = vector.load %arg3[%c0_34, %c0_35] : memref<1x512xf32, #tpu.memory_space<vmem>>, vector<1x512xf32>
    %35 = vector.broadcast %34 : vector<1x512xf32> to vector<2x512xf32>
    %36 = arith.addf %33, %35 : vector<2x512xf32>
    %c3_36 = arith.constant 3 : index
    %c0_37 = arith.constant 0 : index
    %c0_38 = arith.constant 0 : index
    %37 = vector.load %arg9[%c3_36, %c0_37, %c0_38] : memref<8x2x512xf32, #tpu.memory_space<vmem>>, vector<1x2x512xf32>
    %38 = vector.shape_cast %37 : vector<1x2x512xf32> to vector<2x512xf32>
    %39 = vector.shape_cast %36 : vector<2x512xf32> to vector<1x2x512xf32>
    tpu.vector_store %arg9[%c3_36, %c0_37, %c0_38], %39 {strides = array<i32>} : memref<8x2x512xf32, #tpu.memory_space<vmem>>, vector<1x2x512xf32>,
    %c4 = arith.constant 4 : index
    %c0_39 = arith.constant 0 : index
    %c0_40 = arith.constant 0 : index
    %40 = vector.load %arg0[%c4, %c0_39, %c0_40] : memref<8x2x3xf32, #tpu.memory_space<vmem>>, vector<1x2x3xf32>
    %41 = vector.shape_cast %40 : vector<1x2x3xf32> to vector<2x3xf32>
    %c0_41 = arith.constant 0 : index
    %c0_42 = arith.constant 0 : index
    %42 = vector.load %arg1[%c0_41, %c0_42] : memref<3x512xf32, #tpu.memory_space<vmem>>, vector<3x512xf32>
    %cst_43 = arith.constant dense<0.000000e+00> : vector<2x512xf32>
    %43 = tpu.matmul %41, %42, %cst_43 {dimension_numbers = #tpu.dot_dimension_numbers<[1], [0], [0], [1], [0, 0, 1, 1], [], []>} : vector<2x3xf32>, vector<3x512xf32>, vector<2x512xf32> -> vector<2x512xf32>
    %c0_44 = arith.constant 0 : index
    %c0_45 = arith.constant 0 : index
    %44 = vector.load %arg3[%c0_44, %c0_45] : memref<1x512xf32, #tpu.memory_space<vmem>>, vector<1x512xf32>
    %45 = vector.broadcast %44 : vector<1x512xf32> to vector<2x512xf32>
    %46 = arith.addf %43, %45 : vector<2x512xf32>
    %c4_46 = arith.constant 4 : index
    %c0_47 = arith.constant 0 : index
    %c0_48 = arith.constant 0 : index
    %47 = vector.load %arg9[%c4_46, %c0_47, %c0_48] : memref<8x2x512xf32, #tpu.memory_space<vmem>>, vector<1x2x512xf32>
    %48 = vector.shape_cast %47 : vector<1x2x512xf32> to vector<2x512xf32>
    %49 = vector.shape_cast %46 : vector<2x512xf32> to vector<1x2x512xf32>
    tpu.vector_store %arg9[%c4_46, %c0_47, %c0_48], %49 {strides = array<i32>} : memref<8x2x512xf32, #tpu.memory_space<vmem>>, vector<1x2x512xf32>,
    %c5 = arith.constant 5 : index
    %c0_49 = arith.constant 0 : index
    %c0_50 = arith.constant 0 : index
    %50 = vector.load %arg0[%c5, %c0_49, %c0_50] : memref<8x2x3xf32, #tpu.memory_space<vmem>>, vector<1x2x3xf32>
    %51 = vector.shape_cast %50 : vector<1x2x3xf32> to vector<2x3xf32>
    %c0_51 = arith.constant 0 : index
    %c0_52 = arith.constant 0 : index
    %52 = vector.load %arg1[%c0_51, %c0_52] : memref<3x512xf32, #tpu.memory_space<vmem>>, vector<3x512xf32>
    %cst_53 = arith.constant dense<0.000000e+00> : vector<2x512xf32>
    %53 = tpu.matmul %51, %52, %cst_53 {dimension_numbers = #tpu.dot_dimension_numbers<[1], [0], [0], [1], [0, 0, 1, 1], [], []>} : vector<2x3xf32>, vector<3x512xf32>, vector<2x512xf32> -> vector<2x512xf32>
    %c0_54 = arith.constant 0 : index
    %c0_55 = arith.constant 0 : index
    %54 = vector.load %arg3[%c0_54, %c0_55] : memref<1x512xf32, #tpu.memory_space<vmem>>, vector<1x512xf32>
    %55 = vector.broadcast %54 : vector<1x512xf32> to vector<2x512xf32>
    %56 = arith.addf %53, %55 : vector<2x512xf32>
    %c5_56 = arith.constant 5 : index
    %c0_57 = arith.constant 0 : index
    %c0_58 = arith.constant 0 : index
    %57 = vector.load %arg9[%c5_56, %c0_57, %c0_58] : memref<8x2x512xf32, #tpu.memory_space<vmem>>, vector<1x2x512xf32>
    %58 = vector.shape_cast %57 : vector<1x2x512xf32> to vector<2x512xf32>
    %59 = vector.shape_cast %56 : vector<2x512xf32> to vector<1x2x512xf32>
    tpu.vector_store %arg9[%c5_56, %c0_57, %c0_58], %59 {strides = array<i32>} : memref<8x2x512xf32, #tpu.memory_space<vmem>>, vector<1x2x512xf32>,
    %c6 = arith.constant 6 : index
    %c0_59 = arith.constant 0 : index
    %c0_60 = arith.constant 0 : index
    %60 = vector.load %arg0[%c6, %c0_59, %c0_60] : memref<8x2x3xf32, #tpu.memory_space<vmem>>, vector<1x2x3xf32>
    %61 = vector.shape_cast %60 : vector<1x2x3xf32> to vector<2x3xf32>
    %c0_61 = arith.constant 0 : index
    %c0_62 = arith.constant 0 : index
    %62 = vector.load %arg1[%c0_61, %c0_62] : memref<3x512xf32, #tpu.memory_space<vmem>>, vector<3x512xf32>
    %cst_63 = arith.constant dense<0.000000e+00> : vector<2x512xf32>
    %63 = tpu.matmul %61, %62, %cst_63 {dimension_numbers = #tpu.dot_dimension_numbers<[1], [0], [0], [1], [0, 0, 1, 1], [], []>} : vector<2x3xf32>, vector<3x512xf32>, vector<2x512xf32> -> vector<2x512xf32>
    %c0_64 = arith.constant 0 : index
    %c0_65 = arith.constant 0 : index
    %64 = vector.load %arg3[%c0_64, %c0_65] : memref<1x512xf32, #tpu.memory_space<vmem>>, vector<1x512xf32>
    %65 = vector.broadcast %64 : vector<1x512xf32> to vector<2x512xf32>
    %66 = arith.addf %63, %65 : vector<2x512xf32>
    %c6_66 = arith.constant 6 : index
    %c0_67 = arith.constant 0 : index
    %c0_68 = arith.constant 0 : index
    %67 = vector.load %arg9[%c6_66, %c0_67, %c0_68] : memref<8x2x512xf32, #tpu.memory_space<vmem>>, vector<1x2x512xf32>
    %68 = vector.shape_cast %67 : vector<1x2x512xf32> to vector<2x512xf32>
    %69 = vector.shape_cast %66 : vector<2x512xf32> to vector<1x2x512xf32>
    tpu.vector_store %arg9[%c6_66, %c0_67, %c0_68], %69 {strides = array<i32>} : memref<8x2x512xf32, #tpu.memory_space<vmem>>, vector<1x2x512xf32>,
    %c7 = arith.constant 7 : index
    %c0_69 = arith.constant 0 : index
    %c0_70 = arith.constant 0 : index
    %70 = vector.load %arg0[%c7, %c0_69, %c0_70] : memref<8x2x3xf32, #tpu.memory_space<vmem>>, vector<1x2x3xf32>
    %71 = vector.shape_cast %70 : vector<1x2x3xf32> to vector<2x3xf32>
    %c0_71 = arith.constant 0 : index
    %c0_72 = arith.constant 0 : index
    %72 = vector.load %arg1[%c0_71, %c0_72] : memref<3x512xf32, #tpu.memory_space<vmem>>, vector<3x512xf32>
    %cst_73 = arith.constant dense<0.000000e+00> : vector<2x512xf32>
    %73 = tpu.matmul %71, %72, %cst_73 {dimension_numbers = #tpu.dot_dimension_numbers<[1], [0], [0], [1], [0, 0, 1, 1], [], []>} : vector<2x3xf32>, vector<3x512xf32>, vector<2x512xf32> -> vector<2x512xf32>
    %c0_74 = arith.constant 0 : index
    %c0_75 = arith.constant 0 : index
    %74 = vector.load %arg3[%c0_74, %c0_75] : memref<1x512xf32, #tpu.memory_space<vmem>>, vector<1x512xf32>
    %75 = vector.broadcast %74 : vector<1x512xf32> to vector<2x512xf32>
    %76 = arith.addf %73, %75 : vector<2x512xf32>
    %c7_76 = arith.constant 7 : index
    %c0_77 = arith.constant 0 : index
    %c0_78 = arith.constant 0 : index
    %77 = vector.load %arg9[%c7_76, %c0_77, %c0_78] : memref<8x2x512xf32, #tpu.memory_space<vmem>>, vector<1x2x512xf32>
    %78 = vector.shape_cast %77 : vector<1x2x512xf32> to vector<2x512xf32>
    %79 = vector.shape_cast %76 : vector<2x512xf32> to vector<1x2x512xf32>
    tpu.vector_store %arg9[%c7_76, %c0_77, %c0_78], %79 {strides = array<i32>} : memref<8x2x512xf32, #tpu.memory_space<vmem>>, vector<1x2x512xf32>,
    %c7_79 = arith.constant 7 : index
    %c0_80 = arith.constant 0 : index
    %c0_81 = arith.constant 0 : index
    %80 = vector.load %arg0[%c7_79, %c0_80, %c0_81] : memref<8x2x3xf32, #tpu.memory_space<vmem>>, vector<1x2x3xf32>
    %81 = vector.shape_cast %80 : vector<1x2x3xf32> to vector<2x3xf32>
    %c0_82 = arith.constant 0 : index
    %c0_83 = arith.constant 0 : index
    %82 = vector.load %arg4[%c0_82, %c0_83] : memref<3x512xf32, #tpu.memory_space<vmem>>, vector<3x512xf32>
    %cst_84 = arith.constant dense<0.000000e+00> : vector<2x512xf32>
    %83 = tpu.matmul %81, %82, %cst_84 {dimension_numbers = #tpu.dot_dimension_numbers<[1], [0], [0], [1], [0, 0, 1, 1], [], []>} : vector<2x3xf32>, vector<3x512xf32>, vector<2x512xf32> -> vector<2x512xf32>
    %c0_85 = arith.constant 0 : index
    %c0_86 = arith.constant 0 : index
    %84 = vector.load %arg5[%c0_85, %c0_86] : memref<1x512xf32, #tpu.memory_space<vmem>>, vector<1x512xf32>
    %85 = vector.broadcast %84 : vector<1x512xf32> to vector<2x512xf32>
    %86 = arith.addf %83, %85 : vector<2x512xf32>
    %87 = vector.extract_strided_slice %86 {offsets = [0, 0], sizes = [2, 128], strides = [1, 1]} : vector<2x512xf32> to vector<2x128xf32>
    %88 = arith.negf %87 : vector<2x128xf32>
    %89 = math.exp %88 : vector<2x128xf32>
    %cst_87 = arith.constant 1.000000e+00 : f32
    %90 = vector.broadcast %cst_87 : f32 to vector<2x128xf32>
    %91 = arith.addf %90, %89 : vector<2x128xf32>
    %92 = arith.divf %90, %91 : vector<2x128xf32>
    %93 = vector.extract_strided_slice %86 {offsets = [0, 256], sizes = [2, 128], strides = [1, 1]} : vector<2x512xf32> to vector<2x128xf32>
    %94 = math.tanh %93 : vector<2x128xf32>
    %95 = vector.extract_strided_slice %86 {offsets = [0, 384], sizes = [2, 128], strides = [1, 1]} : vector<2x512xf32> to vector<2x128xf32>
    %96 = arith.negf %95 : vector<2x128xf32>
    %97 = math.exp %96 : vector<2x128xf32>
    %cst_88 = arith.constant 1.000000e+00 : f32
    %98 = vector.broadcast %cst_88 : f32 to vector<2x128xf32>
    %99 = arith.addf %98, %97 : vector<2x128xf32>
    %100 = arith.divf %98, %99 : vector<2x128xf32>
    %101 = arith.mulf %92, %94 : vector<2x128xf32>
    %102 = math.tanh %101 : vector<2x128xf32>
    %103 = arith.mulf %100, %102 : vector<2x128xf32>
    %cst_89 = arith.constant 0.000000e+00 : f32
    %104 = vector.broadcast %cst_89 : f32 to vector<2x128xf32>
    %cst_90 = arith.constant 0.000000e+00 : f32
    %105 = vector.broadcast %cst_90 : f32 to vector<2x128xf32>
    %c0_i32 = arith.constant 0 : i32
    %106 = arith.index_cast %c0_i32 : i32 to index
    %c0_91 = arith.constant 0 : index
    %c0_92 = arith.constant 0 : index
    %107 = vector.load %arg9[%106, %c0_91, %c0_92] : memref<8x2x512xf32, #tpu.memory_space<vmem>>, vector<1x2x512xf32>
    %108 = vector.shape_cast %107 : vector<1x2x512xf32> to vector<2x512xf32>
    %c0_93 = arith.constant 0 : index
    %c0_94 = arith.constant 0 : index
    %109 = vector.load %arg2[%c0_93, %c0_94] : memref<128x512xf32, #tpu.memory_space<vmem>>, vector<128x512xf32>
    %cst_95 = arith.constant dense<0.000000e+00> : vector<2x512xf32>
    %110 = tpu.matmul %104, %109, %cst_95 {dimension_numbers = #tpu.dot_dimension_numbers<[1], [0], [0], [1], [0, 0, 1, 1], [], []>} : vector<2x128xf32>, vector<128x512xf32>, vector<2x512xf32> -> vector<2x512xf32>
    %111 = arith.addf %108, %110 : vector<2x512xf32>
    %112 = vector.extract_strided_slice %111 {offsets = [0, 0], sizes = [2, 128], strides = [1, 1]} : vector<2x512xf32> to vector<2x128xf32>
    %113 = arith.negf %112 : vector<2x128xf32>
    %114 = math.exp %113 : vector<2x128xf32>
    %cst_96 = arith.constant 1.000000e+00 : f32
    %115 = vector.broadcast %cst_96 : f32 to vector<2x128xf32>
    %116 = arith.addf %115, %114 : vector<2x128xf32>
    %117 = arith.divf %115, %116 : vector<2x128xf32>
    %118 = vector.extract_strided_slice %111 {offsets = [0, 128], sizes = [2, 128], strides = [1, 1]} : vector<2x512xf32> to vector<2x128xf32>
    %119 = arith.negf %118 : vector<2x128xf32>
    %120 = math.exp %119 : vector<2x128xf32>
    %cst_97 = arith.constant 1.000000e+00 : f32
    %121 = vector.broadcast %cst_97 : f32 to vector<2x128xf32>
    %122 = arith.addf %121, %120 : vector<2x128xf32>
    %123 = arith.divf %121, %122 : vector<2x128xf32>
    %124 = vector.extract_strided_slice %111 {offsets = [0, 256], sizes = [2, 128], strides = [1, 1]} : vector<2x512xf32> to vector<2x128xf32>
    %125 = math.tanh %124 : vector<2x128xf32>
    %126 = vector.extract_strided_slice %111 {offsets = [0, 384], sizes = [2, 128], strides = [1, 1]} : vector<2x512xf32> to vector<2x128xf32>
    %127 = arith.negf %126 : vector<2x128xf32>
    %128 = math.exp %127 : vector<2x128xf32>
    %cst_98 = arith.constant 1.000000e+00 : f32
    %129 = vector.broadcast %cst_98 : f32 to vector<2x128xf32>
    %130 = arith.addf %129, %128 : vector<2x128xf32>
    %131 = arith.divf %129, %130 : vector<2x128xf32>
    %132 = arith.mulf %123, %105 : vector<2x128xf32>
    %133 = arith.mulf %117, %125 : vector<2x128xf32>
    %134 = arith.addf %132, %133 : vector<2x128xf32>
    %135 = math.tanh %134 : vector<2x128xf32>
    %136 = arith.mulf %131, %135 : vector<2x128xf32>
    %c1_i32 = arith.constant 1 : i32
    %137 = arith.index_cast %c1_i32 : i32 to index
    %c0_99 = arith.constant 0 : index
    %c0_100 = arith.constant 0 : index
    %138 = vector.load %arg9[%137, %c0_99, %c0_100] : memref<8x2x512xf32, #tpu.memory_space<vmem>>, vector<1x2x512xf32>
    %139 = vector.shape_cast %138 : vector<1x2x512xf32> to vector<2x512xf32>
    %c0_101 = arith.constant 0 : index
    %c0_102 = arith.constant 0 : index
    %140 = vector.load %arg2[%c0_101, %c0_102] : memref<128x512xf32, #tpu.memory_space<vmem>>, vector<128x512xf32>
    %cst_103 = arith.constant dense<0.000000e+00> : vector<2x512xf32>
    %141 = tpu.matmul %136, %140, %cst_103 {dimension_numbers = #tpu.dot_dimension_numbers<[1], [0], [0], [1], [0, 0, 1, 1], [], []>} : vector<2x128xf32>, vector<128x512xf32>, vector<2x512xf32> -> vector<2x512xf32>
    %142 = arith.addf %139, %141 : vector<2x512xf32>
    %143 = vector.extract_strided_slice %142 {offsets = [0, 0], sizes = [2, 128], strides = [1, 1]} : vector<2x512xf32> to vector<2x128xf32>
    %144 = arith.negf %143 : vector<2x128xf32>
    %145 = math.exp %144 : vector<2x128xf32>
    %cst_104 = arith.constant 1.000000e+00 : f32
    %146 = vector.broadcast %cst_104 : f32 to vector<2x128xf32>
    %147 = arith.addf %146, %145 : vector<2x128xf32>
    %148 = arith.divf %146, %147 : vector<2x128xf32>
    %149 = vector.extract_strided_slice %142 {offsets = [0, 128], sizes = [2, 128], strides = [1, 1]} : vector<2x512xf32> to vector<2x128xf32>
    %150 = arith.negf %149 : vector<2x128xf32>
    %151 = math.exp %150 : vector<2x128xf32>
    %cst_105 = arith.constant 1.000000e+00 : f32
    %152 = vector.broadcast %cst_105 : f32 to vector<2x128xf32>
    %153 = arith.addf %152, %151 : vector<2x128xf32>
    %154 = arith.divf %152, %153 : vector<2x128xf32>
    %155 = vector.extract_strided_slice %142 {offsets = [0, 256], sizes = [2, 128], strides = [1, 1]} : vector<2x512xf32> to vector<2x128xf32>
    %156 = math.tanh %155 : vector<2x128xf32>
    %157 = vector.extract_strided_slice %142 {offsets = [0, 384], sizes = [2, 128], strides = [1, 1]} : vector<2x512xf32> to vector<2x128xf32>
    %158 = arith.negf %157 : vector<2x128xf32>
    %159 = math.exp %158 : vector<2x128xf32>
    %cst_106 = arith.constant 1.000000e+00 : f32
    %160 = vector.broadcast %cst_106 : f32 to vector<2x128xf32>
    %161 = arith.addf %160, %159 : vector<2x128xf32>
    %162 = arith.divf %160, %161 : vector<2x128xf32>
    %163 = arith.mulf %154, %134 : vector<2x128xf32>
    %164 = arith.mulf %148, %156 : vector<2x128xf32>
    %165 = arith.addf %163, %164 : vector<2x128xf32>
    %166 = math.tanh %165 : vector<2x128xf32>
    %167 = arith.mulf %162, %166 : vector<2x128xf32>
    %c2_i32 = arith.constant 2 : i32
    %168 = arith.index_cast %c2_i32 : i32 to index
    %c0_107 = arith.constant 0 : index
    %c0_108 = arith.constant 0 : index
    %169 = vector.load %arg9[%168, %c0_107, %c0_108] : memref<8x2x512xf32, #tpu.memory_space<vmem>>, vector<1x2x512xf32>
    %170 = vector.shape_cast %169 : vector<1x2x512xf32> to vector<2x512xf32>
    %c0_109 = arith.constant 0 : index
    %c0_110 = arith.constant 0 : index
    %171 = vector.load %arg2[%c0_109, %c0_110] : memref<128x512xf32, #tpu.memory_space<vmem>>, vector<128x512xf32>
    %cst_111 = arith.constant dense<0.000000e+00> : vector<2x512xf32>
    %172 = tpu.matmul %167, %171, %cst_111 {dimension_numbers = #tpu.dot_dimension_numbers<[1], [0], [0], [1], [0, 0, 1, 1], [], []>} : vector<2x128xf32>, vector<128x512xf32>, vector<2x512xf32> -> vector<2x512xf32>
    %173 = arith.addf %170, %172 : vector<2x512xf32>
    %174 = vector.extract_strided_slice %173 {offsets = [0, 0], sizes = [2, 128], strides = [1, 1]} : vector<2x512xf32> to vector<2x128xf32>
    %175 = arith.negf %174 : vector<2x128xf32>
    %176 = math.exp %175 : vector<2x128xf32>
    %cst_112 = arith.constant 1.000000e+00 : f32
    %177 = vector.broadcast %cst_112 : f32 to vector<2x128xf32>
    %178 = arith.addf %177, %176 : vector<2x128xf32>
    %179 = arith.divf %177, %178 : vector<2x128xf32>
    %180 = vector.extract_strided_slice %173 {offsets = [0, 128], sizes = [2, 128], strides = [1, 1]} : vector<2x512xf32> to vector<2x128xf32>
    %181 = arith.negf %180 : vector<2x128xf32>
    %182 = math.exp %181 : vector<2x128xf32>
    %cst_113 = arith.constant 1.000000e+00 : f32
    %183 = vector.broadcast %cst_113 : f32 to vector<2x128xf32>
    %184 = arith.addf %183, %182 : vector<2x128xf32>
    %185 = arith.divf %183, %184 : vector<2x128xf32>
    %186 = vector.extract_strided_slice %173 {offsets = [0, 256], sizes = [2, 128], strides = [1, 1]} : vector<2x512xf32> to vector<2x128xf32>
    %187 = math.tanh %186 : vector<2x128xf32>
    %188 = vector.extract_strided_slice %173 {offsets = [0, 384], sizes = [2, 128], strides = [1, 1]} : vector<2x512xf32> to vector<2x128xf32>
    %189 = arith.negf %188 : vector<2x128xf32>
    %190 = math.exp %189 : vector<2x128xf32>
    %cst_114 = arith.constant 1.000000e+00 : f32
    %191 = vector.broadcast %cst_114 : f32 to vector<2x128xf32>
    %192 = arith.addf %191, %190 : vector<2x128xf32>
    %193 = arith.divf %191, %192 : vector<2x128xf32>
    %194 = arith.mulf %185, %165 : vector<2x128xf32>
    %195 = arith.mulf %179, %187 : vector<2x128xf32>
    %196 = arith.addf %194, %195 : vector<2x128xf32>
    %197 = math.tanh %196 : vector<2x128xf32>
    %198 = arith.mulf %193, %197 : vector<2x128xf32>
    %c3_i32 = arith.constant 3 : i32
    %199 = arith.index_cast %c3_i32 : i32 to index
    %c0_115 = arith.constant 0 : index
    %c0_116 = arith.constant 0 : index
    %200 = vector.load %arg9[%199, %c0_115, %c0_116] : memref<8x2x512xf32, #tpu.memory_space<vmem>>, vector<1x2x512xf32>
    %201 = vector.shape_cast %200 : vector<1x2x512xf32> to vector<2x512xf32>
    %c0_117 = arith.constant 0 : index
    %c0_118 = arith.constant 0 : index
    %202 = vector.load %arg2[%c0_117, %c0_118] : memref<128x512xf32, #tpu.memory_space<vmem>>, vector<128x512xf32>
    %cst_119 = arith.constant dense<0.000000e+00> : vector<2x512xf32>
    %203 = tpu.matmul %198, %202, %cst_119 {dimension_numbers = #tpu.dot_dimension_numbers<[1], [0], [0], [1], [0, 0, 1, 1], [], []>} : vector<2x128xf32>, vector<128x512xf32>, vector<2x512xf32> -> vector<2x512xf32>
    %204 = arith.addf %201, %203 : vector<2x512xf32>
    %205 = vector.extract_strided_slice %204 {offsets = [0, 0], sizes = [2, 128], strides = [1, 1]} : vector<2x512xf32> to vector<2x128xf32>
    %206 = arith.negf %205 : vector<2x128xf32>
    %207 = math.exp %206 : vector<2x128xf32>
    %cst_120 = arith.constant 1.000000e+00 : f32
    %208 = vector.broadcast %cst_120 : f32 to vector<2x128xf32>
    %209 = arith.addf %208, %207 : vector<2x128xf32>
    %210 = arith.divf %208, %209 : vector<2x128xf32>
    %211 = vector.extract_strided_slice %204 {offsets = [0, 128], sizes = [2, 128], strides = [1, 1]} : vector<2x512xf32> to vector<2x128xf32>
    %212 = arith.negf %211 : vector<2x128xf32>
    %213 = math.exp %212 : vector<2x128xf32>
    %cst_121 = arith.constant 1.000000e+00 : f32
    %214 = vector.broadcast %cst_121 : f32 to vector<2x128xf32>
    %215 = arith.addf %214, %213 : vector<2x128xf32>
    %216 = arith.divf %214, %215 : vector<2x128xf32>
    %217 = vector.extract_strided_slice %204 {offsets = [0, 256], sizes = [2, 128], strides = [1, 1]} : vector<2x512xf32> to vector<2x128xf32>
    %218 = math.tanh %217 : vector<2x128xf32>
    %219 = vector.extract_strided_slice %204 {offsets = [0, 384], sizes = [2, 128], strides = [1, 1]} : vector<2x512xf32> to vector<2x128xf32>
    %220 = arith.negf %219 : vector<2x128xf32>
    %221 = math.exp %220 : vector<2x128xf32>
    %cst_122 = arith.constant 1.000000e+00 : f32
    %222 = vector.broadcast %cst_122 : f32 to vector<2x128xf32>
    %223 = arith.addf %222, %221 : vector<2x128xf32>
    %224 = arith.divf %222, %223 : vector<2x128xf32>
    %225 = arith.mulf %216, %196 : vector<2x128xf32>
    %226 = arith.mulf %210, %218 : vector<2x128xf32>
    %227 = arith.addf %225, %226 : vector<2x128xf32>
    %228 = math.tanh %227 : vector<2x128xf32>
    %229 = arith.mulf %224, %228 : vector<2x128xf32>
    %c4_i32 = arith.constant 4 : i32
    %230 = arith.index_cast %c4_i32 : i32 to index
    %c0_123 = arith.constant 0 : index
    %c0_124 = arith.constant 0 : index
    %231 = vector.load %arg9[%230, %c0_123, %c0_124] : memref<8x2x512xf32, #tpu.memory_space<vmem>>, vector<1x2x512xf32>
    %232 = vector.shape_cast %231 : vector<1x2x512xf32> to vector<2x512xf32>
    %c0_125 = arith.constant 0 : index
    %c0_126 = arith.constant 0 : index
    %233 = vector.load %arg2[%c0_125, %c0_126] : memref<128x512xf32, #tpu.memory_space<vmem>>, vector<128x512xf32>
    %cst_127 = arith.constant dense<0.000000e+00> : vector<2x512xf32>
    %234 = tpu.matmul %229, %233, %cst_127 {dimension_numbers = #tpu.dot_dimension_numbers<[1], [0], [0], [1], [0, 0, 1, 1], [], []>} : vector<2x128xf32>, vector<128x512xf32>, vector<2x512xf32> -> vector<2x512xf32>
    %235 = arith.addf %232, %234 : vector<2x512xf32>
    %236 = vector.extract_strided_slice %235 {offsets = [0, 0], sizes = [2, 128], strides = [1, 1]} : vector<2x512xf32> to vector<2x128xf32>
    %237 = arith.negf %236 : vector<2x128xf32>
    %238 = math.exp %237 : vector<2x128xf32>
    %cst_128 = arith.constant 1.000000e+00 : f32
    %239 = vector.broadcast %cst_128 : f32 to vector<2x128xf32>
    %240 = arith.addf %239, %238 : vector<2x128xf32>
    %241 = arith.divf %239, %240 : vector<2x128xf32>
    %242 = vector.extract_strided_slice %235 {offsets = [0, 128], sizes = [2, 128], strides = [1, 1]} : vector<2x512xf32> to vector<2x128xf32>
    %243 = arith.negf %242 : vector<2x128xf32>
    %244 = math.exp %243 : vector<2x128xf32>
    %cst_129 = arith.constant 1.000000e+00 : f32
    %245 = vector.broadcast %cst_129 : f32 to vector<2x128xf32>
    %246 = arith.addf %245, %244 : vector<2x128xf32>
    %247 = arith.divf %245, %246 : vector<2x128xf32>
    %248 = vector.extract_strided_slice %235 {offsets = [0, 256], sizes = [2, 128], strides = [1, 1]} : vector<2x512xf32> to vector<2x128xf32>
    %249 = math.tanh %248 : vector<2x128xf32>
    %250 = vector.extract_strided_slice %235 {offsets = [0, 384], sizes = [2, 128], strides = [1, 1]} : vector<2x512xf32> to vector<2x128xf32>
    %251 = arith.negf %250 : vector<2x128xf32>
    %252 = math.exp %251 : vector<2x128xf32>
    %cst_130 = arith.constant 1.000000e+00 : f32
    %253 = vector.broadcast %cst_130 : f32 to vector<2x128xf32>
    %254 = arith.addf %253, %252 : vector<2x128xf32>
    %255 = arith.divf %253, %254 : vector<2x128xf32>
    %256 = arith.mulf %247, %227 : vector<2x128xf32>
    %257 = arith.mulf %241, %249 : vector<2x128xf32>
    %258 = arith.addf %256, %257 : vector<2x128xf32>
    %259 = math.tanh %258 : vector<2x128xf32>
    %260 = arith.mulf %255, %259 : vector<2x128xf32>
    %c5_i32 = arith.constant 5 : i32
    %261 = arith.index_cast %c5_i32 : i32 to index
    %c0_131 = arith.constant 0 : index
    %c0_132 = arith.constant 0 : index
    %262 = vector.load %arg9[%261, %c0_131, %c0_132] : memref<8x2x512xf32, #tpu.memory_space<vmem>>, vector<1x2x512xf32>
    %263 = vector.shape_cast %262 : vector<1x2x512xf32> to vector<2x512xf32>
    %c0_133 = arith.constant 0 : index
    %c0_134 = arith.constant 0 : index
    %264 = vector.load %arg2[%c0_133, %c0_134] : memref<128x512xf32, #tpu.memory_space<vmem>>, vector<128x512xf32>
    %cst_135 = arith.constant dense<0.000000e+00> : vector<2x512xf32>
    %265 = tpu.matmul %260, %264, %cst_135 {dimension_numbers = #tpu.dot_dimension_numbers<[1], [0], [0], [1], [0, 0, 1, 1], [], []>} : vector<2x128xf32>, vector<128x512xf32>, vector<2x512xf32> -> vector<2x512xf32>
    %266 = arith.addf %263, %265 : vector<2x512xf32>
    %267 = vector.extract_strided_slice %266 {offsets = [0, 0], sizes = [2, 128], strides = [1, 1]} : vector<2x512xf32> to vector<2x128xf32>
    %268 = arith.negf %267 : vector<2x128xf32>
    %269 = math.exp %268 : vector<2x128xf32>
    %cst_136 = arith.constant 1.000000e+00 : f32
    %270 = vector.broadcast %cst_136 : f32 to vector<2x128xf32>
    %271 = arith.addf %270, %269 : vector<2x128xf32>
    %272 = arith.divf %270, %271 : vector<2x128xf32>
    %273 = vector.extract_strided_slice %266 {offsets = [0, 128], sizes = [2, 128], strides = [1, 1]} : vector<2x512xf32> to vector<2x128xf32>
    %274 = arith.negf %273 : vector<2x128xf32>
    %275 = math.exp %274 : vector<2x128xf32>
    %cst_137 = arith.constant 1.000000e+00 : f32
    %276 = vector.broadcast %cst_137 : f32 to vector<2x128xf32>
    %277 = arith.addf %276, %275 : vector<2x128xf32>
    %278 = arith.divf %276, %277 : vector<2x128xf32>
    %279 = vector.extract_strided_slice %266 {offsets = [0, 256], sizes = [2, 128], strides = [1, 1]} : vector<2x512xf32> to vector<2x128xf32>
    %280 = math.tanh %279 : vector<2x128xf32>
    %281 = vector.extract_strided_slice %266 {offsets = [0, 384], sizes = [2, 128], strides = [1, 1]} : vector<2x512xf32> to vector<2x128xf32>
    %282 = arith.negf %281 : vector<2x128xf32>
    %283 = math.exp %282 : vector<2x128xf32>
    %cst_138 = arith.constant 1.000000e+00 : f32
    %284 = vector.broadcast %cst_138 : f32 to vector<2x128xf32>
    %285 = arith.addf %284, %283 : vector<2x128xf32>
    %286 = arith.divf %284, %285 : vector<2x128xf32>
    %287 = arith.mulf %278, %258 : vector<2x128xf32>
    %288 = arith.mulf %272, %280 : vector<2x128xf32>
    %289 = arith.addf %287, %288 : vector<2x128xf32>
    %290 = math.tanh %289 : vector<2x128xf32>
    %291 = arith.mulf %286, %290 : vector<2x128xf32>
    %c6_i32 = arith.constant 6 : i32
    %292 = arith.index_cast %c6_i32 : i32 to index
    %c0_139 = arith.constant 0 : index
    %c0_140 = arith.constant 0 : index
    %293 = vector.load %arg9[%292, %c0_139, %c0_140] : memref<8x2x512xf32, #tpu.memory_space<vmem>>, vector<1x2x512xf32>
    %294 = vector.shape_cast %293 : vector<1x2x512xf32> to vector<2x512xf32>
    %c0_141 = arith.constant 0 : index
    %c0_142 = arith.constant 0 : index
    %295 = vector.load %arg2[%c0_141, %c0_142] : memref<128x512xf32, #tpu.memory_space<vmem>>, vector<128x512xf32>
    %cst_143 = arith.constant dense<0.000000e+00> : vector<2x512xf32>
    %296 = tpu.matmul %291, %295, %cst_143 {dimension_numbers = #tpu.dot_dimension_numbers<[1], [0], [0], [1], [0, 0, 1, 1], [], []>} : vector<2x128xf32>, vector<128x512xf32>, vector<2x512xf32> -> vector<2x512xf32>
    %297 = arith.addf %294, %296 : vector<2x512xf32>
    %298 = vector.extract_strided_slice %297 {offsets = [0, 0], sizes = [2, 128], strides = [1, 1]} : vector<2x512xf32> to vector<2x128xf32>
    %299 = arith.negf %298 : vector<2x128xf32>
    %300 = math.exp %299 : vector<2x128xf32>
    %cst_144 = arith.constant 1.000000e+00 : f32
    %301 = vector.broadcast %cst_144 : f32 to vector<2x128xf32>
    %302 = arith.addf %301, %300 : vector<2x128xf32>
    %303 = arith.divf %301, %302 : vector<2x128xf32>
    %304 = vector.extract_strided_slice %297 {offsets = [0, 128], sizes = [2, 128], strides = [1, 1]} : vector<2x512xf32> to vector<2x128xf32>
    %305 = arith.negf %304 : vector<2x128xf32>
    %306 = math.exp %305 : vector<2x128xf32>
    %cst_145 = arith.constant 1.000000e+00 : f32
    %307 = vector.broadcast %cst_145 : f32 to vector<2x128xf32>
    %308 = arith.addf %307, %306 : vector<2x128xf32>
    %309 = arith.divf %307, %308 : vector<2x128xf32>
    %310 = vector.extract_strided_slice %297 {offsets = [0, 256], sizes = [2, 128], strides = [1, 1]} : vector<2x512xf32> to vector<2x128xf32>
    %311 = math.tanh %310 : vector<2x128xf32>
    %312 = vector.extract_strided_slice %297 {offsets = [0, 384], sizes = [2, 128], strides = [1, 1]} : vector<2x512xf32> to vector<2x128xf32>
    %313 = arith.negf %312 : vector<2x128xf32>
    %314 = math.exp %313 : vector<2x128xf32>
    %cst_146 = arith.constant 1.000000e+00 : f32
    %315 = vector.broadcast %cst_146 : f32 to vector<2x128xf32>
    %316 = arith.addf %315, %314 : vector<2x128xf32>
    %317 = arith.divf %315, %316 : vector<2x128xf32>
    %318 = arith.mulf %309, %289 : vector<2x128xf32>
    %319 = arith.mulf %303, %311 : vector<2x128xf32>
    %320 = arith.addf %318, %319 : vector<2x128xf32>
    %321 = math.tanh %320 : vector<2x128xf32>
    %322 = arith.mulf %317, %321 : vector<2x128xf32>
    %c7_i32 = arith.constant 7 : i32
    %323 = arith.index_cast %c7_i32 : i32 to index
    %c0_147 = arith.constant 0 : index
    %c0_148 = arith.constant 0 : index
    %324 = vector.load %arg9[%323, %c0_147, %c0_148] : memref<8x2x512xf32, #tpu.memory_space<vmem>>, vector<1x2x512xf32>
    %325 = vector.shape_cast %324 : vector<1x2x512xf32> to vector<2x512xf32>
    %c0_149 = arith.constant 0 : index
    %c0_150 = arith.constant 0 : index
    %326 = vector.load %arg2[%c0_149, %c0_150] : memref<128x512xf32, #tpu.memory_space<vmem>>, vector<128x512xf32>
    %cst_151 = arith.constant dense<0.000000e+00> : vector<2x512xf32>
    %327 = tpu.matmul %322, %326, %cst_151 {dimension_numbers = #tpu.dot_dimension_numbers<[1], [0], [0], [1], [0, 0, 1, 1], [], []>} : vector<2x128xf32>, vector<128x512xf32>, vector<2x512xf32> -> vector<2x512xf32>
    %328 = arith.addf %325, %327 : vector<2x512xf32>
    %329 = vector.extract_strided_slice %328 {offsets = [0, 0], sizes = [2, 128], strides = [1, 1]} : vector<2x512xf32> to vector<2x128xf32>
    %330 = arith.negf %329 : vector<2x128xf32>
    %331 = math.exp %330 : vector<2x128xf32>
    %cst_152 = arith.constant 1.000000e+00 : f32
    %332 = vector.broadcast %cst_152 : f32 to vector<2x128xf32>
    %333 = arith.addf %332, %331 : vector<2x128xf32>
    %334 = arith.divf %332, %333 : vector<2x128xf32>
    %335 = vector.extract_strided_slice %328 {offsets = [0, 128], sizes = [2, 128], strides = [1, 1]} : vector<2x512xf32> to vector<2x128xf32>
    %336 = arith.negf %335 : vector<2x128xf32>
    %337 = math.exp %336 : vector<2x128xf32>
    %cst_153 = arith.constant 1.000000e+00 : f32
    %338 = vector.broadcast %cst_153 : f32 to vector<2x128xf32>
    %339 = arith.addf %338, %337 : vector<2x128xf32>
    %340 = arith.divf %338, %339 : vector<2x128xf32>
    %341 = vector.extract_strided_slice %328 {offsets = [0, 256], sizes = [2, 128], strides = [1, 1]} : vector<2x512xf32> to vector<2x128xf32>
    %342 = math.tanh %341 : vector<2x128xf32>
    %343 = vector.extract_strided_slice %328 {offsets = [0, 384], sizes = [2, 128], strides = [1, 1]} : vector<2x512xf32> to vector<2x128xf32>
    %344 = arith.negf %343 : vector<2x128xf32>
    %345 = math.exp %344 : vector<2x128xf32>
    %cst_154 = arith.constant 1.000000e+00 : f32
    %346 = vector.broadcast %cst_154 : f32 to vector<2x128xf32>
    %347 = arith.addf %346, %345 : vector<2x128xf32>
    %348 = arith.divf %346, %347 : vector<2x128xf32>
    %349 = arith.mulf %340, %320 : vector<2x128xf32>
    %350 = arith.mulf %334, %342 : vector<2x128xf32>
    %351 = arith.addf %349, %350 : vector<2x128xf32>
    %352 = math.tanh %351 : vector<2x128xf32>
    %353 = arith.mulf %348, %352 : vector<2x128xf32>
    %c8_i32 = arith.constant 8 : i32
    %c0_155 = arith.constant 0 : index
    %c0_156 = arith.constant 0 : index
    %354 = vector.load %arg6[%c0_155, %c0_156] : memref<256x3xf32, #tpu.memory_space<vmem>>, vector<128x3xf32>
    %cst_157 = arith.constant dense<0.000000e+00> : vector<2x3xf32>
    %355 = tpu.matmul %353, %354, %cst_157 {dimension_numbers = #tpu.dot_dimension_numbers<[1], [0], [0], [1], [0, 0, 1, 1], [], []>} : vector<2x128xf32>, vector<128x3xf32>, vector<2x3xf32> -> vector<2x3xf32>
    %c128 = arith.constant 128 : index
    %c0_158 = arith.constant 0 : index
    %356 = vector.load %arg6[%c128, %c0_158] : memref<256x3xf32, #tpu.memory_space<vmem>>, vector<128x3xf32>
    %cst_159 = arith.constant dense<0.000000e+00> : vector<2x3xf32>
    %357 = tpu.matmul %103, %356, %cst_159 {dimension_numbers = #tpu.dot_dimension_numbers<[1], [0], [0], [1], [0, 0, 1, 1], [], []>} : vector<2x128xf32>, vector<128x3xf32>, vector<2x3xf32> -> vector<2x3xf32>
    %358 = arith.addf %355, %357 : vector<2x3xf32>
    %c0_160 = arith.constant 0 : index
    %c0_161 = arith.constant 0 : index
    %359 = vector.load %arg7[%c0_160, %c0_161] : memref<1x3xf32, #tpu.memory_space<vmem>>, vector<1x3xf32>
    %360 = vector.broadcast %359 : vector<1x3xf32> to vector<2x3xf32>
    %361 = arith.addf %358, %360 : vector<2x3xf32>
    %c0_162 = arith.constant 0 : index
    %c0_163 = arith.constant 0 : index
    %362 = vector.load %arg8[%c0_162, %c0_163] : memref<2x3xf32, #tpu.memory_space<vmem>>, vector<2x3xf32>
    tpu.vector_store %arg8[%c0_162, %c0_163], %361 {strides = array<i32>} : memref<2x3xf32, #tpu.memory_space<vmem>>, vector<2x3xf32>,
    return
  }
}

</mosaic_0001>

<llo_original>
// kernel: tpu_custom_call.1
$region0: #{tpu_custom_call.1}
  #allocation0 [shape = 'u32[]', space=smem, size = 0x4, offset = 0x4, fixed_abs, tag = 'smem constant byte address 0x4 - core index']
  #allocation1 [shape = 'u32[144,128]{1,0:T(1,128)}', space=vmem, size = 0x12000, scoped, tag = 'internal scratch']
  #allocation2 [shape = 'f32[8,2,512]{2,1,0:T(2,128)}', space=vmem, size = 0x8000, scoped, tag = 'scratch operand']
  %s0 = inlined_call_operand.vmem [shape: f32[8,2,3], index: 0, kind: input, shape index: {}]
  %s1 = inlined_call_operand.vmem [shape: f32[3,512], index: 1, kind: input, shape index: {}]
  %s2 = inlined_call_operand.hbm [shape: f32[128,512], index: 2, kind: input, shape index: {}]
  %s3 = inlined_call_operand.vmem [shape: f32[1,512], index: 3, kind: input, shape index: {}]
  %s4 = inlined_call_operand.vmem [shape: f32[3,512], index: 4, kind: input, shape index: {}]
  %s5 = inlined_call_operand.vmem [shape: f32[1,512], index: 5, kind: input, shape index: {}]
  %s6 = inlined_call_operand.vmem [shape: f32[256,3], index: 6, kind: input, shape index: {}]
  %s7 = inlined_call_operand.vmem [shape: f32[1,3], index: 7, kind: input, shape index: {}]
  %s8 = inlined_call_operand.hbm [shape: f32[2,3], index: 8, kind: output, shape index: {}]
  %s9 = sld [smem:[#allocation0]]
  $region46: #{tpu_custom_call.1} parent=0
    _
  %s11 = ssub.s32 1, %s9
  %s12 = scalar_select 0, %s11, %s9
  $region1: #{tpu_custom_call.1} parent=0
    #allocation3 [shape = 'u8[262144]{0}', space=vmem, size = 0x40000, scoped, tag = 'input window, operand 2, single buffered']
    #allocation4 [shape = 's32[1]{0}', space=sflag, size = 0x4, scoped, tag = 'scoped memory for tpu_custom_call.1']
    #allocation5 [shape = 's32[1]{0}', space=sflag, size = 0x4, scoped, tag = 'scoped memory for tpu_custom_call.1']
    #allocation6 [shape = 'u8[1024]{0}', space=vmem, size = 0x400, scoped, tag = 'output window, operand 0, single buffered']
    %13 = vsyncpa [#allocation4], 0
    %14 = vsyncpa [#allocation5], 0
    // Predicated region
    $region2: #{tpu_custom_call.1} parent=1 // pred_check
      _
    $region3: #{tpu_custom_call.1} parent=1 // pred_check_branch
      %16 = sbr.rel (0) target = $region5
    $region4: #{tpu_custom_call.1} parent=1 // pred_region
      _
    $region5: #{tpu_custom_call.1} parent=1 // pred_fallthru
      _
    // Predicated region
    $region6: #{tpu_custom_call.1} parent=1 // pred_check
      _
    $region7: #{tpu_custom_call.1} parent=1 // pred_check_branch
      %18 = sbr.rel (0) target = $region9
    $region8: #{tpu_custom_call.1} parent=1 // pred_region
      _
    $region9: #{tpu_custom_call.1} parent=1 // pred_fallthru
      _
    // Predicated region
    $region10: #{tpu_custom_call.1} parent=1 // pred_check
      _
    $region11: #{tpu_custom_call.1} parent=1 // pred_check_branch
      %20 = sbr.rel (0) target = $region13
    $region12: #{tpu_custom_call.1} parent=1 // pred_region
      %s22 = ssub.s32 8192, 8192
      %23 = vsyncadd [#allocation4], %s22
      %s24 = sshll.u32 [#allocation3], 4
      %s25 = int_to_ptr.vmem [resolvable:$true] %s24
      %30 = dma.hbm_to_vmem [thread:$0]  %s2, 8192, %s25, [#allocation4], 512, 512, 32
    $region13: #{tpu_custom_call.1} parent=1 // pred_fallthru
      _
    // Predicated region
    $region14: #{tpu_custom_call.1} parent=1 // pred_check
      _
    $region15: #{tpu_custom_call.1} parent=1 // pred_check_branch
      %32 = sbr.rel (0) target = $region17
    $region16: #{tpu_custom_call.1} parent=1 // pred_region
      _
    $region17: #{tpu_custom_call.1} parent=1 // pred_fallthru
      _
    // Predicated region
    $region18: #{tpu_custom_call.1} parent=1 // pred_check
      _
    $region19: #{tpu_custom_call.1} parent=1 // pred_check_branch
      %34 = sbr.rel (0) target = $region21
    $region20: #{tpu_custom_call.1} parent=1 // pred_region
      _
    $region21: #{tpu_custom_call.1} parent=1 // pred_fallthru
      _
    // Predicated region
    $region22: #{tpu_custom_call.1} parent=1 // pred_check
      _
    $region23: #{tpu_custom_call.1} parent=1 // pred_check_branch
      %36 = sbr.rel (0) target = $region25
    $region24: #{tpu_custom_call.1} parent=1 // pred_region
      _
    $region25: #{tpu_custom_call.1} parent=1 // pred_fallthru
      _
    // Predicated region
    $region26: #{tpu_custom_call.1} parent=1 // pred_check
      _
    $region27: #{tpu_custom_call.1} parent=1 // pred_check_branch
      %38 = sbr.rel (0) target = $region29
    $region28: #{tpu_custom_call.1} parent=1 // pred_region
      _
    $region29: #{tpu_custom_call.1} parent=1 // pred_fallthru
      _
    // Predicated region
    $region30: #{tpu_custom_call.1} parent=1 // pred_check
      _
    $region31: #{tpu_custom_call.1} parent=1 // pred_check_branch
      %40 = sbr.rel (0) target = $region33
    $region32: #{tpu_custom_call.1} parent=1 // pred_region
      _
    $region33: #{tpu_custom_call.1} parent=1 // pred_fallthru
      _
    // Predicated region
    $region34: #{tpu_custom_call.1} parent=1 // pred_check
      _
    $region35: #{tpu_custom_call.1} parent=1 // pred_check_branch
      %42 = sbr.rel (0) target = $region37
    $region36: #{tpu_custom_call.1} parent=1 // pred_region
      %43 = dma.done [#allocation4], 8192
    $region37: #{tpu_custom_call.1} parent=1 // pred_fallthru
      _
    %v44 = vld [vmem:[%s0] sm:$0x3]
    %v45 = vld [vmem:[%s1] sm:$0x77]
    %v46 = vld [vmem:[%s1 + $0x8] sm:$0x77]
    %v47 = vld [vmem:[%s3] sm:$0xf]
    %v49 = vlaneseq
    %v50 = vshrl.u32 %v49, 7
    %v51 = vsub.s32 0, %v50
    %v52 = vrot.slane %v47, %v51
    %v53 = vlaneseq
    %v54 = vshrl.u32 %v53, 7
    %v55 = vsub.s32 1, %v54
    %v56 = vrot.slane %v47, %v55
    %v57 = vlaneseq
    %v58 = vshrl.u32 %v57, 7
    %v59 = vsub.s32 2, %v58
    %v60 = vrot.slane %v47, %v59
    %v61 = vlaneseq
    %v62 = vshrl.u32 %v61, 7
    %v63 = vsub.s32 3, %v62
    %v64 = vrot.slane %v47, %v63
    %v71 = vcombine.high %v45, %v45
    %v72 = vcombine.high %v46, %v46
    %vm73 = vcmask 23552
    %v75 = vsel %vm73, %v44, 0
    %vm77 = vcmask 1042432
    %v78 = vsel %vm77, %v45, 0
    %v80 = vsel %vm77, %v71, 0
    %v82 = vsel %vm77, %v46, 0
    %v84 = vsel %vm77, %v72, 0
    %86 = vmatprep.subr.mxu0 0.0
    %87 = vmatpush1.msra.mxu0 0.0
    %88 = vmatprep.subr.mxu0 0.0
    %89 = vmatpush1.msra.mxu0 0.0
    %90 = vmatprep.subr.mxu0 0.0
    %91 = vmatpush1.msra.mxu0 0.0
    %92 = vmatprep.subr.mxu0 0.0
    %93 = vmatpush1.msra.mxu0 0.0
    %94 = vmatprep.subr.mxu0 0.0
    %95 = vmatpush1.msra.mxu0 0.0
    %96 = vmatprep.subr.mxu0 0.0
    %97 = vmatpush1.msra.mxu0 0.0
    %98 = vmatprep.subr.mxu0 0.0
    %99 = vmatpush1.msra.mxu0 0.0
    %100 = vmatprep.subr.mxu0 0.0
    %101 = vmatpush1.msra.mxu0 0.0
    %102 = vmatprep.subr.mxu0 0.0
    %103 = vmatpush1.msra.mxu0 0.0
    %104 = vmatprep.subr.mxu0 0.0
    %105 = vmatpush1.msra.mxu0 0.0
    %106 = vmatprep.subr.mxu0 0.0
    %107 = vmatpush1.msra.mxu0 0.0
    %108 = vmatprep.subr.mxu0 0.0
    %109 = vmatpush1.msra.mxu0 0.0
    %110 = vmatprep.subr.mxu0 0.0
    %111 = vmatpush1.msra.mxu0 0.0
    %112 = vmatprep.subr.mxu0 0.0
    %113 = vmatpush1.msra.mxu0 0.0
    %114 = vmatprep.subr.mxu0 0.0
    %115 = vmatpush1.msra.mxu0 0.0
    %116 = vmatprep.subr.mxu0 %v80
    %117 = vmatpush1.msra.mxu0 %v78
    %118 = vmatprep.subr.mxu0 0.0
    %119 = vmatpush2.msra.mxu0 0.0
    %120 = vmatprep.subr.mxu0 0.0
    %121 = vmatpush2.msra.mxu0 0.0
    %122 = vmatprep.subr.mxu0 0.0
    %123 = vmatpush2.msra.mxu0 0.0
    %124 = vmatprep.subr.mxu0 0.0
    %125 = vmatpush2.msra.mxu0 0.0
    %126 = vmatprep.subr.mxu0 0.0
    %127 = vmatpush2.msra.mxu0 0.0
    %128 = vmatprep.subr.mxu0 0.0
    %129 = vmatpush2.msra.mxu0 0.0
    %130 = vmatprep.subr.mxu0 0.0
    %131 = vmatpush2.msra.mxu0 0.0
    %132 = vmatprep.subr.mxu0 0.0
    %133 = vmatpush2.msra.mxu0 0.0
    %134 = vmatprep.subr.mxu0 0.0
    %135 = vmatpush2.msra.mxu0 0.0
    %136 = vmatprep.subr.mxu0 0.0
    %137 = vmatpush2.msra.mxu0 0.0
    %138 = vmatprep.subr.mxu0 0.0
    %139 = vmatpush2.msra.mxu0 0.0
    %140 = vmatprep.subr.mxu0 0.0
    %141 = vmatpush2.msra.mxu0 0.0
    %142 = vmatprep.subr.mxu0 0.0
    %143 = vmatpush2.msra.mxu0 0.0
    %144 = vmatprep.subr.mxu0 0.0
    %145 = vmatpush2.msra.mxu0 0.0
    %146 = vmatprep.subr.mxu0 0.0
    %147 = vmatpush2.msra.mxu0 0.0
    %148 = vmatprep.subr.mxu0 0.0
    %149 = vmatpush2.msra.mxu0 0.0
    %150 = vmatprep.mubr.f32.mxu0 0.0
    %151 = vmatmul.mubr.f32.gmra.mxu0 %v75
    %v152 = vpop.f32.mrf.mxu0
    %v153 = vadd.f32 %v52, %v152
    %v154 = vpop.f32.mrf.mxu0
    %v155 = vadd.f32 %v56, %v154
    %156 = vdwg.mxu0
    %157 = vmatprep.subr.mxu0 0.0
    %158 = vmatpush1.msra.mxu0 0.0
    %159 = vmatprep.subr.mxu0 0.0
    %160 = vmatpush1.msra.mxu0 0.0
    %161 = vmatprep.subr.mxu0 0.0
    %162 = vmatpush1.msra.mxu0 0.0
    %163 = vmatprep.subr.mxu0 0.0
    %164 = vmatpush1.msra.mxu0 0.0
    %165 = vmatprep.subr.mxu0 0.0
    %166 = vmatpush1.msra.mxu0 0.0
    %167 = vmatprep.subr.mxu0 0.0
    %168 = vmatpush1.msra.mxu0 0.0
    %169 = vmatprep.subr.mxu0 0.0
    %170 = vmatpush1.msra.mxu0 0.0
    %171 = vmatprep.subr.mxu0 0.0
    %172 = vmatpush1.msra.mxu0 0.0
    %173 = vmatprep.subr.mxu0 0.0
    %174 = vmatpush1.msra.mxu0 0.0
    %175 = vmatprep.subr.mxu0 0.0
    %176 = vmatpush1.msra.mxu0 0.0
    %177 = vmatprep.subr.mxu0 0.0
    %178 = vmatpush1.msra.mxu0 0.0
    %179 = vmatprep.subr.mxu0 0.0
    %180 = vmatpush1.msra.mxu0 0.0
    %181 = vmatprep.subr.mxu0 0.0
    %182 = vmatpush1.msra.mxu0 0.0
    %183 = vmatprep.subr.mxu0 0.0
    %184 = vmatpush1.msra.mxu0 0.0
    %185 = vmatprep.subr.mxu0 0.0
    %186 = vmatpush1.msra.mxu0 0.0
    %187 = vmatprep.subr.mxu0 %v84
    %188 = vmatpush1.msra.mxu0 %v82
    %189 = vmatprep.subr.mxu0 0.0
    %190 = vmatpush2.msra.mxu0 0.0
    %191 = vmatprep.subr.mxu0 0.0
    %192 = vmatpush2.msra.mxu0 0.0
    %193 = vmatprep.subr.mxu0 0.0
    %194 = vmatpush2.msra.mxu0 0.0
    %195 = vmatprep.subr.mxu0 0.0
    %196 = vmatpush2.msra.mxu0 0.0
    %197 = vmatprep.subr.mxu0 0.0
    %198 = vmatpush2.msra.mxu0 0.0
    %199 = vmatprep.subr.mxu0 0.0
    %200 = vmatpush2.msra.mxu0 0.0
    %201 = vmatprep.subr.mxu0 0.0
    %202 = vmatpush2.msra.mxu0 0.0
    %203 = vmatprep.subr.mxu0 0.0
    %204 = vmatpush2.msra.mxu0 0.0
    %205 = vmatprep.subr.mxu0 0.0
    %206 = vmatpush2.msra.mxu0 0.0
    %207 = vmatprep.subr.mxu0 0.0
    %208 = vmatpush2.msra.mxu0 0.0
    %209 = vmatprep.subr.mxu0 0.0
    %210 = vmatpush2.msra.mxu0 0.0
    %211 = vmatprep.subr.mxu0 0.0
    %212 = vmatpush2.msra.mxu0 0.0
    %213 = vmatprep.subr.mxu0 0.0
    %214 = vmatpush2.msra.mxu0 0.0
    %215 = vmatprep.subr.mxu0 0.0
    %216 = vmatpush2.msra.mxu0 0.0
    %217 = vmatprep.subr.mxu0 0.0
    %218 = vmatpush2.msra.mxu0 0.0
    %219 = vmatprep.subr.mxu0 0.0
    %220 = vmatpush2.msra.mxu0 0.0
    %221 = vmatprep.mubr.f32.mxu0 0.0
    %222 = vmatmul.mubr.f32.gmra.mxu0 %v75
    %v223 = vpop.f32.mrf.mxu0
    %v224 = vadd.f32 %v60, %v223
    %v225 = vpop.f32.mrf.mxu0
    %v226 = vadd.f32 %v64, %v225
    %227 = vdwg.mxu0
    %v232 = vcombine.low %v153, %v155
    %v233 = vcombine.low %v224, %v226
    %v235 = vunpack.c.l.s4 1983009808
    %v236 = vunpack.c.0.s8 %v235
    %v237 = vlaneseq
    %v238 = vshrl.u32 %v237, 7
    %v239 = vsub.s32 %v236, %v238
    %v240 = vrot.slane %v232, %v239
    %v242 = vunpack.c.l.s4 1983009808
    %v243 = vunpack.c.0.s8 %v242
    %v244 = vlaneseq
    %v245 = vshrl.u32 %v244, 7
    %v246 = vsub.s32 %v243, %v245
    %v247 = vrot.slane %v233, %v246
    %v248 = vcombine.low %v240, %v247
    %250 = vst [vmem:[#allocation2] sm:$0xff] %v248
    %s251 = scalar_lea.vmem %s0, 2
    %v252 = vld [vmem:[%s251] sm:$0x3]
    %v253 = vld [vmem:[%s1] sm:$0x77]
    %v254 = vld [vmem:[%s1 + $0x8] sm:$0x77]
    %v255 = vld [vmem:[%s3] sm:$0xf]
    %v257 = vlaneseq
    %v258 = vshrl.u32 %v257, 7
    %v259 = vsub.s32 0, %v258
    %v260 = vrot.slane %v255, %v259
    %v261 = vlaneseq
    %v262 = vshrl.u32 %v261, 7
    %v263 = vsub.s32 1, %v262
    %v264 = vrot.slane %v255, %v263
    %v265 = vlaneseq
    %v266 = vshrl.u32 %v265, 7
    %v267 = vsub.s32 2, %v266
    %v268 = vrot.slane %v255, %v267
    %v269 = vlaneseq
    %v270 = vshrl.u32 %v269, 7
    %v271 = vsub.s32 3, %v270
    %v272 = vrot.slane %v255, %v271
    %v279 = vcombine.high %v253, %v253
    %v280 = vcombine.high %v254, %v254
    %v282 = vsel %vm73, %v252, 0
    %v284 = vsel %vm77, %v253, 0
    %v286 = vsel %vm77, %v279, 0
    %v288 = vsel %vm77, %v254, 0
    %v290 = vsel %vm77, %v280, 0
    %292 = vmatprep.subr.mxu0 0.0
    %293 = vmatpush1.msra.mxu0 0.0
    %294 = vmatprep.subr.mxu0 0.0
    %295 = vmatpush1.msra.mxu0 0.0
    %296 = vmatprep.subr.mxu0 0.0
    %297 = vmatpush1.msra.mxu0 0.0
    %298 = vmatprep.subr.mxu0 0.0
    %299 = vmatpush1.msra.mxu0 0.0
    %300 = vmatprep.subr.mxu0 0.0
    %301 = vmatpush1.msra.mxu0 0.0
    %302 = vmatprep.subr.mxu0 0.0
    %303 = vmatpush1.msra.mxu0 0.0
    %304 = vmatprep.subr.mxu0 0.0
    %305 = vmatpush1.msra.mxu0 0.0
    %306 = vmatprep.subr.mxu0 0.0
    %307 = vmatpush1.msra.mxu0 0.0
    %308 = vmatprep.subr.mxu0 0.0
    %309 = vmatpush1.msra.mxu0 0.0
    %310 = vmatprep.subr.mxu0 0.0
    %311 = vmatpush1.msra.mxu0 0.0
    %312 = vmatprep.subr.mxu0 0.0
    %313 = vmatpush1.msra.mxu0 0.0
    %314 = vmatprep.subr.mxu0 0.0
    %315 = vmatpush1.msra.mxu0 0.0
    %316 = vmatprep.subr.mxu0 0.0
    %317 = vmatpush1.msra.mxu0 0.0
    %318 = vmatprep.subr.mxu0 0.0
    %319 = vmatpush1.msra.mxu0 0.0
    %320 = vmatprep.subr.mxu0 0.0
    %321 = vmatpush1.msra.mxu0 0.0
    %322 = vmatprep.subr.mxu0 %v286
    %323 = vmatpush1.msra.mxu0 %v284
    %324 = vmatprep.subr.mxu0 0.0
    %325 = vmatpush2.msra.mxu0 0.0
    %326 = vmatprep.subr.mxu0 0.0
    %327 = vmatpush2.msra.mxu0 0.0
    %328 = vmatprep.subr.mxu0 0.0
    %329 = vmatpush2.msra.mxu0 0.0
    %330 = vmatprep.subr.mxu0 0.0
    %331 = vmatpush2.msra.mxu0 0.0
    %332 = vmatprep.subr.mxu0 0.0
    %333 = vmatpush2.msra.mxu0 0.0
    %334 = vmatprep.subr.mxu0 0.0
    %335 = vmatpush2.msra.mxu0 0.0
    %336 = vmatprep.subr.mxu0 0.0
    %337 = vmatpush2.msra.mxu0 0.0
    %338 = vmatprep.subr.mxu0 0.0
    %339 = vmatpush2.msra.mxu0 0.0
    %340 = vmatprep.subr.mxu0 0.0
    %341 = vmatpush2.msra.mxu0 0.0
    %342 = vmatprep.subr.mxu0 0.0
    %343 = vmatpush2.msra.mxu0 0.0
    %344 = vmatprep.subr.mxu0 0.0
    %345 = vmatpush2.msra.mxu0 0.0
    %346 = vmatprep.subr.mxu0 0.0
    %347 = vmatpush2.msra.mxu0 0.0
    %348 = vmatprep.subr.mxu0 0.0
    %349 = vmatpush2.msra.mxu0 0.0
    %350 = vmatprep.subr.mxu0 0.0
    %351 = vmatpush2.msra.mxu0 0.0
    %352 = vmatprep.subr.mxu0 0.0
    %353 = vmatpush2.msra.mxu0 0.0
    %354 = vmatprep.subr.mxu0 0.0
    %355 = vmatpush2.msra.mxu0 0.0
    %356 = vmatprep.mubr.f32.mxu0 0.0
    %357 = vmatmul.mubr.f32.gmra.mxu0 %v282
    %v358 = vpop.f32.mrf.mxu0
    %v359 = vadd.f32 %v260, %v358
    %v360 = vpop.f32.mrf.mxu0
    %v361 = vadd.f32 %v264, %v360
    %362 = vdwg.mxu0
    %363 = vmatprep.subr.mxu0 0.0
    %364 = vmatpush1.msra.mxu0 0.0
    %365 = vmatprep.subr.mxu0 0.0
    %366 = vmatpush1.msra.mxu0 0.0
    %367 = vmatprep.subr.mxu0 0.0
    %368 = vmatpush1.msra.mxu0 0.0
    %369 = vmatprep.subr.mxu0 0.0
    %370 = vmatpush1.msra.mxu0 0.0
    %371 = vmatprep.subr.mxu0 0.0
    %372 = vmatpush1.msra.mxu0 0.0
    %373 = vmatprep.subr.mxu0 0.0
    %374 = vmatpush1.msra.mxu0 0.0
    %375 = vmatprep.subr.mxu0 0.0
    %376 = vmatpush1.msra.mxu0 0.0
    %377 = vmatprep.subr.mxu0 0.0
    %378 = vmatpush1.msra.mxu0 0.0
    %379 = vmatprep.subr.mxu0 0.0
    %380 = vmatpush1.msra.mxu0 0.0
    %381 = vmatprep.subr.mxu0 0.0
    %382 = vmatpush1.msra.mxu0 0.0
    %383 = vmatprep.subr.mxu0 0.0
    %384 = vmatpush1.msra.mxu0 0.0
    %385 = vmatprep.subr.mxu0 0.0
    %386 = vmatpush1.msra.mxu0 0.0
    %387 = vmatprep.subr.mxu0 0.0
    %388 = vmatpush1.msra.mxu0 0.0
    %389 = vmatprep.subr.mxu0 0.0
    %390 = vmatpush1.msra.mxu0 0.0
    %391 = vmatprep.subr.mxu0 0.0
    %392 = vmatpush1.msra.mxu0 0.0
    %393 = vmatprep.subr.mxu0 %v290
    %394 = vmatpush1.msra.mxu0 %v288
    %395 = vmatprep.subr.mxu0 0.0
    %396 = vmatpush2.msra.mxu0 0.0
    %397 = vmatprep.subr.mxu0 0.0
    %398 = vmatpush2.msra.mxu0 0.0
    %399 = vmatprep.subr.mxu0 0.0
    %400 = vmatpush2.msra.mxu0 0.0
    %401 = vmatprep.subr.mxu0 0.0
    %402 = vmatpush2.msra.mxu0 0.0
    %403 = vmatprep.subr.mxu0 0.0
    %404 = vmatpush2.msra.mxu0 0.0
    %405 = vmatprep.subr.mxu0 0.0
    %406 = vmatpush2.msra.mxu0 0.0
    %407 = vmatprep.subr.mxu0 0.0
    %408 = vmatpush2.msra.mxu0 0.0
    %409 = vmatprep.subr.mxu0 0.0
    %410 = vmatpush2.msra.mxu0 0.0
    %411 = vmatprep.subr.mxu0 0.0
    %412 = vmatpush2.msra.mxu0 0.0
    %413 = vmatprep.subr.mxu0 0.0
    %414 = vmatpush2.msra.mxu0 0.0
    %415 = vmatprep.subr.mxu0 0.0
    %416 = vmatpush2.msra.mxu0 0.0
    %417 = vmatprep.subr.mxu0 0.0
    %418 = vmatpush2.msra.mxu0 0.0
    %419 = vmatprep.subr.mxu0 0.0
    %420 = vmatpush2.msra.mxu0 0.0
    %421 = vmatprep.subr.mxu0 0.0
    %422 = vmatpush2.msra.mxu0 0.0
    %423 = vmatprep.subr.mxu0 0.0
    %424 = vmatpush2.msra.mxu0 0.0
    %425 = vmatprep.subr.mxu0 0.0
    %426 = vmatpush2.msra.mxu0 0.0
    %427 = vmatprep.mubr.f32.mxu0 0.0
    %428 = vmatmul.mubr.f32.gmra.mxu0 %v282
    %v429 = vpop.f32.mrf.mxu0
    %v430 = vadd.f32 %v268, %v429
    %v431 = vpop.f32.mrf.mxu0
    %v432 = vadd.f32 %v272, %v431
    %433 = vdwg.mxu0
    %v438 = vcombine.low %v359, %v361
    %v439 = vcombine.low %v430, %v432
    %v441 = vunpack.c.l.s4 1983009808
    %v442 = vunpack.c.0.s8 %v441
    %v443 = vlaneseq
    %v444 = vshrl.u32 %v443, 7
    %v445 = vsub.s32 %v442, %v444
    %v446 = vrot.slane %v438, %v445
    %v448 = vunpack.c.l.s4 1983009808
    %v449 = vunpack.c.0.s8 %v448
    %v450 = vlaneseq
    %v451 = vshrl.u32 %v450, 7
    %v452 = vsub.s32 %v449, %v451
    %v453 = vrot.slane %v439, %v452
    %v454 = vcombine.low %v446, %v453
    %s456 = scalar_lea.vmem [#allocation2], 8
    %457 = vst [vmem:[%s456] sm:$0xff] %v454
    %s458 = scalar_lea.vmem %s0, 4
    %v459 = vld [vmem:[%s458] sm:$0x3]
    %v460 = vld [vmem:[%s1] sm:$0x77]
    %v461 = vld [vmem:[%s1 + $0x8] sm:$0x77]
    %v462 = vld [vmem:[%s3] sm:$0xf]
    %v464 = vlaneseq
    %v465 = vshrl.u32 %v464, 7
    %v466 = vsub.s32 0, %v465
    %v467 = vrot.slane %v462, %v466
    %v468 = vlaneseq
    %v469 = vshrl.u32 %v468, 7
    %v470 = vsub.s32 1, %v469
    %v471 = vrot.slane %v462, %v470
    %v472 = vlaneseq
    %v473 = vshrl.u32 %v472, 7
    %v474 = vsub.s32 2, %v473
    %v475 = vrot.slane %v462, %v474
    %v476 = vlaneseq
    %v477 = vshrl.u32 %v476, 7
    %v478 = vsub.s32 3, %v477
    %v479 = vrot.slane %v462, %v478
    %v486 = vcombine.high %v460, %v460
    %v487 = vcombine.high %v461, %v461
    %v489 = vsel %vm73, %v459, 0
    %v491 = vsel %vm77, %v460, 0
    %v493 = vsel %vm77, %v486, 0
    %v495 = vsel %vm77, %v461, 0
    %v497 = vsel %vm77, %v487, 0
    %499 = vmatprep.subr.mxu0 0.0
    %500 = vmatpush1.msra.mxu0 0.0
    %501 = vmatprep.subr.mxu0 0.0
    %502 = vmatpush1.msra.mxu0 0.0
    %503 = vmatprep.subr.mxu0 0.0
    %504 = vmatpush1.msra.mxu0 0.0
    %505 = vmatprep.subr.mxu0 0.0
    %506 = vmatpush1.msra.mxu0 0.0
    %507 = vmatprep.subr.mxu0 0.0
    %508 = vmatpush1.msra.mxu0 0.0
    %509 = vmatprep.subr.mxu0 0.0
    %510 = vmatpush1.msra.mxu0 0.0
    %511 = vmatprep.subr.mxu0 0.0
    %512 = vmatpush1.msra.mxu0 0.0
    %513 = vmatprep.subr.mxu0 0.0
    %514 = vmatpush1.msra.mxu0 0.0
    %515 = vmatprep.subr.mxu0 0.0
    %516 = vmatpush1.msra.mxu0 0.0
    %517 = vmatprep.subr.mxu0 0.0
    %518 = vmatpush1.msra.mxu0 0.0
    %519 = vmatprep.subr.mxu0 0.0
    %520 = vmatpush1.msra.mxu0 0.0
    %521 = vmatprep.subr.mxu0 0.0
    %522 = vmatpush1.msra.mxu0 0.0
    %523 = vmatprep.subr.mxu0 0.0
    %524 = vmatpush1.msra.mxu0 0.0
    %525 = vmatprep.subr.mxu0 0.0
    %526 = vmatpush1.msra.mxu0 0.0
    %527 = vmatprep.subr.mxu0 0.0
    %528 = vmatpush1.msra.mxu0 0.0
    %529 = vmatprep.subr.mxu0 %v493
    %530 = vmatpush1.msra.mxu0 %v491
    %531 = vmatprep.subr.mxu0 0.0
    %532 = vmatpush2.msra.mxu0 0.0
    %533 = vmatprep.subr.mxu0 0.0
    %534 = vmatpush2.msra.mxu0 0.0
    %535 = vmatprep.subr.mxu0 0.0
    %536 = vmatpush2.msra.mxu0 0.0
    %537 = vmatprep.subr.mxu0 0.0
    %538 = vmatpush2.msra.mxu0 0.0
    %539 = vmatprep.subr.mxu0 0.0
    %540 = vmatpush2.msra.mxu0 0.0
    %541 = vmatprep.subr.mxu0 0.0
    %542 = vmatpush2.msra.mxu0 0.0
    %543 = vmatprep.subr.mxu0 0.0
    %544 = vmatpush2.msra.mxu0 0.0
    %545 = vmatprep.subr.mxu0 0.0
    %546 = vmatpush2.msra.mxu0 0.0
    %547 = vmatprep.subr.mxu0 0.0
    %548 = vmatpush2.msra.mxu0 0.0
    %549 = vmatprep.subr.mxu0 0.0
    %550 = vmatpush2.msra.mxu0 0.0
    %551 = vmatprep.subr.mxu0 0.0
    %552 = vmatpush2.msra.mxu0 0.0
    %553 = vmatprep.subr.mxu0 0.0
    %554 = vmatpush2.msra.mxu0 0.0
    %555 = vmatprep.subr.mxu0 0.0
    %556 = vmatpush2.msra.mxu0 0.0
    %557 = vmatprep.subr.mxu0 0.0
    %558 = vmatpush2.msra.mxu0 0.0
    %559 = vmatprep.subr.mxu0 0.0
    %560 = vmatpush2.msra.mxu0 0.0
    %561 = vmatprep.subr.mxu0 0.0
    %562 = vmatpush2.msra.mxu0 0.0
    %563 = vmatprep.mubr.f32.mxu0 0.0
    %564 = vmatmul.mubr.f32.gmra.mxu0 %v489
    %v565 = vpop.f32.mrf.mxu0
    %v566 = vadd.f32 %v467, %v565
    %v567 = vpop.f32.mrf.mxu0
    %v568 = vadd.f32 %v471, %v567
    %569 = vdwg.mxu0
    %570 = vmatprep.subr.mxu0 0.0
    %571 = vmatpush1.msra.mxu0 0.0
    %572 = vmatprep.subr.mxu0 0.0
    %573 = vmatpush1.msra.mxu0 0.0
    %574 = vmatprep.subr.mxu0 0.0
    %575 = vmatpush1.msra.mxu0 0.0
    %576 = vmatprep.subr.mxu0 0.0
    %577 = vmatpush1.msra.mxu0 0.0
    %578 = vmatprep.subr.mxu0 0.0
    %579 = vmatpush1.msra.mxu0 0.0
    %580 = vmatprep.subr.mxu0 0.0
    %581 = vmatpush1.msra.mxu0 0.0
    %582 = vmatprep.subr.mxu0 0.0
    %583 = vmatpush1.msra.mxu0 0.0
    %584 = vmatprep.subr.mxu0 0.0
    %585 = vmatpush1.msra.mxu0 0.0
    %586 = vmatprep.subr.mxu0 0.0
    %587 = vmatpush1.msra.mxu0 0.0
    %588 = vmatprep.subr.mxu0 0.0
    %589 = vmatpush1.msra.mxu0 0.0
    %590 = vmatprep.subr.mxu0 0.0
    %591 = vmatpush1.msra.mxu0 0.0
    %592 = vmatprep.subr.mxu0 0.0
    %593 = vmatpush1.msra.mxu0 0.0
    %594 = vmatprep.subr.mxu0 0.0
    %595 = vmatpush1.msra.mxu0 0.0
    %596 = vmatprep.subr.mxu0 0.0
    %597 = vmatpush1.msra.mxu0 0.0
    %598 = vmatprep.subr.mxu0 0.0
    %599 = vmatpush1.msra.mxu0 0.0
    %600 = vmatprep.subr.mxu0 %v497
    %601 = vmatpush1.msra.mxu0 %v495
    %602 = vmatprep.subr.mxu0 0.0
    %603 = vmatpush2.msra.mxu0 0.0
    %604 = vmatprep.subr.mxu0 0.0
    %605 = vmatpush2.msra.mxu0 0.0
    %606 = vmatprep.subr.mxu0 0.0
    %607 = vmatpush2.msra.mxu0 0.0
    %608 = vmatprep.subr.mxu0 0.0
    %609 = vmatpush2.msra.mxu0 0.0
    %610 = vmatprep.subr.mxu0 0.0
    %611 = vmatpush2.msra.mxu0 0.0
    %612 = vmatprep.subr.mxu0 0.0
    %613 = vmatpush2.msra.mxu0 0.0
    %614 = vmatprep.subr.mxu0 0.0
    %615 = vmatpush2.msra.mxu0 0.0
    %616 = vmatprep.subr.mxu0 0.0
    %617 = vmatpush2.msra.mxu0 0.0
    %618 = vmatprep.subr.mxu0 0.0
    %619 = vmatpush2.msra.mxu0 0.0
    %620 = vmatprep.subr.mxu0 0.0
    %621 = vmatpush2.msra.mxu0 0.0
    %622 = vmatprep.subr.mxu0 0.0
    %623 = vmatpush2.msra.mxu0 0.0
    %624 = vmatprep.subr.mxu0 0.0
    %625 = vmatpush2.msra.mxu0 0.0
    %626 = vmatprep.subr.mxu0 0.0
    %627 = vmatpush2.msra.mxu0 0.0
    %628 = vmatprep.subr.mxu0 0.0
    %629 = vmatpush2.msra.mxu0 0.0
    %630 = vmatprep.subr.mxu0 0.0
    %631 = vmatpush2.msra.mxu0 0.0
    %632 = vmatprep.subr.mxu0 0.0
    %633 = vmatpush2.msra.mxu0 0.0
    %634 = vmatprep.mubr.f32.mxu0 0.0
    %635 = vmatmul.mubr.f32.gmra.mxu0 %v489
    %v636 = vpop.f32.mrf.mxu0
    %v637 = vadd.f32 %v475, %v636
    %v638 = vpop.f32.mrf.mxu0
    %v639 = vadd.f32 %v479, %v638
    %640 = vdwg.mxu0
    %v645 = vcombine.low %v566, %v568
    %v646 = vcombine.low %v637, %v639
    %v648 = vunpack.c.l.s4 1983009808
    %v649 = vunpack.c.0.s8 %v648
    %v650 = vlaneseq
    %v651 = vshrl.u32 %v650, 7
    %v652 = vsub.s32 %v649, %v651
    %v653 = vrot.slane %v645, %v652
    %v655 = vunpack.c.l.s4 1983009808
    %v656 = vunpack.c.0.s8 %v655
    %v657 = vlaneseq
    %v658 = vshrl.u32 %v657, 7
    %v659 = vsub.s32 %v656, %v658
    %v660 = vrot.slane %v646, %v659
    %v661 = vcombine.low %v653, %v660
    %s663 = scalar_lea.vmem [#allocation2], 16
    %664 = vst [vmem:[%s663] sm:$0xff] %v661
    %s665 = scalar_lea.vmem %s0, 6
    %v666 = vld [vmem:[%s665] sm:$0x3]
    %v667 = vld [vmem:[%s1] sm:$0x77]
    %v668 = vld [vmem:[%s1 + $0x8] sm:$0x77]
    %v669 = vld [vmem:[%s3] sm:$0xf]
    %v671 = vlaneseq
    %v672 = vshrl.u32 %v671, 7
    %v673 = vsub.s32 0, %v672
    %v674 = vrot.slane %v669, %v673
    %v675 = vlaneseq
    %v676 = vshrl.u32 %v675, 7
    %v677 = vsub.s32 1, %v676
    %v678 = vrot.slane %v669, %v677
    %v679 = vlaneseq
    %v680 = vshrl.u32 %v679, 7
    %v681 = vsub.s32 2, %v680
    %v682 = vrot.slane %v669, %v681
    %v683 = vlaneseq
    %v684 = vshrl.u32 %v683, 7
    %v685 = vsub.s32 3, %v684
    %v686 = vrot.slane %v669, %v685
    %v693 = vcombine.high %v667, %v667
    %v694 = vcombine.high %v668, %v668
    %v696 = vsel %vm73, %v666, 0
    %v698 = vsel %vm77, %v667, 0
    %v700 = vsel %vm77, %v693, 0
    %v702 = vsel %vm77, %v668, 0
    %v704 = vsel %vm77, %v694, 0
    %706 = vmatprep.subr.mxu0 0.0
    %707 = vmatpush1.msra.mxu0 0.0
    %708 = vmatprep.subr.mxu0 0.0
    %709 = vmatpush1.msra.mxu0 0.0
    %710 = vmatprep.subr.mxu0 0.0
    %711 = vmatpush1.msra.mxu0 0.0
    %712 = vmatprep.subr.mxu0 0.0
    %713 = vmatpush1.msra.mxu0 0.0
    %714 = vmatprep.subr.mxu0 0.0
    %715 = vmatpush1.msra.mxu0 0.0
    %716 = vmatprep.subr.mxu0 0.0
    %717 = vmatpush1.msra.mxu0 0.0
    %718 = vmatprep.subr.mxu0 0.0
    %719 = vmatpush1.msra.mxu0 0.0
    %720 = vmatprep.subr.mxu0 0.0
    %721 = vmatpush1.msra.mxu0 0.0
    %722 = vmatprep.subr.mxu0 0.0
    %723 = vmatpush1.msra.mxu0 0.0
    %724 = vmatprep.subr.mxu0 0.0
    %725 = vmatpush1.msra.mxu0 0.0
    %726 = vmatprep.subr.mxu0 0.0
    %727 = vmatpush1.msra.mxu0 0.0
    %728 = vmatprep.subr.mxu0 0.0
    %729 = vmatpush1.msra.mxu0 0.0
    %730 = vmatprep.subr.mxu0 0.0
    %731 = vmatpush1.msra.mxu0 0.0
    %732 = vmatprep.subr.mxu0 0.0
    %733 = vmatpush1.msra.mxu0 0.0
    %734 = vmatprep.subr.mxu0 0.0
    %735 = vmatpush1.msra.mxu0 0.0
    %736 = vmatprep.subr.mxu0 %v700
    %737 = vmatpush1.msra.mxu0 %v698
    %738 = vmatprep.subr.mxu0 0.0
    %739 = vmatpush2.msra.mxu0 0.0
    %740 = vmatprep.subr.mxu0 0.0
    %741 = vmatpush2.msra.mxu0 0.0
    %742 = vmatprep.subr.mxu0 0.0
    %743 = vmatpush2.msra.mxu0 0.0
    %744 = vmatprep.subr.mxu0 0.0
    %745 = vmatpush2.msra.mxu0 0.0
    %746 = vmatprep.subr.mxu0 0.0
    %747 = vmatpush2.msra.mxu0 0.0
    %748 = vmatprep.subr.mxu0 0.0
    %749 = vmatpush2.msra.mxu0 0.0
    %750 = vmatprep.subr.mxu0 0.0
    %751 = vmatpush2.msra.mxu0 0.0
    %752 = vmatprep.subr.mxu0 0.0
    %753 = vmatpush2.msra.mxu0 0.0
    %754 = vmatprep.subr.mxu0 0.0
    %755 = vmatpush2.msra.mxu0 0.0
    %756 = vmatprep.subr.mxu0 0.0
    %757 = vmatpush2.msra.mxu0 0.0
    %758 = vmatprep.subr.mxu0 0.0
    %759 = vmatpush2.msra.mxu0 0.0
    %760 = vmatprep.subr.mxu0 0.0
    %761 = vmatpush2.msra.mxu0 0.0
    %762 = vmatprep.subr.mxu0 0.0
    %763 = vmatpush2.msra.mxu0 0.0
    %764 = vmatprep.subr.mxu0 0.0
    %765 = vmatpush2.msra.mxu0 0.0
    %766 = vmatprep.subr.mxu0 0.0
    %767 = vmatpush2.msra.mxu0 0.0
    %768 = vmatprep.subr.mxu0 0.0
    %769 = vmatpush2.msra.mxu0 0.0
    %770 = vmatprep.mubr.f32.mxu0 0.0
    %771 = vmatmul.mubr.f32.gmra.mxu0 %v696
    %v772 = vpop.f32.mrf.mxu0
    %v773 = vadd.f32 %v674, %v772
    %v774 = vpop.f32.mrf.mxu0
    %v775 = vadd.f32 %v678, %v774
    %776 = vdwg.mxu0
    %777 = vmatprep.subr.mxu0 0.0
    %778 = vmatpush1.msra.mxu0 0.0
    %779 = vmatprep.subr.mxu0 0.0
    %780 = vmatpush1.msra.mxu0 0.0
    %781 = vmatprep.subr.mxu0 0.0
    %782 = vmatpush1.msra.mxu0 0.0
    %783 = vmatprep.subr.mxu0 0.0
    %784 = vmatpush1.msra.mxu0 0.0
    %785 = vmatprep.subr.mxu0 0.0
    %786 = vmatpush1.msra.mxu0 0.0
    %787 = vmatprep.subr.mxu0 0.0
    %788 = vmatpush1.msra.mxu0 0.0
    %789 = vmatprep.subr.mxu0 0.0
    %790 = vmatpush1.msra.mxu0 0.0
    %791 = vmatprep.subr.mxu0 0.0
    %792 = vmatpush1.msra.mxu0 0.0
    %793 = vmatprep.subr.mxu0 0.0
    %794 = vmatpush1.msra.mxu0 0.0
    %795 = vmatprep.subr.mxu0 0.0
    %796 = vmatpush1.msra.mxu0 0.0
    %797 = vmatprep.subr.mxu0 0.0
    %798 = vmatpush1.msra.mxu0 0.0
    %799 = vmatprep.subr.mxu0 0.0
    %800 = vmatpush1.msra.mxu0 0.0
    %801 = vmatprep.subr.mxu0 0.0
    %802 = vmatpush1.msra.mxu0 0.0
    %803 = vmatprep.subr.mxu0 0.0
    %804 = vmatpush1.msra.mxu0 0.0
    %805 = vmatprep.subr.mxu0 0.0
    %806 = vmatpush1.msra.mxu0 0.0
    %807 = vmatprep.subr.mxu0 %v704
    %808 = vmatpush1.msra.mxu0 %v702
    %809 = vmatprep.subr.mxu0 0.0
    %810 = vmatpush2.msra.mxu0 0.0
    %811 = vmatprep.subr.mxu0 0.0
    %812 = vmatpush2.msra.mxu0 0.0
    %813 = vmatprep.subr.mxu0 0.0
    %814 = vmatpush2.msra.mxu0 0.0
    %815 = vmatprep.subr.mxu0 0.0
    %816 = vmatpush2.msra.mxu0 0.0
    %817 = vmatprep.subr.mxu0 0.0
    %818 = vmatpush2.msra.mxu0 0.0
    %819 = vmatprep.subr.mxu0 0.0
    %820 = vmatpush2.msra.mxu0 0.0
    %821 = vmatprep.subr.mxu0 0.0
    %822 = vmatpush2.msra.mxu0 0.0
    %823 = vmatprep.subr.mxu0 0.0
    %824 = vmatpush2.msra.mxu0 0.0
    %825 = vmatprep.subr.mxu0 0.0
    %826 = vmatpush2.msra.mxu0 0.0
    %827 = vmatprep.subr.mxu0 0.0
    %828 = vmatpush2.msra.mxu0 0.0
    %829 = vmatprep.subr.mxu0 0.0
    %830 = vmatpush2.msra.mxu0 0.0
    %831 = vmatprep.subr.mxu0 0.0
    %832 = vmatpush2.msra.mxu0 0.0
    %833 = vmatprep.subr.mxu0 0.0
    %834 = vmatpush2.msra.mxu0 0.0
    %835 = vmatprep.subr.mxu0 0.0
    %836 = vmatpush2.msra.mxu0 0.0
    %837 = vmatprep.subr.mxu0 0.0
    %838 = vmatpush2.msra.mxu0 0.0
    %839 = vmatprep.subr.mxu0 0.0
    %840 = vmatpush2.msra.mxu0 0.0
    %841 = vmatprep.mubr.f32.mxu0 0.0
    %842 = vmatmul.mubr.f32.gmra.mxu0 %v696
    %v843 = vpop.f32.mrf.mxu0
    %v844 = vadd.f32 %v682, %v843
    %v845 = vpop.f32.mrf.mxu0
    %v846 = vadd.f32 %v686, %v845
    %847 = vdwg.mxu0
    %v852 = vcombine.low %v773, %v775
    %v853 = vcombine.low %v844, %v846
    %v855 = vunpack.c.l.s4 1983009808
    %v856 = vunpack.c.0.s8 %v855
    %v857 = vlaneseq
    %v858 = vshrl.u32 %v857, 7
    %v859 = vsub.s32 %v856, %v858
    %v860 = vrot.slane %v852, %v859
    %v862 = vunpack.c.l.s4 1983009808
    %v863 = vunpack.c.0.s8 %v862
    %v864 = vlaneseq
    %v865 = vshrl.u32 %v864, 7
    %v866 = vsub.s32 %v863, %v865
    %v867 = vrot.slane %v853, %v866
    %v868 = vcombine.low %v860, %v867
    %s870 = scalar_lea.vmem [#allocation2], 24
    %871 = vst [vmem:[%s870] sm:$0xff] %v868
    %s872 = scalar_lea.vmem %s0, 8
    %v873 = vld [vmem:[%s872] sm:$0x3]
    %v874 = vld [vmem:[%s1] sm:$0x77]
    %v875 = vld [vmem:[%s1 + $0x8] sm:$0x77]
    %v876 = vld [vmem:[%s3] sm:$0xf]
    %v878 = vlaneseq
    %v879 = vshrl.u32 %v878, 7
    %v880 = vsub.s32 0, %v879
    %v881 = vrot.slane %v876, %v880
    %v882 = vlaneseq
    %v883 = vshrl.u32 %v882, 7
    %v884 = vsub.s32 1, %v883
    %v885 = vrot.slane %v876, %v884
    %v886 = vlaneseq
    %v887 = vshrl.u32 %v886, 7
    %v888 = vsub.s32 2, %v887
    %v889 = vrot.slane %v876, %v888
    %v890 = vlaneseq
    %v891 = vshrl.u32 %v890, 7
    %v892 = vsub.s32 3, %v891
    %v893 = vrot.slane %v876, %v892
    %v900 = vcombine.high %v874, %v874
    %v901 = vcombine.high %v875, %v875
    %v903 = vsel %vm73, %v873, 0
    %v905 = vsel %vm77, %v874, 0
    %v907 = vsel %vm77, %v900, 0
    %v909 = vsel %vm77, %v875, 0
    %v911 = vsel %vm77, %v901, 0
    %913 = vmatprep.subr.mxu0 0.0
    %914 = vmatpush1.msra.mxu0 0.0
    %915 = vmatprep.subr.mxu0 0.0
    %916 = vmatpush1.msra.mxu0 0.0
    %917 = vmatprep.subr.mxu0 0.0
    %918 = vmatpush1.msra.mxu0 0.0
    %919 = vmatprep.subr.mxu0 0.0
    %920 = vmatpush1.msra.mxu0 0.0
    %921 = vmatprep.subr.mxu0 0.0
    %922 = vmatpush1.msra.mxu0 0.0
    %923 = vmatprep.subr.mxu0 0.0
    %924 = vmatpush1.msra.mxu0 0.0
    %925 = vmatprep.subr.mxu0 0.0
    %926 = vmatpush1.msra.mxu0 0.0
    %927 = vmatprep.subr.mxu0 0.0
    %928 = vmatpush1.msra.mxu0 0.0
    %929 = vmatprep.subr.mxu0 0.0
    %930 = vmatpush1.msra.mxu0 0.0
    %931 = vmatprep.subr.mxu0 0.0
    %932 = vmatpush1.msra.mxu0 0.0
    %933 = vmatprep.subr.mxu0 0.0
    %934 = vmatpush1.msra.mxu0 0.0
    %935 = vmatprep.subr.mxu0 0.0
    %936 = vmatpush1.msra.mxu0 0.0
    %937 = vmatprep.subr.mxu0 0.0
    %938 = vmatpush1.msra.mxu0 0.0
    %939 = vmatprep.subr.mxu0 0.0
    %940 = vmatpush1.msra.mxu0 0.0
    %941 = vmatprep.subr.mxu0 0.0
    %942 = vmatpush1.msra.mxu0 0.0
    %943 = vmatprep.subr.mxu0 %v907
    %944 = vmatpush1.msra.mxu0 %v905
    %945 = vmatprep.subr.mxu0 0.0
    %946 = vmatpush2.msra.mxu0 0.0
    %947 = vmatprep.subr.mxu0 0.0
    %948 = vmatpush2.msra.mxu0 0.0
    %949 = vmatprep.subr.mxu0 0.0
    %950 = vmatpush2.msra.mxu0 0.0
    %951 = vmatprep.subr.mxu0 0.0
    %952 = vmatpush2.msra.mxu0 0.0
    %953 = vmatprep.subr.mxu0 0.0
    %954 = vmatpush2.msra.mxu0 0.0
    %955 = vmatprep.subr.mxu0 0.0
    %956 = vmatpush2.msra.mxu0 0.0
    %957 = vmatprep.subr.mxu0 0.0
    %958 = vmatpush2.msra.mxu0 0.0
    %959 = vmatprep.subr.mxu0 0.0
    %960 = vmatpush2.msra.mxu0 0.0
    %961 = vmatprep.subr.mxu0 0.0
    %962 = vmatpush2.msra.mxu0 0.0
    %963 = vmatprep.subr.mxu0 0.0
    %964 = vmatpush2.msra.mxu0 0.0
    %965 = vmatprep.subr.mxu0 0.0
    %966 = vmatpush2.msra.mxu0 0.0
    %967 = vmatprep.subr.mxu0 0.0
    %968 = vmatpush2.msra.mxu0 0.0
    %969 = vmatprep.subr.mxu0 0.0
    %970 = vmatpush2.msra.mxu0 0.0
    %971 = vmatprep.subr.mxu0 0.0
    %972 = vmatpush2.msra.mxu0 0.0
    %973 = vmatprep.subr.mxu0 0.0
    %974 = vmatpush2.msra.mxu0 0.0
    %975 = vmatprep.subr.mxu0 0.0
    %976 = vmatpush2.msra.mxu0 0.0
    %977 = vmatprep.mubr.f32.mxu0 0.0
    %978 = vmatmul.mubr.f32.gmra.mxu0 %v903
    %v979 = vpop.f32.mrf.mxu0
    %v980 = vadd.f32 %v881, %v979
    %v981 = vpop.f32.mrf.mxu0
    %v982 = vadd.f32 %v885, %v981
    %983 = vdwg.mxu0
    %984 = vmatprep.subr.mxu0 0.0
    %985 = vmatpush1.msra.mxu0 0.0
    %986 = vmatprep.subr.mxu0 0.0
    %987 = vmatpush1.msra.mxu0 0.0
    %988 = vmatprep.subr.mxu0 0.0
    %989 = vmatpush1.msra.mxu0 0.0
    %990 = vmatprep.subr.mxu0 0.0
    %991 = vmatpush1.msra.mxu0 0.0
    %992 = vmatprep.subr.mxu0 0.0
    %993 = vmatpush1.msra.mxu0 0.0
    %994 = vmatprep.subr.mxu0 0.0
    %995 = vmatpush1.msra.mxu0 0.0
    %996 = vmatprep.subr.mxu0 0.0
    %997 = vmatpush1.msra.mxu0 0.0
    %998 = vmatprep.subr.mxu0 0.0
    %999 = vmatpush1.msra.mxu0 0.0
    %1000 = vmatprep.subr.mxu0 0.0
    %1001 = vmatpush1.msra.mxu0 0.0
    %1002 = vmatprep.subr.mxu0 0.0
    %1003 = vmatpush1.msra.mxu0 0.0
    %1004 = vmatprep.subr.mxu0 0.0
    %1005 = vmatpush1.msra.mxu0 0.0
    %1006 = vmatprep.subr.mxu0 0.0
    %1007 = vmatpush1.msra.mxu0 0.0
    %1008 = vmatprep.subr.mxu0 0.0
    %1009 = vmatpush1.msra.mxu0 0.0
    %1010 = vmatprep.subr.mxu0 0.0
    %1011 = vmatpush1.msra.mxu0 0.0
    %1012 = vmatprep.subr.mxu0 0.0
    %1013 = vmatpush1.msra.mxu0 0.0
    %1014 = vmatprep.subr.mxu0 %v911
    %1015 = vmatpush1.msra.mxu0 %v909
    %1016 = vmatprep.subr.mxu0 0.0
    %1017 = vmatpush2.msra.mxu0 0.0
    %1018 = vmatprep.subr.mxu0 0.0
    %1019 = vmatpush2.msra.mxu0 0.0
    %1020 = vmatprep.subr.mxu0 0.0
    %1021 = vmatpush2.msra.mxu0 0.0
    %1022 = vmatprep.subr.mxu0 0.0
    %1023 = vmatpush2.msra.mxu0 0.0
    %1024 = vmatprep.subr.mxu0 0.0
    %1025 = vmatpush2.msra.mxu0 0.0
    %1026 = vmatprep.subr.mxu0 0.0
    %1027 = vmatpush2.msra.mxu0 0.0
    %1028 = vmatprep.subr.mxu0 0.0
    %1029 = vmatpush2.msra.mxu0 0.0
    %1030 = vmatprep.subr.mxu0 0.0
    %1031 = vmatpush2.msra.mxu0 0.0
    %1032 = vmatprep.subr.mxu0 0.0
    %1033 = vmatpush2.msra.mxu0 0.0
    %1034 = vmatprep.subr.mxu0 0.0
    %1035 = vmatpush2.msra.mxu0 0.0
    %1036 = vmatprep.subr.mxu0 0.0
    %1037 = vmatpush2.msra.mxu0 0.0
    %1038 = vmatprep.subr.mxu0 0.0
    %1039 = vmatpush2.msra.mxu0 0.0
    %1040 = vmatprep.subr.mxu0 0.0
    %1041 = vmatpush2.msra.mxu0 0.0
    %1042 = vmatprep.subr.mxu0 0.0
    %1043 = vmatpush2.msra.mxu0 0.0
    %1044 = vmatprep.subr.mxu0 0.0
    %1045 = vmatpush2.msra.mxu0 0.0
    %1046 = vmatprep.subr.mxu0 0.0
    %1047 = vmatpush2.msra.mxu0 0.0
    %1048 = vmatprep.mubr.f32.mxu0 0.0
    %1049 = vmatmul.mubr.f32.gmra.mxu0 %v903
    %v1050 = vpop.f32.mrf.mxu0
    %v1051 = vadd.f32 %v889, %v1050
    %v1052 = vpop.f32.mrf.mxu0
    %v1053 = vadd.f32 %v893, %v1052
    %1054 = vdwg.mxu0
    %v1059 = vcombine.low %v980, %v982
    %v1060 = vcombine.low %v1051, %v1053
    %v1062 = vunpack.c.l.s4 1983009808
    %v1063 = vunpack.c.0.s8 %v1062
    %v1064 = vlaneseq
    %v1065 = vshrl.u32 %v1064, 7
    %v1066 = vsub.s32 %v1063, %v1065
    %v1067 = vrot.slane %v1059, %v1066
    %v1069 = vunpack.c.l.s4 1983009808
    %v1070 = vunpack.c.0.s8 %v1069
    %v1071 = vlaneseq
    %v1072 = vshrl.u32 %v1071, 7
    %v1073 = vsub.s32 %v1070, %v1072
    %v1074 = vrot.slane %v1060, %v1073
    %v1075 = vcombine.low %v1067, %v1074
    %s1077 = scalar_lea.vmem [#allocation2], 32
    %1078 = vst [vmem:[%s1077] sm:$0xff] %v1075
    %s1079 = scalar_lea.vmem %s0, 10
    %v1080 = vld [vmem:[%s1079] sm:$0x3]
    %v1081 = vld [vmem:[%s1] sm:$0x77]
    %v1082 = vld [vmem:[%s1 + $0x8] sm:$0x77]
    %v1083 = vld [vmem:[%s3] sm:$0xf]
    %v1085 = vlaneseq
    %v1086 = vshrl.u32 %v1085, 7
    %v1087 = vsub.s32 0, %v1086
    %v1088 = vrot.slane %v1083, %v1087
    %v1089 = vlaneseq
    %v1090 = vshrl.u32 %v1089, 7
    %v1091 = vsub.s32 1, %v1090
    %v1092 = vrot.slane %v1083, %v1091
    %v1093 = vlaneseq
    %v1094 = vshrl.u32 %v1093, 7
    %v1095 = vsub.s32 2, %v1094
    %v1096 = vrot.slane %v1083, %v1095
    %v1097 = vlaneseq
    %v1098 = vshrl.u32 %v1097, 7
    %v1099 = vsub.s32 3, %v1098
    %v1100 = vrot.slane %v1083, %v1099
    %v1107 = vcombine.high %v1081, %v1081
    %v1108 = vcombine.high %v1082, %v1082
    %v1110 = vsel %vm73, %v1080, 0
    %v1112 = vsel %vm77, %v1081, 0
    %v1114 = vsel %vm77, %v1107, 0
    %v1116 = vsel %vm77, %v1082, 0
    %v1118 = vsel %vm77, %v1108, 0
    %1120 = vmatprep.subr.mxu0 0.0
    %1121 = vmatpush1.msra.mxu0 0.0
    %1122 = vmatprep.subr.mxu0 0.0
    %1123 = vmatpush1.msra.mxu0 0.0
    %1124 = vmatprep.subr.mxu0 0.0
    %1125 = vmatpush1.msra.mxu0 0.0
    %1126 = vmatprep.subr.mxu0 0.0
    %1127 = vmatpush1.msra.mxu0 0.0
    %1128 = vmatprep.subr.mxu0 0.0
    %1129 = vmatpush1.msra.mxu0 0.0
    %1130 = vmatprep.subr.mxu0 0.0
    %1131 = vmatpush1.msra.mxu0 0.0
    %1132 = vmatprep.subr.mxu0 0.0
    %1133 = vmatpush1.msra.mxu0 0.0
    %1134 = vmatprep.subr.mxu0 0.0
    %1135 = vmatpush1.msra.mxu0 0.0
    %1136 = vmatprep.subr.mxu0 0.0
    %1137 = vmatpush1.msra.mxu0 0.0
    %1138 = vmatprep.subr.mxu0 0.0
    %1139 = vmatpush1.msra.mxu0 0.0
    %1140 = vmatprep.subr.mxu0 0.0
    %1141 = vmatpush1.msra.mxu0 0.0
    %1142 = vmatprep.subr.mxu0 0.0
    %1143 = vmatpush1.msra.mxu0 0.0
    %1144 = vmatprep.subr.mxu0 0.0
    %1145 = vmatpush1.msra.mxu0 0.0
    %1146 = vmatprep.subr.mxu0 0.0
    %1147 = vmatpush1.msra.mxu0 0.0
    %1148 = vmatprep.subr.mxu0 0.0
    %1149 = vmatpush1.msra.mxu0 0.0
    %1150 = vmatprep.subr.mxu0 %v1114
    %1151 = vmatpush1.msra.mxu0 %v1112
    %1152 = vmatprep.subr.mxu0 0.0
    %1153 = vmatpush2.msra.mxu0 0.0
    %1154 = vmatprep.subr.mxu0 0.0
    %1155 = vmatpush2.msra.mxu0 0.0
    %1156 = vmatprep.subr.mxu0 0.0
    %1157 = vmatpush2.msra.mxu0 0.0
    %1158 = vmatprep.subr.mxu0 0.0
    %1159 = vmatpush2.msra.mxu0 0.0
    %1160 = vmatprep.subr.mxu0 0.0
    %1161 = vmatpush2.msra.mxu0 0.0
    %1162 = vmatprep.subr.mxu0 0.0
    %1163 = vmatpush2.msra.mxu0 0.0
    %1164 = vmatprep.subr.mxu0 0.0
    %1165 = vmatpush2.msra.mxu0 0.0
    %1166 = vmatprep.subr.mxu0 0.0
    %1167 = vmatpush2.msra.mxu0 0.0
    %1168 = vmatprep.subr.mxu0 0.0
    %1169 = vmatpush2.msra.mxu0 0.0
    %1170 = vmatprep.subr.mxu0 0.0
    %1171 = vmatpush2.msra.mxu0 0.0
    %1172 = vmatprep.subr.mxu0 0.0
    %1173 = vmatpush2.msra.mxu0 0.0
    %1174 = vmatprep.subr.mxu0 0.0
    %1175 = vmatpush2.msra.mxu0 0.0
    %1176 = vmatprep.subr.mxu0 0.0
    %1177 = vmatpush2.msra.mxu0 0.0
    %1178 = vmatprep.subr.mxu0 0.0
    %1179 = vmatpush2.msra.mxu0 0.0
    %1180 = vmatprep.subr.mxu0 0.0
    %1181 = vmatpush2.msra.mxu0 0.0
    %1182 = vmatprep.subr.mxu0 0.0
    %1183 = vmatpush2.msra.mxu0 0.0
    %1184 = vmatprep.mubr.f32.mxu0 0.0
    %1185 = vmatmul.mubr.f32.gmra.mxu0 %v1110
    %v1186 = vpop.f32.mrf.mxu0
    %v1187 = vadd.f32 %v1088, %v1186
    %v1188 = vpop.f32.mrf.mxu0
    %v1189 = vadd.f32 %v1092, %v1188
    %1190 = vdwg.mxu0
    %1191 = vmatprep.subr.mxu0 0.0
    %1192 = vmatpush1.msra.mxu0 0.0
    %1193 = vmatprep.subr.mxu0 0.0
    %1194 = vmatpush1.msra.mxu0 0.0
    %1195 = vmatprep.subr.mxu0 0.0
    %1196 = vmatpush1.msra.mxu0 0.0
    %1197 = vmatprep.subr.mxu0 0.0
    %1198 = vmatpush1.msra.mxu0 0.0
    %1199 = vmatprep.subr.mxu0 0.0
    %1200 = vmatpush1.msra.mxu0 0.0
    %1201 = vmatprep.subr.mxu0 0.0
    %1202 = vmatpush1.msra.mxu0 0.0
    %1203 = vmatprep.subr.mxu0 0.0
    %1204 = vmatpush1.msra.mxu0 0.0
    %1205 = vmatprep.subr.mxu0 0.0
    %1206 = vmatpush1.msra.mxu0 0.0
    %1207 = vmatprep.subr.mxu0 0.0
    %1208 = vmatpush1.msra.mxu0 0.0
    %1209 = vmatprep.subr.mxu0 0.0
    %1210 = vmatpush1.msra.mxu0 0.0
    %1211 = vmatprep.subr.mxu0 0.0
    %1212 = vmatpush1.msra.mxu0 0.0
    %1213 = vmatprep.subr.mxu0 0.0
    %1214 = vmatpush1.msra.mxu0 0.0
    %1215 = vmatprep.subr.mxu0 0.0
    %1216 = vmatpush1.msra.mxu0 0.0
    %1217 = vmatprep.subr.mxu0 0.0
    %1218 = vmatpush1.msra.mxu0 0.0
    %1219 = vmatprep.subr.mxu0 0.0
    %1220 = vmatpush1.msra.mxu0 0.0
    %1221 = vmatprep.subr.mxu0 %v1118
    %1222 = vmatpush1.msra.mxu0 %v1116
    %1223 = vmatprep.subr.mxu0 0.0
    %1224 = vmatpush2.msra.mxu0 0.0
    %1225 = vmatprep.subr.mxu0 0.0
    %1226 = vmatpush2.msra.mxu0 0.0
    %1227 = vmatprep.subr.mxu0 0.0
    %1228 = vmatpush2.msra.mxu0 0.0
    %1229 = vmatprep.subr.mxu0 0.0
    %1230 = vmatpush2.msra.mxu0 0.0
    %1231 = vmatprep.subr.mxu0 0.0
    %1232 = vmatpush2.msra.mxu0 0.0
    %1233 = vmatprep.subr.mxu0 0.0
    %1234 = vmatpush2.msra.mxu0 0.0
    %1235 = vmatprep.subr.mxu0 0.0
    %1236 = vmatpush2.msra.mxu0 0.0
    %1237 = vmatprep.subr.mxu0 0.0
    %1238 = vmatpush2.msra.mxu0 0.0
    %1239 = vmatprep.subr.mxu0 0.0
    %1240 = vmatpush2.msra.mxu0 0.0
    %1241 = vmatprep.subr.mxu0 0.0
    %1242 = vmatpush2.msra.mxu0 0.0
    %1243 = vmatprep.subr.mxu0 0.0
    %1244 = vmatpush2.msra.mxu0 0.0
    %1245 = vmatprep.subr.mxu0 0.0
    %1246 = vmatpush2.msra.mxu0 0.0
    %1247 = vmatprep.subr.mxu0 0.0
    %1248 = vmatpush2.msra.mxu0 0.0
    %1249 = vmatprep.subr.mxu0 0.0
    %1250 = vmatpush2.msra.mxu0 0.0
    %1251 = vmatprep.subr.mxu0 0.0
    %1252 = vmatpush2.msra.mxu0 0.0
    %1253 = vmatprep.subr.mxu0 0.0
    %1254 = vmatpush2.msra.mxu0 0.0
    %1255 = vmatprep.mubr.f32.mxu0 0.0
    %1256 = vmatmul.mubr.f32.gmra.mxu0 %v1110
    %v1257 = vpop.f32.mrf.mxu0
    %v1258 = vadd.f32 %v1096, %v1257
    %v1259 = vpop.f32.mrf.mxu0
    %v1260 = vadd.f32 %v1100, %v1259
    %1261 = vdwg.mxu0
    %v1266 = vcombine.low %v1187, %v1189
    %v1267 = vcombine.low %v1258, %v1260
    %v1269 = vunpack.c.l.s4 1983009808
    %v1270 = vunpack.c.0.s8 %v1269
    %v1271 = vlaneseq
    %v1272 = vshrl.u32 %v1271, 7
    %v1273 = vsub.s32 %v1270, %v1272
    %v1274 = vrot.slane %v1266, %v1273
    %v1276 = vunpack.c.l.s4 1983009808
    %v1277 = vunpack.c.0.s8 %v1276
    %v1278 = vlaneseq
    %v1279 = vshrl.u32 %v1278, 7
    %v1280 = vsub.s32 %v1277, %v1279
    %v1281 = vrot.slane %v1267, %v1280
    %v1282 = vcombine.low %v1274, %v1281
    %s1284 = scalar_lea.vmem [#allocation2], 40
    %1285 = vst [vmem:[%s1284] sm:$0xff] %v1282
    %s1286 = scalar_lea.vmem %s0, 12
    %v1287 = vld [vmem:[%s1286] sm:$0x3]
    %v1288 = vld [vmem:[%s1] sm:$0x77]
    %v1289 = vld [vmem:[%s1 + $0x8] sm:$0x77]
    %v1290 = vld [vmem:[%s3] sm:$0xf]
    %v1292 = vlaneseq
    %v1293 = vshrl.u32 %v1292, 7
    %v1294 = vsub.s32 0, %v1293
    %v1295 = vrot.slane %v1290, %v1294
    %v1296 = vlaneseq
    %v1297 = vshrl.u32 %v1296, 7
    %v1298 = vsub.s32 1, %v1297
    %v1299 = vrot.slane %v1290, %v1298
    %v1300 = vlaneseq
    %v1301 = vshrl.u32 %v1300, 7
    %v1302 = vsub.s32 2, %v1301
    %v1303 = vrot.slane %v1290, %v1302
    %v1304 = vlaneseq
    %v1305 = vshrl.u32 %v1304, 7
    %v1306 = vsub.s32 3, %v1305
    %v1307 = vrot.slane %v1290, %v1306
    %v1314 = vcombine.high %v1288, %v1288
    %v1315 = vcombine.high %v1289, %v1289
    %v1317 = vsel %vm73, %v1287, 0
    %v1319 = vsel %vm77, %v1288, 0
    %v1321 = vsel %vm77, %v1314, 0
    %v1323 = vsel %vm77, %v1289, 0
    %v1325 = vsel %vm77, %v1315, 0
    %1327 = vmatprep.subr.mxu0 0.0
    %1328 = vmatpush1.msra.mxu0 0.0
    %1329 = vmatprep.subr.mxu0 0.0
    %1330 = vmatpush1.msra.mxu0 0.0
    %1331 = vmatprep.subr.mxu0 0.0
    %1332 = vmatpush1.msra.mxu0 0.0
    %1333 = vmatprep.subr.mxu0 0.0
    %1334 = vmatpush1.msra.mxu0 0.0
    %1335 = vmatprep.subr.mxu0 0.0
    %1336 = vmatpush1.msra.mxu0 0.0
    %1337 = vmatprep.subr.mxu0 0.0
    %1338 = vmatpush1.msra.mxu0 0.0
    %1339 = vmatprep.subr.mxu0 0.0
    %1340 = vmatpush1.msra.mxu0 0.0
    %1341 = vmatprep.subr.mxu0 0.0
    %1342 = vmatpush1.msra.mxu0 0.0
    %1343 = vmatprep.subr.mxu0 0.0
    %1344 = vmatpush1.msra.mxu0 0.0
    %1345 = vmatprep.subr.mxu0 0.0
    %1346 = vmatpush1.msra.mxu0 0.0
    %1347 = vmatprep.subr.mxu0 0.0
    %1348 = vmatpush1.msra.mxu0 0.0
    %1349 = vmatprep.subr.mxu0 0.0
    %1350 = vmatpush1.msra.mxu0 0.0
    %1351 = vmatprep.subr.mxu0 0.0
    %1352 = vmatpush1.msra.mxu0 0.0
    %1353 = vmatprep.subr.mxu0 0.0
    %1354 = vmatpush1.msra.mxu0 0.0
    %1355 = vmatprep.subr.mxu0 0.0
    %1356 = vmatpush1.msra.mxu0 0.0
    %1357 = vmatprep.subr.mxu0 %v1321
    %1358 = vmatpush1.msra.mxu0 %v1319
    %1359 = vmatprep.subr.mxu0 0.0
    %1360 = vmatpush2.msra.mxu0 0.0
    %1361 = vmatprep.subr.mxu0 0.0
    %1362 = vmatpush2.msra.mxu0 0.0
    %1363 = vmatprep.subr.mxu0 0.0
    %1364 = vmatpush2.msra.mxu0 0.0
    %1365 = vmatprep.subr.mxu0 0.0
    %1366 = vmatpush2.msra.mxu0 0.0
    %1367 = vmatprep.subr.mxu0 0.0
    %1368 = vmatpush2.msra.mxu0 0.0
    %1369 = vmatprep.subr.mxu0 0.0
    %1370 = vmatpush2.msra.mxu0 0.0
    %1371 = vmatprep.subr.mxu0 0.0
    %1372 = vmatpush2.msra.mxu0 0.0
    %1373 = vmatprep.subr.mxu0 0.0
    %1374 = vmatpush2.msra.mxu0 0.0
    %1375 = vmatprep.subr.mxu0 0.0
    %1376 = vmatpush2.msra.mxu0 0.0
    %1377 = vmatprep.subr.mxu0 0.0
    %1378 = vmatpush2.msra.mxu0 0.0
    %1379 = vmatprep.subr.mxu0 0.0
    %1380 = vmatpush2.msra.mxu0 0.0
    %1381 = vmatprep.subr.mxu0 0.0
    %1382 = vmatpush2.msra.mxu0 0.0
    %1383 = vmatprep.subr.mxu0 0.0
    %1384 = vmatpush2.msra.mxu0 0.0
    %1385 = vmatprep.subr.mxu0 0.0
    %1386 = vmatpush2.msra.mxu0 0.0
    %1387 = vmatprep.subr.mxu0 0.0
    %1388 = vmatpush2.msra.mxu0 0.0
    %1389 = vmatprep.subr.mxu0 0.0
    %1390 = vmatpush2.msra.mxu0 0.0
    %1391 = vmatprep.mubr.f32.mxu0 0.0
    %1392 = vmatmul.mubr.f32.gmra.mxu0 %v1317
    %v1393 = vpop.f32.mrf.mxu0
    %v1394 = vadd.f32 %v1295, %v1393
    %v1395 = vpop.f32.mrf.mxu0
    %v1396 = vadd.f32 %v1299, %v1395
    %1397 = vdwg.mxu0
    %1398 = vmatprep.subr.mxu0 0.0
    %1399 = vmatpush1.msra.mxu0 0.0
    %1400 = vmatprep.subr.mxu0 0.0
    %1401 = vmatpush1.msra.mxu0 0.0
    %1402 = vmatprep.subr.mxu0 0.0
    %1403 = vmatpush1.msra.mxu0 0.0
    %1404 = vmatprep.subr.mxu0 0.0
    %1405 = vmatpush1.msra.mxu0 0.0
    %1406 = vmatprep.subr.mxu0 0.0
    %1407 = vmatpush1.msra.mxu0 0.0
    %1408 = vmatprep.subr.mxu0 0.0
    %1409 = vmatpush1.msra.mxu0 0.0
    %1410 = vmatprep.subr.mxu0 0.0
    %1411 = vmatpush1.msra.mxu0 0.0
    %1412 = vmatprep.subr.mxu0 0.0
    %1413 = vmatpush1.msra.mxu0 0.0
    %1414 = vmatprep.subr.mxu0 0.0
    %1415 = vmatpush1.msra.mxu0 0.0
    %1416 = vmatprep.subr.mxu0 0.0
    %1417 = vmatpush1.msra.mxu0 0.0
    %1418 = vmatprep.subr.mxu0 0.0
    %1419 = vmatpush1.msra.mxu0 0.0
    %1420 = vmatprep.subr.mxu0 0.0
    %1421 = vmatpush1.msra.mxu0 0.0
    %1422 = vmatprep.subr.mxu0 0.0
    %1423 = vmatpush1.msra.mxu0 0.0
    %1424 = vmatprep.subr.mxu0 0.0
    %1425 = vmatpush1.msra.mxu0 0.0
    %1426 = vmatprep.subr.mxu0 0.0
    %1427 = vmatpush1.msra.mxu0 0.0
    %1428 = vmatprep.subr.mxu0 %v1325
    %1429 = vmatpush1.msra.mxu0 %v1323
    %1430 = vmatprep.subr.mxu0 0.0
    %1431 = vmatpush2.msra.mxu0 0.0
    %1432 = vmatprep.subr.mxu0 0.0
    %1433 = vmatpush2.msra.mxu0 0.0
    %1434 = vmatprep.subr.mxu0 0.0
    %1435 = vmatpush2.msra.mxu0 0.0
    %1436 = vmatprep.subr.mxu0 0.0
    %1437 = vmatpush2.msra.mxu0 0.0
    %1438 = vmatprep.subr.mxu0 0.0
    %1439 = vmatpush2.msra.mxu0 0.0
    %1440 = vmatprep.subr.mxu0 0.0
    %1441 = vmatpush2.msra.mxu0 0.0
    %1442 = vmatprep.subr.mxu0 0.0
    %1443 = vmatpush2.msra.mxu0 0.0
    %1444 = vmatprep.subr.mxu0 0.0
    %1445 = vmatpush2.msra.mxu0 0.0
    %1446 = vmatprep.subr.mxu0 0.0
    %1447 = vmatpush2.msra.mxu0 0.0
    %1448 = vmatprep.subr.mxu0 0.0
    %1449 = vmatpush2.msra.mxu0 0.0
    %1450 = vmatprep.subr.mxu0 0.0
    %1451 = vmatpush2.msra.mxu0 0.0
    %1452 = vmatprep.subr.mxu0 0.0
    %1453 = vmatpush2.msra.mxu0 0.0
    %1454 = vmatprep.subr.mxu0 0.0
    %1455 = vmatpush2.msra.mxu0 0.0
    %1456 = vmatprep.subr.mxu0 0.0
    %1457 = vmatpush2.msra.mxu0 0.0
    %1458 = vmatprep.subr.mxu0 0.0
    %1459 = vmatpush2.msra.mxu0 0.0
    %1460 = vmatprep.subr.mxu0 0.0
    %1461 = vmatpush2.msra.mxu0 0.0
    %1462 = vmatprep.mubr.f32.mxu0 0.0
    %1463 = vmatmul.mubr.f32.gmra.mxu0 %v1317
    %v1464 = vpop.f32.mrf.mxu0
    %v1465 = vadd.f32 %v1303, %v1464
    %v1466 = vpop.f32.mrf.mxu0
    %v1467 = vadd.f32 %v1307, %v1466
    %1468 = vdwg.mxu0
    %v1473 = vcombine.low %v1394, %v1396
    %v1474 = vcombine.low %v1465, %v1467
    %v1476 = vunpack.c.l.s4 1983009808
    %v1477 = vunpack.c.0.s8 %v1476
    %v1478 = vlaneseq
    %v1479 = vshrl.u32 %v1478, 7
    %v1480 = vsub.s32 %v1477, %v1479
    %v1481 = vrot.slane %v1473, %v1480
    %v1483 = vunpack.c.l.s4 1983009808
    %v1484 = vunpack.c.0.s8 %v1483
    %v1485 = vlaneseq
    %v1486 = vshrl.u32 %v1485, 7
    %v1487 = vsub.s32 %v1484, %v1486
    %v1488 = vrot.slane %v1474, %v1487
    %v1489 = vcombine.low %v1481, %v1488
    %s1491 = scalar_lea.vmem [#allocation2], 48
    %1492 = vst [vmem:[%s1491] sm:$0xff] %v1489
    %s1493 = scalar_lea.vmem %s0, 14
    %v1494 = vld [vmem:[%s1493] sm:$0x3]
    %v1495 = vld [vmem:[%s1] sm:$0x77]
    %v1496 = vld [vmem:[%s1 + $0x8] sm:$0x77]
    %v1497 = vld [vmem:[%s3] sm:$0xf]
    %v1499 = vlaneseq
    %v1500 = vshrl.u32 %v1499, 7
    %v1501 = vsub.s32 0, %v1500
    %v1502 = vrot.slane %v1497, %v1501
    %v1503 = vlaneseq
    %v1504 = vshrl.u32 %v1503, 7
    %v1505 = vsub.s32 1, %v1504
    %v1506 = vrot.slane %v1497, %v1505
    %v1507 = vlaneseq
    %v1508 = vshrl.u32 %v1507, 7
    %v1509 = vsub.s32 2, %v1508
    %v1510 = vrot.slane %v1497, %v1509
    %v1511 = vlaneseq
    %v1512 = vshrl.u32 %v1511, 7
    %v1513 = vsub.s32 3, %v1512
    %v1514 = vrot.slane %v1497, %v1513
    %v1521 = vcombine.high %v1495, %v1495
    %v1522 = vcombine.high %v1496, %v1496
    %v1524 = vsel %vm73, %v1494, 0
    %v1526 = vsel %vm77, %v1495, 0
    %v1528 = vsel %vm77, %v1521, 0
    %v1530 = vsel %vm77, %v1496, 0
    %v1532 = vsel %vm77, %v1522, 0
    %1534 = vmatprep.subr.mxu0 0.0
    %1535 = vmatpush1.msra.mxu0 0.0
    %1536 = vmatprep.subr.mxu0 0.0
    %1537 = vmatpush1.msra.mxu0 0.0
    %1538 = vmatprep.subr.mxu0 0.0
    %1539 = vmatpush1.msra.mxu0 0.0
    %1540 = vmatprep.subr.mxu0 0.0
    %1541 = vmatpush1.msra.mxu0 0.0
    %1542 = vmatprep.subr.mxu0 0.0
    %1543 = vmatpush1.msra.mxu0 0.0
    %1544 = vmatprep.subr.mxu0 0.0
    %1545 = vmatpush1.msra.mxu0 0.0
    %1546 = vmatprep.subr.mxu0 0.0
    %1547 = vmatpush1.msra.mxu0 0.0
    %1548 = vmatprep.subr.mxu0 0.0
    %1549 = vmatpush1.msra.mxu0 0.0
    %1550 = vmatprep.subr.mxu0 0.0
    %1551 = vmatpush1.msra.mxu0 0.0
    %1552 = vmatprep.subr.mxu0 0.0
    %1553 = vmatpush1.msra.mxu0 0.0
    %1554 = vmatprep.subr.mxu0 0.0
    %1555 = vmatpush1.msra.mxu0 0.0
    %1556 = vmatprep.subr.mxu0 0.0
    %1557 = vmatpush1.msra.mxu0 0.0
    %1558 = vmatprep.subr.mxu0 0.0
    %1559 = vmatpush1.msra.mxu0 0.0
    %1560 = vmatprep.subr.mxu0 0.0
    %1561 = vmatpush1.msra.mxu0 0.0
    %1562 = vmatprep.subr.mxu0 0.0
    %1563 = vmatpush1.msra.mxu0 0.0
    %1564 = vmatprep.subr.mxu0 %v1528
    %1565 = vmatpush1.msra.mxu0 %v1526
    %1566 = vmatprep.subr.mxu0 0.0
    %1567 = vmatpush2.msra.mxu0 0.0
    %1568 = vmatprep.subr.mxu0 0.0
    %1569 = vmatpush2.msra.mxu0 0.0
    %1570 = vmatprep.subr.mxu0 0.0
    %1571 = vmatpush2.msra.mxu0 0.0
    %1572 = vmatprep.subr.mxu0 0.0
    %1573 = vmatpush2.msra.mxu0 0.0
    %1574 = vmatprep.subr.mxu0 0.0
    %1575 = vmatpush2.msra.mxu0 0.0
    %1576 = vmatprep.subr.mxu0 0.0
    %1577 = vmatpush2.msra.mxu0 0.0
    %1578 = vmatprep.subr.mxu0 0.0
    %1579 = vmatpush2.msra.mxu0 0.0
    %1580 = vmatprep.subr.mxu0 0.0
    %1581 = vmatpush2.msra.mxu0 0.0
    %1582 = vmatprep.subr.mxu0 0.0
    %1583 = vmatpush2.msra.mxu0 0.0
    %1584 = vmatprep.subr.mxu0 0.0
    %1585 = vmatpush2.msra.mxu0 0.0
    %1586 = vmatprep.subr.mxu0 0.0
    %1587 = vmatpush2.msra.mxu0 0.0
    %1588 = vmatprep.subr.mxu0 0.0
    %1589 = vmatpush2.msra.mxu0 0.0
    %1590 = vmatprep.subr.mxu0 0.0
    %1591 = vmatpush2.msra.mxu0 0.0
    %1592 = vmatprep.subr.mxu0 0.0
    %1593 = vmatpush2.msra.mxu0 0.0
    %1594 = vmatprep.subr.mxu0 0.0
    %1595 = vmatpush2.msra.mxu0 0.0
    %1596 = vmatprep.subr.mxu0 0.0
    %1597 = vmatpush2.msra.mxu0 0.0
    %1598 = vmatprep.mubr.f32.mxu0 0.0
    %1599 = vmatmul.mubr.f32.gmra.mxu0 %v1524
    %v1600 = vpop.f32.mrf.mxu0
    %v1601 = vadd.f32 %v1502, %v1600
    %v1602 = vpop.f32.mrf.mxu0
    %v1603 = vadd.f32 %v1506, %v1602
    %1604 = vdwg.mxu0
    %1605 = vmatprep.subr.mxu0 0.0
    %1606 = vmatpush1.msra.mxu0 0.0
    %1607 = vmatprep.subr.mxu0 0.0
    %1608 = vmatpush1.msra.mxu0 0.0
    %1609 = vmatprep.subr.mxu0 0.0
    %1610 = vmatpush1.msra.mxu0 0.0
    %1611 = vmatprep.subr.mxu0 0.0
    %1612 = vmatpush1.msra.mxu0 0.0
    %1613 = vmatprep.subr.mxu0 0.0
    %1614 = vmatpush1.msra.mxu0 0.0
    %1615 = vmatprep.subr.mxu0 0.0
    %1616 = vmatpush1.msra.mxu0 0.0
    %1617 = vmatprep.subr.mxu0 0.0
    %1618 = vmatpush1.msra.mxu0 0.0
    %1619 = vmatprep.subr.mxu0 0.0
    %1620 = vmatpush1.msra.mxu0 0.0
    %1621 = vmatprep.subr.mxu0 0.0
    %1622 = vmatpush1.msra.mxu0 0.0
    %1623 = vmatprep.subr.mxu0 0.0
    %1624 = vmatpush1.msra.mxu0 0.0
    %1625 = vmatprep.subr.mxu0 0.0
    %1626 = vmatpush1.msra.mxu0 0.0
    %1627 = vmatprep.subr.mxu0 0.0
    %1628 = vmatpush1.msra.mxu0 0.0
    %1629 = vmatprep.subr.mxu0 0.0
    %1630 = vmatpush1.msra.mxu0 0.0
    %1631 = vmatprep.subr.mxu0 0.0
    %1632 = vmatpush1.msra.mxu0 0.0
    %1633 = vmatprep.subr.mxu0 0.0
    %1634 = vmatpush1.msra.mxu0 0.0
    %1635 = vmatprep.subr.mxu0 %v1532
    %1636 = vmatpush1.msra.mxu0 %v1530
    %1637 = vmatprep.subr.mxu0 0.0
    %1638 = vmatpush2.msra.mxu0 0.0
    %1639 = vmatprep.subr.mxu0 0.0
    %1640 = vmatpush2.msra.mxu0 0.0
    %1641 = vmatprep.subr.mxu0 0.0
    %1642 = vmatpush2.msra.mxu0 0.0
    %1643 = vmatprep.subr.mxu0 0.0
    %1644 = vmatpush2.msra.mxu0 0.0
    %1645 = vmatprep.subr.mxu0 0.0
    %1646 = vmatpush2.msra.mxu0 0.0
    %1647 = vmatprep.subr.mxu0 0.0
    %1648 = vmatpush2.msra.mxu0 0.0
    %1649 = vmatprep.subr.mxu0 0.0
    %1650 = vmatpush2.msra.mxu0 0.0
    %1651 = vmatprep.subr.mxu0 0.0
    %1652 = vmatpush2.msra.mxu0 0.0
    %1653 = vmatprep.subr.mxu0 0.0
    %1654 = vmatpush2.msra.mxu0 0.0
    %1655 = vmatprep.subr.mxu0 0.0
    %1656 = vmatpush2.msra.mxu0 0.0
    %1657 = vmatprep.subr.mxu0 0.0
    %1658 = vmatpush2.msra.mxu0 0.0
    %1659 = vmatprep.subr.mxu0 0.0
    %1660 = vmatpush2.msra.mxu0 0.0
    %1661 = vmatprep.subr.mxu0 0.0
    %1662 = vmatpush2.msra.mxu0 0.0
    %1663 = vmatprep.subr.mxu0 0.0
    %1664 = vmatpush2.msra.mxu0 0.0
    %1665 = vmatprep.subr.mxu0 0.0
    %1666 = vmatpush2.msra.mxu0 0.0
    %1667 = vmatprep.subr.mxu0 0.0
    %1668 = vmatpush2.msra.mxu0 0.0
    %1669 = vmatprep.mubr.f32.mxu0 0.0
    %1670 = vmatmul.mubr.f32.gmra.mxu0 %v1524
    %v1671 = vpop.f32.mrf.mxu0
    %v1672 = vadd.f32 %v1510, %v1671
    %v1673 = vpop.f32.mrf.mxu0
    %v1674 = vadd.f32 %v1514, %v1673
    %1675 = vdwg.mxu0
    %v1680 = vcombine.low %v1601, %v1603
    %v1681 = vcombine.low %v1672, %v1674
    %v1683 = vunpack.c.l.s4 1983009808
    %v1684 = vunpack.c.0.s8 %v1683
    %v1685 = vlaneseq
    %v1686 = vshrl.u32 %v1685, 7
    %v1687 = vsub.s32 %v1684, %v1686
    %v1688 = vrot.slane %v1680, %v1687
    %v1690 = vunpack.c.l.s4 1983009808
    %v1691 = vunpack.c.0.s8 %v1690
    %v1692 = vlaneseq
    %v1693 = vshrl.u32 %v1692, 7
    %v1694 = vsub.s32 %v1691, %v1693
    %v1695 = vrot.slane %v1681, %v1694
    %v1696 = vcombine.low %v1688, %v1695
    %s1698 = scalar_lea.vmem [#allocation2], 56
    %1699 = vst [vmem:[%s1698] sm:$0xff] %v1696
    %v1700 = vld [vmem:[%s1493] sm:$0x3]
    %v1701 = vld [vmem:[%s4] sm:$0x77]
    %v1702 = vld [vmem:[%s4 + $0x8] sm:$0x77]
    %v1703 = vld [vmem:[%s5] sm:$0xf]
    %v1705 = vlaneseq
    %v1706 = vshrl.u32 %v1705, 7
    %v1707 = vsub.s32 0, %v1706
    %v1708 = vrot.slane %v1703, %v1707
    %v1709 = vlaneseq
    %v1710 = vshrl.u32 %v1709, 7
    %v1711 = vsub.s32 2, %v1710
    %v1712 = vrot.slane %v1703, %v1711
    %v1713 = vlaneseq
    %v1714 = vshrl.u32 %v1713, 7
    %v1715 = vsub.s32 3, %v1714
    %v1716 = vrot.slane %v1703, %v1715
    %v1722 = vcombine.high %v1701, %v1701
    %v1723 = vcombine.high %v1702, %v1702
    %v1725 = vsel %vm73, %v1700, 0
    %v1727 = vsel %vm77, %v1701, 0
    %v1729 = vsel %vm77, %v1722, 0
    %v1731 = vsel %vm77, %v1702, 0
    %v1733 = vsel %vm77, %v1723, 0
    %1735 = vmatprep.subr.mxu0 0.0
    %1736 = vmatpush1.msra.mxu0 0.0
    %1737 = vmatprep.subr.mxu0 0.0
    %1738 = vmatpush1.msra.mxu0 0.0
    %1739 = vmatprep.subr.mxu0 0.0
    %1740 = vmatpush1.msra.mxu0 0.0
    %1741 = vmatprep.subr.mxu0 0.0
    %1742 = vmatpush1.msra.mxu0 0.0
    %1743 = vmatprep.subr.mxu0 0.0
    %1744 = vmatpush1.msra.mxu0 0.0
    %1745 = vmatprep.subr.mxu0 0.0
    %1746 = vmatpush1.msra.mxu0 0.0
    %1747 = vmatprep.subr.mxu0 0.0
    %1748 = vmatpush1.msra.mxu0 0.0
    %1749 = vmatprep.subr.mxu0 0.0
    %1750 = vmatpush1.msra.mxu0 0.0
    %1751 = vmatprep.subr.mxu0 0.0
    %1752 = vmatpush1.msra.mxu0 0.0
    %1753 = vmatprep.subr.mxu0 0.0
    %1754 = vmatpush1.msra.mxu0 0.0
    %1755 = vmatprep.subr.mxu0 0.0
    %1756 = vmatpush1.msra.mxu0 0.0
    %1757 = vmatprep.subr.mxu0 0.0
    %1758 = vmatpush1.msra.mxu0 0.0
    %1759 = vmatprep.subr.mxu0 0.0
    %1760 = vmatpush1.msra.mxu0 0.0
    %1761 = vmatprep.subr.mxu0 0.0
    %1762 = vmatpush1.msra.mxu0 0.0
    %1763 = vmatprep.subr.mxu0 0.0
    %1764 = vmatpush1.msra.mxu0 0.0
    %1765 = vmatprep.subr.mxu0 %v1729
    %1766 = vmatpush1.msra.mxu0 %v1727
    %1767 = vmatprep.subr.mxu0 0.0
    %1768 = vmatpush2.msra.mxu0 0.0
    %1769 = vmatprep.subr.mxu0 0.0
    %1770 = vmatpush2.msra.mxu0 0.0
    %1771 = vmatprep.subr.mxu0 0.0
    %1772 = vmatpush2.msra.mxu0 0.0
    %1773 = vmatprep.subr.mxu0 0.0
    %1774 = vmatpush2.msra.mxu0 0.0
    %1775 = vmatprep.subr.mxu0 0.0
    %1776 = vmatpush2.msra.mxu0 0.0
    %1777 = vmatprep.subr.mxu0 0.0
    %1778 = vmatpush2.msra.mxu0 0.0
    %1779 = vmatprep.subr.mxu0 0.0
    %1780 = vmatpush2.msra.mxu0 0.0
    %1781 = vmatprep.subr.mxu0 0.0
    %1782 = vmatpush2.msra.mxu0 0.0
    %1783 = vmatprep.subr.mxu0 0.0
    %1784 = vmatpush2.msra.mxu0 0.0
    %1785 = vmatprep.subr.mxu0 0.0
    %1786 = vmatpush2.msra.mxu0 0.0
    %1787 = vmatprep.subr.mxu0 0.0
    %1788 = vmatpush2.msra.mxu0 0.0
    %1789 = vmatprep.subr.mxu0 0.0
    %1790 = vmatpush2.msra.mxu0 0.0
    %1791 = vmatprep.subr.mxu0 0.0
    %1792 = vmatpush2.msra.mxu0 0.0
    %1793 = vmatprep.subr.mxu0 0.0
    %1794 = vmatpush2.msra.mxu0 0.0
    %1795 = vmatprep.subr.mxu0 0.0
    %1796 = vmatpush2.msra.mxu0 0.0
    %1797 = vmatprep.subr.mxu0 0.0
    %1798 = vmatpush2.msra.mxu0 0.0
    %1799 = vmatprep.mubr.f32.mxu0 0.0
    %1800 = vmatmul.mubr.f32.gmra.mxu0 %v1725
    %v1801 = vpop.f32.mrf.mxu0
    %v1802 = vadd.f32 %v1708, %v1801
    %v1803 = vpop.f32.mrf.mxu0
    %1804 = vdwg.mxu0
    %1805 = vmatprep.subr.mxu0 0.0
    %1806 = vmatpush1.msra.mxu0 0.0
    %1807 = vmatprep.subr.mxu0 0.0
    %1808 = vmatpush1.msra.mxu0 0.0
    %1809 = vmatprep.subr.mxu0 0.0
    %1810 = vmatpush1.msra.mxu0 0.0
    %1811 = vmatprep.subr.mxu0 0.0
    %1812 = vmatpush1.msra.mxu0 0.0
    %1813 = vmatprep.subr.mxu0 0.0
    %1814 = vmatpush1.msra.mxu0 0.0
    %1815 = vmatprep.subr.mxu0 0.0
    %1816 = vmatpush1.msra.mxu0 0.0
    %1817 = vmatprep.subr.mxu0 0.0
    %1818 = vmatpush1.msra.mxu0 0.0
    %1819 = vmatprep.subr.mxu0 0.0
    %1820 = vmatpush1.msra.mxu0 0.0
    %1821 = vmatprep.subr.mxu0 0.0
    %1822 = vmatpush1.msra.mxu0 0.0
    %1823 = vmatprep.subr.mxu0 0.0
    %1824 = vmatpush1.msra.mxu0 0.0
    %1825 = vmatprep.subr.mxu0 0.0
    %1826 = vmatpush1.msra.mxu0 0.0
    %1827 = vmatprep.subr.mxu0 0.0
    %1828 = vmatpush1.msra.mxu0 0.0
    %1829 = vmatprep.subr.mxu0 0.0
    %1830 = vmatpush1.msra.mxu0 0.0
    %1831 = vmatprep.subr.mxu0 0.0
    %1832 = vmatpush1.msra.mxu0 0.0
    %1833 = vmatprep.subr.mxu0 0.0
    %1834 = vmatpush1.msra.mxu0 0.0
    %1835 = vmatprep.subr.mxu0 %v1733
    %1836 = vmatpush1.msra.mxu0 %v1731
    %1837 = vmatprep.subr.mxu0 0.0
    %1838 = vmatpush2.msra.mxu0 0.0
    %1839 = vmatprep.subr.mxu0 0.0
    %1840 = vmatpush2.msra.mxu0 0.0
    %1841 = vmatprep.subr.mxu0 0.0
    %1842 = vmatpush2.msra.mxu0 0.0
    %1843 = vmatprep.subr.mxu0 0.0
    %1844 = vmatpush2.msra.mxu0 0.0
    %1845 = vmatprep.subr.mxu0 0.0
    %1846 = vmatpush2.msra.mxu0 0.0
    %1847 = vmatprep.subr.mxu0 0.0
    %1848 = vmatpush2.msra.mxu0 0.0
    %1849 = vmatprep.subr.mxu0 0.0
    %1850 = vmatpush2.msra.mxu0 0.0
    %1851 = vmatprep.subr.mxu0 0.0
    %1852 = vmatpush2.msra.mxu0 0.0
    %1853 = vmatprep.subr.mxu0 0.0
    %1854 = vmatpush2.msra.mxu0 0.0
    %1855 = vmatprep.subr.mxu0 0.0
    %1856 = vmatpush2.msra.mxu0 0.0
    %1857 = vmatprep.subr.mxu0 0.0
    %1858 = vmatpush2.msra.mxu0 0.0
    %1859 = vmatprep.subr.mxu0 0.0
    %1860 = vmatpush2.msra.mxu0 0.0
    %1861 = vmatprep.subr.mxu0 0.0
    %1862 = vmatpush2.msra.mxu0 0.0
    %1863 = vmatprep.subr.mxu0 0.0
    %1864 = vmatpush2.msra.mxu0 0.0
    %1865 = vmatprep.subr.mxu0 0.0
    %1866 = vmatpush2.msra.mxu0 0.0
    %1867 = vmatprep.subr.mxu0 0.0
    %1868 = vmatpush2.msra.mxu0 0.0
    %1869 = vmatprep.mubr.f32.mxu0 0.0
    %1870 = vmatmul.mubr.f32.gmra.mxu0 %v1725
    %v1871 = vpop.f32.mrf.mxu0
    %v1872 = vadd.f32 %v1712, %v1871
    %v1873 = vpop.f32.mrf.mxu0
    %v1874 = vadd.f32 %v1716, %v1873
    %1875 = vdwg.mxu0
    %v1876 = vxor.u32 %v1802, 2147483648
    %v1877 = vmul.f32 %v1876, 1.442695
    %v1878 = vpow.pop %v1877
    %v1879 = vadd.f32 %v1878, 1.0
    %v1880 = vrcp.pop %v1879
    %v1881 = vmul.f32 1.0, %v1880
    %v1882 = vtanh.pop %v1872
    %v1883 = vxor.u32 %v1874, 2147483648
    %v1884 = vmul.f32 %v1883, 1.442695
    %v1885 = vpow.pop %v1884
    %v1886 = vadd.f32 %v1885, 1.0
    %v1887 = vrcp.pop %v1886
    %v1888 = vmul.f32 1.0, %v1887
    %v1889 = vmul.f32 %v1881, %v1882
    %v1890 = vtanh.pop %v1889
    %v1891 = vmul.f32 %v1888, %v1890
    %v1892 = vld [vmem:[#allocation2] sm:$0xff]
    %v1893 = vld [vmem:[#allocation3] sm:$0xff]
    %v1894 = vld [vmem:[#allocation3 + $0x8] sm:$0xff]
    %v1895 = vld [vmem:[#allocation3 + $0x10] sm:$0xff]
    %v1896 = vld [vmem:[#allocation3 + $0x18] sm:$0xff]
    %v1897 = vld [vmem:[#allocation3 + $0x20] sm:$0xff]
    %v1898 = vld [vmem:[#allocation3 + $0x28] sm:$0xff]
    %v1899 = vld [vmem:[#allocation3 + $0x30] sm:$0xff]
    %v1900 = vld [vmem:[#allocation3 + $0x38] sm:$0xff]
    %v1901 = vld [vmem:[#allocation3 + $0x40] sm:$0xff]
    %v1902 = vld [vmem:[#allocation3 + $0x48] sm:$0xff]
    %v1903 = vld [vmem:[#allocation3 + $0x50] sm:$0xff]
    %v1904 = vld [vmem:[#allocation3 + $0x58] sm:$0xff]
    %v1905 = vld [vmem:[#allocation3 + $0x60] sm:$0xff]
    %v1906 = vld [vmem:[#allocation3 + $0x68] sm:$0xff]
    %v1907 = vld [vmem:[#allocation3 + $0x70] sm:$0xff]
    %v1908 = vld [vmem:[#allocation3 + $0x78] sm:$0xff]
    %v1909 = vld [vmem:[#allocation3 + $0x80] sm:$0xff]
    %v1910 = vld [vmem:[#allocation3 + $0x88] sm:$0xff]
    %v1911 = vld [vmem:[#allocation3 + $0x90] sm:$0xff]
    %v1912 = vld [vmem:[#allocation3 + $0x98] sm:$0xff]
    %v1913 = vld [vmem:[#allocation3 + $0xa0] sm:$0xff]
    %v1914 = vld [vmem:[#allocation3 + $0xa8] sm:$0xff]
    %v1915 = vld [vmem:[#allocation3 + $0xb0] sm:$0xff]
    %v1916 = vld [vmem:[#allocation3 + $0xb8] sm:$0xff]
    %v1917 = vld [vmem:[#allocation3 + $0xc0] sm:$0xff]
    %v1918 = vld [vmem:[#allocation3 + $0xc8] sm:$0xff]
    %v1919 = vld [vmem:[#allocation3 + $0xd0] sm:$0xff]
    %v1920 = vld [vmem:[#allocation3 + $0xd8] sm:$0xff]
    %v1921 = vld [vmem:[#allocation3 + $0xe0] sm:$0xff]
    %v1922 = vld [vmem:[#allocation3 + $0xe8] sm:$0xff]
    %v1923 = vld [vmem:[#allocation3 + $0xf0] sm:$0xff]
    %v1924 = vld [vmem:[#allocation3 + $0xf8] sm:$0xff]
    %v1925 = vld [vmem:[#allocation3 + $0x100] sm:$0xff]
    %v1926 = vld [vmem:[#allocation3 + $0x108] sm:$0xff]
    %v1927 = vld [vmem:[#allocation3 + $0x110] sm:$0xff]
    %v1928 = vld [vmem:[#allocation3 + $0x118] sm:$0xff]
    %v1929 = vld [vmem:[#allocation3 + $0x120] sm:$0xff]
    %v1930 = vld [vmem:[#allocation3 + $0x128] sm:$0xff]
    %v1931 = vld [vmem:[#allocation3 + $0x130] sm:$0xff]
    %v1932 = vld [vmem:[#allocation3 + $0x138] sm:$0xff]
    %v1933 = vld [vmem:[#allocation3 + $0x140] sm:$0xff]
    %v1934 = vld [vmem:[#allocation3 + $0x148] sm:$0xff]
    %v1935 = vld [vmem:[#allocation3 + $0x150] sm:$0xff]
    %v1936 = vld [vmem:[#allocation3 + $0x158] sm:$0xff]
    %v1937 = vld [vmem:[#allocation3 + $0x160] sm:$0xff]
    %v1938 = vld [vmem:[#allocation3 + $0x168] sm:$0xff]
    %v1939 = vld [vmem:[#allocation3 + $0x170] sm:$0xff]
    %v1940 = vld [vmem:[#allocation3 + $0x178] sm:$0xff]
    %v1941 = vld [vmem:[#allocation3 + $0x180] sm:$0xff]
    %v1942 = vld [vmem:[#allocation3 + $0x188] sm:$0xff]
    %v1943 = vld [vmem:[#allocation3 + $0x190] sm:$0xff]
    %v1944 = vld [vmem:[#allocation3 + $0x198] sm:$0xff]
    %v1945 = vld [vmem:[#allocation3 + $0x1a0] sm:$0xff]
    %v1946 = vld [vmem:[#allocation3 + $0x1a8] sm:$0xff]
    %v1947 = vld [vmem:[#allocation3 + $0x1b0] sm:$0xff]
    %v1948 = vld [vmem:[#allocation3 + $0x1b8] sm:$0xff]
    %v1949 = vld [vmem:[#allocation3 + $0x1c0] sm:$0xff]
    %v1950 = vld [vmem:[#allocation3 + $0x1c8] sm:$0xff]
    %v1951 = vld [vmem:[#allocation3 + $0x1d0] sm:$0xff]
    %v1952 = vld [vmem:[#allocation3 + $0x1d8] sm:$0xff]
    %v1953 = vld [vmem:[#allocation3 + $0x1e0] sm:$0xff]
    %v1954 = vld [vmem:[#allocation3 + $0x1e8] sm:$0xff]
    %v1955 = vld [vmem:[#allocation3 + $0x1f0] sm:$0xff]
    %v1956 = vld [vmem:[#allocation3 + $0x1f8] sm:$0xff]
    %1957 = vmatprep.subr.mxu0 %v1954
    %1958 = vmatpush1.msra.mxu0 %v1953
    %1959 = vmatprep.subr.mxu0 %v1950
    %1960 = vmatpush1.msra.mxu0 %v1949
    %1961 = vmatprep.subr.mxu0 %v1946
    %1962 = vmatpush1.msra.mxu0 %v1945
    %1963 = vmatprep.subr.mxu0 %v1942
    %1964 = vmatpush1.msra.mxu0 %v1941
    %1965 = vmatprep.subr.mxu0 %v1938
    %1966 = vmatpush1.msra.mxu0 %v1937
    %1967 = vmatprep.subr.mxu0 %v1934
    %1968 = vmatpush1.msra.mxu0 %v1933
    %1969 = vmatprep.subr.mxu0 %v1930
    %1970 = vmatpush1.msra.mxu0 %v1929
    %1971 = vmatprep.subr.mxu0 %v1926
    %1972 = vmatpush1.msra.mxu0 %v1925
    %1973 = vmatprep.subr.mxu0 %v1922
    %1974 = vmatpush1.msra.mxu0 %v1921
    %1975 = vmatprep.subr.mxu0 %v1918
    %1976 = vmatpush1.msra.mxu0 %v1917
    %1977 = vmatprep.subr.mxu0 %v1914
    %1978 = vmatpush1.msra.mxu0 %v1913
    %1979 = vmatprep.subr.mxu0 %v1910
    %1980 = vmatpush1.msra.mxu0 %v1909
    %1981 = vmatprep.subr.mxu0 %v1906
    %1982 = vmatpush1.msra.mxu0 %v1905
    %1983 = vmatprep.subr.mxu0 %v1902
    %1984 = vmatpush1.msra.mxu0 %v1901
    %1985 = vmatprep.subr.mxu0 %v1898
    %1986 = vmatpush1.msra.mxu0 %v1897
    %1987 = vmatprep.subr.mxu0 %v1894
    %1988 = vmatpush1.msra.mxu0 %v1893
    %1989 = vmatprep.subr.mxu0 0.0
    %1990 = vmatpush2.msra.mxu0 0.0
    %1991 = vmatprep.subr.mxu0 0.0
    %1992 = vmatpush2.msra.mxu0 0.0
    %1993 = vmatprep.subr.mxu0 0.0
    %1994 = vmatpush2.msra.mxu0 0.0
    %1995 = vmatprep.subr.mxu0 0.0
    %1996 = vmatpush2.msra.mxu0 0.0
    %1997 = vmatprep.subr.mxu0 0.0
    %1998 = vmatpush2.msra.mxu0 0.0
    %1999 = vmatprep.subr.mxu0 0.0
    %2000 = vmatpush2.msra.mxu0 0.0
    %2001 = vmatprep.subr.mxu0 0.0
    %2002 = vmatpush2.msra.mxu0 0.0
    %2003 = vmatprep.subr.mxu0 0.0
    %2004 = vmatpush2.msra.mxu0 0.0
    %2005 = vmatprep.subr.mxu0 0.0
    %2006 = vmatpush2.msra.mxu0 0.0
    %2007 = vmatprep.subr.mxu0 0.0
    %2008 = vmatpush2.msra.mxu0 0.0
    %2009 = vmatprep.subr.mxu0 0.0
    %2010 = vmatpush2.msra.mxu0 0.0
    %2011 = vmatprep.subr.mxu0 0.0
    %2012 = vmatpush2.msra.mxu0 0.0
    %2013 = vmatprep.subr.mxu0 0.0
    %2014 = vmatpush2.msra.mxu0 0.0
    %2015 = vmatprep.subr.mxu0 0.0
    %2016 = vmatpush2.msra.mxu0 0.0
    %2017 = vmatprep.subr.mxu0 0.0
    %2018 = vmatpush2.msra.mxu0 0.0
    %2019 = vmatprep.subr.mxu0 0.0
    %2020 = vmatpush2.msra.mxu0 0.0
    %2021 = vmatprep.mubr.f32.mxu0 0.0
    %2022 = vmatmul.mubr.f32.gmra.mxu0 0.0
    %v2023 = vpop.f32.mrf.mxu0
    %v2024 = vadd.f32 0.0, %v2023
    %v2025 = vpop.f32.mrf.mxu0
    %v2026 = vadd.f32 0.0, %v2025
    %2027 = vdwg.mxu0
    %2028 = vmatprep.subr.mxu0 %v1956
    %2029 = vmatpush1.msra.mxu0 %v1955
    %2030 = vmatprep.subr.mxu0 %v1952
    %2031 = vmatpush1.msra.mxu0 %v1951
    %2032 = vmatprep.subr.mxu0 %v1948
    %2033 = vmatpush1.msra.mxu0 %v1947
    %2034 = vmatprep.subr.mxu0 %v1944
    %2035 = vmatpush1.msra.mxu0 %v1943
    %2036 = vmatprep.subr.mxu0 %v1940
    %2037 = vmatpush1.msra.mxu0 %v1939
    %2038 = vmatprep.subr.mxu0 %v1936
    %2039 = vmatpush1.msra.mxu0 %v1935
    %2040 = vmatprep.subr.mxu0 %v1932
    %2041 = vmatpush1.msra.mxu0 %v1931
    %2042 = vmatprep.subr.mxu0 %v1928
    %2043 = vmatpush1.msra.mxu0 %v1927
    %2044 = vmatprep.subr.mxu0 %v1924
    %2045 = vmatpush1.msra.mxu0 %v1923
    %2046 = vmatprep.subr.mxu0 %v1920
    %2047 = vmatpush1.msra.mxu0 %v1919
    %2048 = vmatprep.subr.mxu0 %v1916
    %2049 = vmatpush1.msra.mxu0 %v1915
    %2050 = vmatprep.subr.mxu0 %v1912
    %2051 = vmatpush1.msra.mxu0 %v1911
    %2052 = vmatprep.subr.mxu0 %v1908
    %2053 = vmatpush1.msra.mxu0 %v1907
    %2054 = vmatprep.subr.mxu0 %v1904
    %2055 = vmatpush1.msra.mxu0 %v1903
    %2056 = vmatprep.subr.mxu0 %v1900
    %2057 = vmatpush1.msra.mxu0 %v1899
    %2058 = vmatprep.subr.mxu0 %v1896
    %2059 = vmatpush1.msra.mxu0 %v1895
    %2060 = vmatprep.subr.mxu0 0.0
    %2061 = vmatpush2.msra.mxu0 0.0
    %2062 = vmatprep.subr.mxu0 0.0
    %2063 = vmatpush2.msra.mxu0 0.0
    %2064 = vmatprep.subr.mxu0 0.0
    %2065 = vmatpush2.msra.mxu0 0.0
    %2066 = vmatprep.subr.mxu0 0.0
    %2067 = vmatpush2.msra.mxu0 0.0
    %2068 = vmatprep.subr.mxu0 0.0
    %2069 = vmatpush2.msra.mxu0 0.0
    %2070 = vmatprep.subr.mxu0 0.0
    %2071 = vmatpush2.msra.mxu0 0.0
    %2072 = vmatprep.subr.mxu0 0.0
    %2073 = vmatpush2.msra.mxu0 0.0
    %2074 = vmatprep.subr.mxu0 0.0
    %2075 = vmatpush2.msra.mxu0 0.0
    %2076 = vmatprep.subr.mxu0 0.0
    %2077 = vmatpush2.msra.mxu0 0.0
    %2078 = vmatprep.subr.mxu0 0.0
    %2079 = vmatpush2.msra.mxu0 0.0
    %2080 = vmatprep.subr.mxu0 0.0
    %2081 = vmatpush2.msra.mxu0 0.0
    %2082 = vmatprep.subr.mxu0 0.0
    %2083 = vmatpush2.msra.mxu0 0.0
    %2084 = vmatprep.subr.mxu0 0.0
    %2085 = vmatpush2.msra.mxu0 0.0
    %2086 = vmatprep.subr.mxu0 0.0
    %2087 = vmatpush2.msra.mxu0 0.0
    %2088 = vmatprep.subr.mxu0 0.0
    %2089 = vmatpush2.msra.mxu0 0.0
    %2090 = vmatprep.subr.mxu0 0.0
    %2091 = vmatpush2.msra.mxu0 0.0
    %2092 = vmatprep.mubr.f32.mxu0 0.0
    %2093 = vmatmul.mubr.f32.gmra.mxu0 0.0
    %v2094 = vpop.f32.mrf.mxu0
    %v2095 = vadd.f32 0.0, %v2094
    %v2096 = vpop.f32.mrf.mxu0
    %v2097 = vadd.f32 0.0, %v2096
    %2098 = vdwg.mxu0
    %v2103 = vcombine.low %v2024, %v2026
    %v2104 = vcombine.low %v2095, %v2097
    %v2106 = vunpack.c.l.s4 1983009808
    %v2107 = vunpack.c.0.s8 %v2106
    %v2108 = vlaneseq
    %v2109 = vshrl.u32 %v2108, 7
    %v2110 = vsub.s32 %v2107, %v2109
    %v2111 = vrot.slane %v2103, %v2110
    %v2113 = vunpack.c.l.s4 1983009808
    %v2114 = vunpack.c.0.s8 %v2113
    %v2115 = vlaneseq
    %v2116 = vshrl.u32 %v2115, 7
    %v2117 = vsub.s32 %v2114, %v2116
    %v2118 = vrot.slane %v2104, %v2117
    %v2119 = vcombine.low %v2111, %v2118
    %v2121 = vadd.f32 %v1892, %v2119
    %v2122 = vxor.u32 %v2121, 2147483648
    %v2123 = vmul.f32 %v2122, 1.442695
    %v2124 = vpow.pop %v2123
    %v2125 = vadd.f32 %v2124, 1.0
    %v2126 = vrcp.pop %v2125
    %v2127 = vmul.f32 1.0, %v2126
    %v2129 = vrot.slane %v2121, 2
    %v2131 = vxor.u32 %v2129, 2147483648
    %v2132 = vmul.f32 %v2131, 1.442695
    %v2133 = vpow.pop %v2132
    %v2134 = vadd.f32 %v2133, 1.0
    %v2135 = vrcp.pop %v2134
    %v2136 = vmul.f32 1.0, %v2135
    %v2137 = vrot.slane %v2121, 4
    %v2139 = vtanh.pop %v2137
    %v2140 = vrot.slane %v2121, 6
    %v2142 = vxor.u32 %v2140, 2147483648
    %v2143 = vmul.f32 %v2142, 1.442695
    %v2144 = vpow.pop %v2143
    %v2145 = vadd.f32 %v2144, 1.0
    %v2146 = vrcp.pop %v2145
    %v2147 = vmul.f32 1.0, %v2146
    %v2148 = vmul.f32 %v2136, 0.0
    %v2149 = vmul.f32 %v2127, %v2139
    %v2150 = vadd.f32 %v2148, %v2149
    %v2151 = vtanh.pop %v2150
    %v2152 = vmul.f32 %v2147, %v2151
    %v2153 = vld [vmem:[%s456] sm:$0xff]
    %2154 = vmatprep.subr.mxu0 %v1954
    %2155 = vmatpush1.msra.mxu0 %v1953
    %2156 = vmatprep.subr.mxu0 %v1950
    %2157 = vmatpush1.msra.mxu0 %v1949
    %2158 = vmatprep.subr.mxu0 %v1946
    %2159 = vmatpush1.msra.mxu0 %v1945
    %2160 = vmatprep.subr.mxu0 %v1942
    %2161 = vmatpush1.msra.mxu0 %v1941
    %2162 = vmatprep.subr.mxu0 %v1938
    %2163 = vmatpush1.msra.mxu0 %v1937
    %2164 = vmatprep.subr.mxu0 %v1934
    %2165 = vmatpush1.msra.mxu0 %v1933
    %2166 = vmatprep.subr.mxu0 %v1930
    %2167 = vmatpush1.msra.mxu0 %v1929
    %2168 = vmatprep.subr.mxu0 %v1926
    %2169 = vmatpush1.msra.mxu0 %v1925
    %2170 = vmatprep.subr.mxu0 %v1922
    %2171 = vmatpush1.msra.mxu0 %v1921
    %2172 = vmatprep.subr.mxu0 %v1918
    %2173 = vmatpush1.msra.mxu0 %v1917
    %2174 = vmatprep.subr.mxu0 %v1914
    %2175 = vmatpush1.msra.mxu0 %v1913
    %2176 = vmatprep.subr.mxu0 %v1910
    %2177 = vmatpush1.msra.mxu0 %v1909
    %2178 = vmatprep.subr.mxu0 %v1906
    %2179 = vmatpush1.msra.mxu0 %v1905
    %2180 = vmatprep.subr.mxu0 %v1902
    %2181 = vmatpush1.msra.mxu0 %v1901
    %2182 = vmatprep.subr.mxu0 %v1898
    %2183 = vmatpush1.msra.mxu0 %v1897
    %2184 = vmatprep.subr.mxu0 %v1894
    %2185 = vmatpush1.msra.mxu0 %v1893
    %2186 = vmatprep.subr.mxu0 0.0
    %2187 = vmatpush2.msra.mxu0 0.0
    %2188 = vmatprep.subr.mxu0 0.0
    %2189 = vmatpush2.msra.mxu0 0.0
    %2190 = vmatprep.subr.mxu0 0.0
    %2191 = vmatpush2.msra.mxu0 0.0
    %2192 = vmatprep.subr.mxu0 0.0
    %2193 = vmatpush2.msra.mxu0 0.0
    %2194 = vmatprep.subr.mxu0 0.0
    %2195 = vmatpush2.msra.mxu0 0.0
    %2196 = vmatprep.subr.mxu0 0.0
    %2197 = vmatpush2.msra.mxu0 0.0
    %2198 = vmatprep.subr.mxu0 0.0
    %2199 = vmatpush2.msra.mxu0 0.0
    %2200 = vmatprep.subr.mxu0 0.0
    %2201 = vmatpush2.msra.mxu0 0.0
    %2202 = vmatprep.subr.mxu0 0.0
    %2203 = vmatpush2.msra.mxu0 0.0
    %2204 = vmatprep.subr.mxu0 0.0
    %2205 = vmatpush2.msra.mxu0 0.0
    %2206 = vmatprep.subr.mxu0 0.0
    %2207 = vmatpush2.msra.mxu0 0.0
    %2208 = vmatprep.subr.mxu0 0.0
    %2209 = vmatpush2.msra.mxu0 0.0
    %2210 = vmatprep.subr.mxu0 0.0
    %2211 = vmatpush2.msra.mxu0 0.0
    %2212 = vmatprep.subr.mxu0 0.0
    %2213 = vmatpush2.msra.mxu0 0.0
    %2214 = vmatprep.subr.mxu0 0.0
    %2215 = vmatpush2.msra.mxu0 0.0
    %2216 = vmatprep.subr.mxu0 0.0
    %2217 = vmatpush2.msra.mxu0 0.0
    %2218 = vmatprep.mubr.f32.mxu0 0.0
    %2219 = vmatmul.mubr.f32.gmra.mxu0 %v2152
    %v2220 = vpop.f32.mrf.mxu0
    %v2221 = vadd.f32 0.0, %v2220
    %v2222 = vpop.f32.mrf.mxu0
    %v2223 = vadd.f32 0.0, %v2222
    %2224 = vdwg.mxu0
    %2225 = vmatprep.subr.mxu0 %v1956
    %2226 = vmatpush1.msra.mxu0 %v1955
    %2227 = vmatprep.subr.mxu0 %v1952
    %2228 = vmatpush1.msra.mxu0 %v1951
    %2229 = vmatprep.subr.mxu0 %v1948
    %2230 = vmatpush1.msra.mxu0 %v1947
    %2231 = vmatprep.subr.mxu0 %v1944
    %2232 = vmatpush1.msra.mxu0 %v1943
    %2233 = vmatprep.subr.mxu0 %v1940
    %2234 = vmatpush1.msra.mxu0 %v1939
    %2235 = vmatprep.subr.mxu0 %v1936
    %2236 = vmatpush1.msra.mxu0 %v1935
    %2237 = vmatprep.subr.mxu0 %v1932
    %2238 = vmatpush1.msra.mxu0 %v1931
    %2239 = vmatprep.subr.mxu0 %v1928
    %2240 = vmatpush1.msra.mxu0 %v1927
    %2241 = vmatprep.subr.mxu0 %v1924
    %2242 = vmatpush1.msra.mxu0 %v1923
    %2243 = vmatprep.subr.mxu0 %v1920
    %2244 = vmatpush1.msra.mxu0 %v1919
    %2245 = vmatprep.subr.mxu0 %v1916
    %2246 = vmatpush1.msra.mxu0 %v1915
    %2247 = vmatprep.subr.mxu0 %v1912
    %2248 = vmatpush1.msra.mxu0 %v1911
    %2249 = vmatprep.subr.mxu0 %v1908
    %2250 = vmatpush1.msra.mxu0 %v1907
    %2251 = vmatprep.subr.mxu0 %v1904
    %2252 = vmatpush1.msra.mxu0 %v1903
    %2253 = vmatprep.subr.mxu0 %v1900
    %2254 = vmatpush1.msra.mxu0 %v1899
    %2255 = vmatprep.subr.mxu0 %v1896
    %2256 = vmatpush1.msra.mxu0 %v1895
    %2257 = vmatprep.subr.mxu0 0.0
    %2258 = vmatpush2.msra.mxu0 0.0
    %2259 = vmatprep.subr.mxu0 0.0
    %2260 = vmatpush2.msra.mxu0 0.0
    %2261 = vmatprep.subr.mxu0 0.0
    %2262 = vmatpush2.msra.mxu0 0.0
    %2263 = vmatprep.subr.mxu0 0.0
    %2264 = vmatpush2.msra.mxu0 0.0
    %2265 = vmatprep.subr.mxu0 0.0
    %2266 = vmatpush2.msra.mxu0 0.0
    %2267 = vmatprep.subr.mxu0 0.0
    %2268 = vmatpush2.msra.mxu0 0.0
    %2269 = vmatprep.subr.mxu0 0.0
    %2270 = vmatpush2.msra.mxu0 0.0
    %2271 = vmatprep.subr.mxu0 0.0
    %2272 = vmatpush2.msra.mxu0 0.0
    %2273 = vmatprep.subr.mxu0 0.0
    %2274 = vmatpush2.msra.mxu0 0.0
    %2275 = vmatprep.subr.mxu0 0.0
    %2276 = vmatpush2.msra.mxu0 0.0
    %2277 = vmatprep.subr.mxu0 0.0
    %2278 = vmatpush2.msra.mxu0 0.0
    %2279 = vmatprep.subr.mxu0 0.0
    %2280 = vmatpush2.msra.mxu0 0.0
    %2281 = vmatprep.subr.mxu0 0.0
    %2282 = vmatpush2.msra.mxu0 0.0
    %2283 = vmatprep.subr.mxu0 0.0
    %2284 = vmatpush2.msra.mxu0 0.0
    %2285 = vmatprep.subr.mxu0 0.0
    %2286 = vmatpush2.msra.mxu0 0.0
    %2287 = vmatprep.subr.mxu0 0.0
    %2288 = vmatpush2.msra.mxu0 0.0
    %2289 = vmatprep.mubr.f32.mxu0 0.0
    %2290 = vmatmul.mubr.f32.gmra.mxu0 %v2152
    %v2291 = vpop.f32.mrf.mxu0
    %v2292 = vadd.f32 0.0, %v2291
    %v2293 = vpop.f32.mrf.mxu0
    %v2294 = vadd.f32 0.0, %v2293
    %2295 = vdwg.mxu0
    %v2300 = vcombine.low %v2221, %v2223
    %v2301 = vcombine.low %v2292, %v2294
    %v2303 = vunpack.c.l.s4 1983009808
    %v2304 = vunpack.c.0.s8 %v2303
    %v2305 = vlaneseq
    %v2306 = vshrl.u32 %v2305, 7
    %v2307 = vsub.s32 %v2304, %v2306
    %v2308 = vrot.slane %v2300, %v2307
    %v2310 = vunpack.c.l.s4 1983009808
    %v2311 = vunpack.c.0.s8 %v2310
    %v2312 = vlaneseq
    %v2313 = vshrl.u32 %v2312, 7
    %v2314 = vsub.s32 %v2311, %v2313
    %v2315 = vrot.slane %v2301, %v2314
    %v2316 = vcombine.low %v2308, %v2315
    %v2318 = vadd.f32 %v2153, %v2316
    %v2319 = vxor.u32 %v2318, 2147483648
    %v2320 = vmul.f32 %v2319, 1.442695
    %v2321 = vpow.pop %v2320
    %v2322 = vadd.f32 %v2321, 1.0
    %v2323 = vrcp.pop %v2322
    %v2324 = vmul.f32 1.0, %v2323
    %v2326 = vrot.slane %v2318, 2
    %v2328 = vxor.u32 %v2326, 2147483648
    %v2329 = vmul.f32 %v2328, 1.442695
    %v2330 = vpow.pop %v2329
    %v2331 = vadd.f32 %v2330, 1.0
    %v2332 = vrcp.pop %v2331
    %v2333 = vmul.f32 1.0, %v2332
    %v2334 = vrot.slane %v2318, 4
    %v2336 = vtanh.pop %v2334
    %v2337 = vrot.slane %v2318, 6
    %v2339 = vxor.u32 %v2337, 2147483648
    %v2340 = vmul.f32 %v2339, 1.442695
    %v2341 = vpow.pop %v2340
    %v2342 = vadd.f32 %v2341, 1.0
    %v2343 = vrcp.pop %v2342
    %v2344 = vmul.f32 1.0, %v2343
    %v2345 = vmul.f32 %v2333, %v2150
    %v2346 = vmul.f32 %v2324, %v2336
    %v2347 = vadd.f32 %v2345, %v2346
    %v2348 = vtanh.pop %v2347
    %v2349 = vmul.f32 %v2344, %v2348
    %v2350 = vld [vmem:[%s663] sm:$0xff]
    %2351 = vmatprep.subr.mxu0 %v1954
    %2352 = vmatpush1.msra.mxu0 %v1953
    %2353 = vmatprep.subr.mxu0 %v1950
    %2354 = vmatpush1.msra.mxu0 %v1949
    %2355 = vmatprep.subr.mxu0 %v1946
    %2356 = vmatpush1.msra.mxu0 %v1945
    %2357 = vmatprep.subr.mxu0 %v1942
    %2358 = vmatpush1.msra.mxu0 %v1941
    %2359 = vmatprep.subr.mxu0 %v1938
    %2360 = vmatpush1.msra.mxu0 %v1937
    %2361 = vmatprep.subr.mxu0 %v1934
    %2362 = vmatpush1.msra.mxu0 %v1933
    %2363 = vmatprep.subr.mxu0 %v1930
    %2364 = vmatpush1.msra.mxu0 %v1929
    %2365 = vmatprep.subr.mxu0 %v1926
    %2366 = vmatpush1.msra.mxu0 %v1925
    %2367 = vmatprep.subr.mxu0 %v1922
    %2368 = vmatpush1.msra.mxu0 %v1921
    %2369 = vmatprep.subr.mxu0 %v1918
    %2370 = vmatpush1.msra.mxu0 %v1917
    %2371 = vmatprep.subr.mxu0 %v1914
    %2372 = vmatpush1.msra.mxu0 %v1913
    %2373 = vmatprep.subr.mxu0 %v1910
    %2374 = vmatpush1.msra.mxu0 %v1909
    %2375 = vmatprep.subr.mxu0 %v1906
    %2376 = vmatpush1.msra.mxu0 %v1905
    %2377 = vmatprep.subr.mxu0 %v1902
    %2378 = vmatpush1.msra.mxu0 %v1901
    %2379 = vmatprep.subr.mxu0 %v1898
    %2380 = vmatpush1.msra.mxu0 %v1897
    %2381 = vmatprep.subr.mxu0 %v1894
    %2382 = vmatpush1.msra.mxu0 %v1893
    %2383 = vmatprep.subr.mxu0 0.0
    %2384 = vmatpush2.msra.mxu0 0.0
    %2385 = vmatprep.subr.mxu0 0.0
    %2386 = vmatpush2.msra.mxu0 0.0
    %2387 = vmatprep.subr.mxu0 0.0
    %2388 = vmatpush2.msra.mxu0 0.0
    %2389 = vmatprep.subr.mxu0 0.0
    %2390 = vmatpush2.msra.mxu0 0.0
    %2391 = vmatprep.subr.mxu0 0.0
    %2392 = vmatpush2.msra.mxu0 0.0
    %2393 = vmatprep.subr.mxu0 0.0
    %2394 = vmatpush2.msra.mxu0 0.0
    %2395 = vmatprep.subr.mxu0 0.0
    %2396 = vmatpush2.msra.mxu0 0.0
    %2397 = vmatprep.subr.mxu0 0.0
    %2398 = vmatpush2.msra.mxu0 0.0
    %2399 = vmatprep.subr.mxu0 0.0
    %2400 = vmatpush2.msra.mxu0 0.0
    %2401 = vmatprep.subr.mxu0 0.0
    %2402 = vmatpush2.msra.mxu0 0.0
    %2403 = vmatprep.subr.mxu0 0.0
    %2404 = vmatpush2.msra.mxu0 0.0
    %2405 = vmatprep.subr.mxu0 0.0
    %2406 = vmatpush2.msra.mxu0 0.0
    %2407 = vmatprep.subr.mxu0 0.0
    %2408 = vmatpush2.msra.mxu0 0.0
    %2409 = vmatprep.subr.mxu0 0.0
    %2410 = vmatpush2.msra.mxu0 0.0
    %2411 = vmatprep.subr.mxu0 0.0
    %2412 = vmatpush2.msra.mxu0 0.0
    %2413 = vmatprep.subr.mxu0 0.0
    %2414 = vmatpush2.msra.mxu0 0.0
    %2415 = vmatprep.mubr.f32.mxu0 0.0
    %2416 = vmatmul.mubr.f32.gmra.mxu0 %v2349
    %v2417 = vpop.f32.mrf.mxu0
    %v2418 = vadd.f32 0.0, %v2417
    %v2419 = vpop.f32.mrf.mxu0
    %v2420 = vadd.f32 0.0, %v2419
    %2421 = vdwg.mxu0
    %2422 = vmatprep.subr.mxu0 %v1956
    %2423 = vmatpush1.msra.mxu0 %v1955
    %2424 = vmatprep.subr.mxu0 %v1952
    %2425 = vmatpush1.msra.mxu0 %v1951
    %2426 = vmatprep.subr.mxu0 %v1948
    %2427 = vmatpush1.msra.mxu0 %v1947
    %2428 = vmatprep.subr.mxu0 %v1944
    %2429 = vmatpush1.msra.mxu0 %v1943
    %2430 = vmatprep.subr.mxu0 %v1940
    %2431 = vmatpush1.msra.mxu0 %v1939
    %2432 = vmatprep.subr.mxu0 %v1936
    %2433 = vmatpush1.msra.mxu0 %v1935
    %2434 = vmatprep.subr.mxu0 %v1932
    %2435 = vmatpush1.msra.mxu0 %v1931
    %2436 = vmatprep.subr.mxu0 %v1928
    %2437 = vmatpush1.msra.mxu0 %v1927
    %2438 = vmatprep.subr.mxu0 %v1924
    %2439 = vmatpush1.msra.mxu0 %v1923
    %2440 = vmatprep.subr.mxu0 %v1920
    %2441 = vmatpush1.msra.mxu0 %v1919
    %2442 = vmatprep.subr.mxu0 %v1916
    %2443 = vmatpush1.msra.mxu0 %v1915
    %2444 = vmatprep.subr.mxu0 %v1912
    %2445 = vmatpush1.msra.mxu0 %v1911
    %2446 = vmatprep.subr.mxu0 %v1908
    %2447 = vmatpush1.msra.mxu0 %v1907
    %2448 = vmatprep.subr.mxu0 %v1904
    %2449 = vmatpush1.msra.mxu0 %v1903
    %2450 = vmatprep.subr.mxu0 %v1900
    %2451 = vmatpush1.msra.mxu0 %v1899
    %2452 = vmatprep.subr.mxu0 %v1896
    %2453 = vmatpush1.msra.mxu0 %v1895
    %2454 = vmatprep.subr.mxu0 0.0
    %2455 = vmatpush2.msra.mxu0 0.0
    %2456 = vmatprep.subr.mxu0 0.0
    %2457 = vmatpush2.msra.mxu0 0.0
    %2458 = vmatprep.subr.mxu0 0.0
    %2459 = vmatpush2.msra.mxu0 0.0
    %2460 = vmatprep.subr.mxu0 0.0
    %2461 = vmatpush2.msra.mxu0 0.0
    %2462 = vmatprep.subr.mxu0 0.0
    %2463 = vmatpush2.msra.mxu0 0.0
    %2464 = vmatprep.subr.mxu0 0.0
    %2465 = vmatpush2.msra.mxu0 0.0
    %2466 = vmatprep.subr.mxu0 0.0
    %2467 = vmatpush2.msra.mxu0 0.0
    %2468 = vmatprep.subr.mxu0 0.0
    %2469 = vmatpush2.msra.mxu0 0.0
    %2470 = vmatprep.subr.mxu0 0.0
    %2471 = vmatpush2.msra.mxu0 0.0
    %2472 = vmatprep.subr.mxu0 0.0
    %2473 = vmatpush2.msra.mxu0 0.0
    %2474 = vmatprep.subr.mxu0 0.0
    %2475 = vmatpush2.msra.mxu0 0.0
    %2476 = vmatprep.subr.mxu0 0.0
    %2477 = vmatpush2.msra.mxu0 0.0
    %2478 = vmatprep.subr.mxu0 0.0
    %2479 = vmatpush2.msra.mxu0 0.0
    %2480 = vmatprep.subr.mxu0 0.0
    %2481 = vmatpush2.msra.mxu0 0.0
    %2482 = vmatprep.subr.mxu0 0.0
    %2483 = vmatpush2.msra.mxu0 0.0
    %2484 = vmatprep.subr.mxu0 0.0
    %2485 = vmatpush2.msra.mxu0 0.0
    %2486 = vmatprep.mubr.f32.mxu0 0.0
    %2487 = vmatmul.mubr.f32.gmra.mxu0 %v2349
    %v2488 = vpop.f32.mrf.mxu0
    %v2489 = vadd.f32 0.0, %v2488
    %v2490 = vpop.f32.mrf.mxu0
    %v2491 = vadd.f32 0.0, %v2490
    %2492 = vdwg.mxu0
    %v2497 = vcombine.low %v2418, %v2420
    %v2498 = vcombine.low %v2489, %v2491
    %v2500 = vunpack.c.l.s4 1983009808
    %v2501 = vunpack.c.0.s8 %v2500
    %v2502 = vlaneseq
    %v2503 = vshrl.u32 %v2502, 7
    %v2504 = vsub.s32 %v2501, %v2503
    %v2505 = vrot.slane %v2497, %v2504
    %v2507 = vunpack.c.l.s4 1983009808
    %v2508 = vunpack.c.0.s8 %v2507
    %v2509 = vlaneseq
    %v2510 = vshrl.u32 %v2509, 7
    %v2511 = vsub.s32 %v2508, %v2510
    %v2512 = vrot.slane %v2498, %v2511
    %v2513 = vcombine.low %v2505, %v2512
    %v2515 = vadd.f32 %v2350, %v2513
    %v2516 = vxor.u32 %v2515, 2147483648
    %v2517 = vmul.f32 %v2516, 1.442695
    %v2518 = vpow.pop %v2517
    %v2519 = vadd.f32 %v2518, 1.0
    %v2520 = vrcp.pop %v2519
    %v2521 = vmul.f32 1.0, %v2520
    %v2523 = vrot.slane %v2515, 2
    %v2525 = vxor.u32 %v2523, 2147483648
    %v2526 = vmul.f32 %v2525, 1.442695
    %v2527 = vpow.pop %v2526
    %v2528 = vadd.f32 %v2527, 1.0
    %v2529 = vrcp.pop %v2528
    %v2530 = vmul.f32 1.0, %v2529
    %v2531 = vrot.slane %v2515, 4
    %v2533 = vtanh.pop %v2531
    %v2534 = vrot.slane %v2515, 6
    %v2536 = vxor.u32 %v2534, 2147483648
    %v2537 = vmul.f32 %v2536, 1.442695
    %v2538 = vpow.pop %v2537
    %v2539 = vadd.f32 %v2538, 1.0
    %v2540 = vrcp.pop %v2539
    %v2541 = vmul.f32 1.0, %v2540
    %v2542 = vmul.f32 %v2530, %v2347
    %v2543 = vmul.f32 %v2521, %v2533
    %v2544 = vadd.f32 %v2542, %v2543
    %v2545 = vtanh.pop %v2544
    %v2546 = vmul.f32 %v2541, %v2545
    %v2547 = vld [vmem:[%s870] sm:$0xff]
    %2548 = vmatprep.subr.mxu0 %v1954
    %2549 = vmatpush1.msra.mxu0 %v1953
    %2550 = vmatprep.subr.mxu0 %v1950
    %2551 = vmatpush1.msra.mxu0 %v1949
    %2552 = vmatprep.subr.mxu0 %v1946
    %2553 = vmatpush1.msra.mxu0 %v1945
    %2554 = vmatprep.subr.mxu0 %v1942
    %2555 = vmatpush1.msra.mxu0 %v1941
    %2556 = vmatprep.subr.mxu0 %v1938
    %2557 = vmatpush1.msra.mxu0 %v1937
    %2558 = vmatprep.subr.mxu0 %v1934
    %2559 = vmatpush1.msra.mxu0 %v1933
    %2560 = vmatprep.subr.mxu0 %v1930
    %2561 = vmatpush1.msra.mxu0 %v1929
    %2562 = vmatprep.subr.mxu0 %v1926
    %2563 = vmatpush1.msra.mxu0 %v1925
    %2564 = vmatprep.subr.mxu0 %v1922
    %2565 = vmatpush1.msra.mxu0 %v1921
    %2566 = vmatprep.subr.mxu0 %v1918
    %2567 = vmatpush1.msra.mxu0 %v1917
    %2568 = vmatprep.subr.mxu0 %v1914
    %2569 = vmatpush1.msra.mxu0 %v1913
    %2570 = vmatprep.subr.mxu0 %v1910
    %2571 = vmatpush1.msra.mxu0 %v1909
    %2572 = vmatprep.subr.mxu0 %v1906
    %2573 = vmatpush1.msra.mxu0 %v1905
    %2574 = vmatprep.subr.mxu0 %v1902
    %2575 = vmatpush1.msra.mxu0 %v1901
    %2576 = vmatprep.subr.mxu0 %v1898
    %2577 = vmatpush1.msra.mxu0 %v1897
    %2578 = vmatprep.subr.mxu0 %v1894
    %2579 = vmatpush1.msra.mxu0 %v1893
    %2580 = vmatprep.subr.mxu0 0.0
    %2581 = vmatpush2.msra.mxu0 0.0
    %2582 = vmatprep.subr.mxu0 0.0
    %2583 = vmatpush2.msra.mxu0 0.0
    %2584 = vmatprep.subr.mxu0 0.0
    %2585 = vmatpush2.msra.mxu0 0.0
    %2586 = vmatprep.subr.mxu0 0.0
    %2587 = vmatpush2.msra.mxu0 0.0
    %2588 = vmatprep.subr.mxu0 0.0
    %2589 = vmatpush2.msra.mxu0 0.0
    %2590 = vmatprep.subr.mxu0 0.0
    %2591 = vmatpush2.msra.mxu0 0.0
    %2592 = vmatprep.subr.mxu0 0.0
    %2593 = vmatpush2.msra.mxu0 0.0
    %2594 = vmatprep.subr.mxu0 0.0
    %2595 = vmatpush2.msra.mxu0 0.0
    %2596 = vmatprep.subr.mxu0 0.0
    %2597 = vmatpush2.msra.mxu0 0.0
    %2598 = vmatprep.subr.mxu0 0.0
    %2599 = vmatpush2.msra.mxu0 0.0
    %2600 = vmatprep.subr.mxu0 0.0
    %2601 = vmatpush2.msra.mxu0 0.0
    %2602 = vmatprep.subr.mxu0 0.0
    %2603 = vmatpush2.msra.mxu0 0.0
    %2604 = vmatprep.subr.mxu0 0.0
    %2605 = vmatpush2.msra.mxu0 0.0
    %2606 = vmatprep.subr.mxu0 0.0
    %2607 = vmatpush2.msra.mxu0 0.0
    %2608 = vmatprep.subr.mxu0 0.0
    %2609 = vmatpush2.msra.mxu0 0.0
    %2610 = vmatprep.subr.mxu0 0.0
    %2611 = vmatpush2.msra.mxu0 0.0
    %2612 = vmatprep.mubr.f32.mxu0 0.0
    %2613 = vmatmul.mubr.f32.gmra.mxu0 %v2546
    %v2614 = vpop.f32.mrf.mxu0
    %v2615 = vadd.f32 0.0, %v2614
    %v2616 = vpop.f32.mrf.mxu0
    %v2617 = vadd.f32 0.0, %v2616
    %2618 = vdwg.mxu0
    %2619 = vmatprep.subr.mxu0 %v1956
    %2620 = vmatpush1.msra.mxu0 %v1955
    %2621 = vmatprep.subr.mxu0 %v1952
    %2622 = vmatpush1.msra.mxu0 %v1951
    %2623 = vmatprep.subr.mxu0 %v1948
    %2624 = vmatpush1.msra.mxu0 %v1947
    %2625 = vmatprep.subr.mxu0 %v1944
    %2626 = vmatpush1.msra.mxu0 %v1943
    %2627 = vmatprep.subr.mxu0 %v1940
    %2628 = vmatpush1.msra.mxu0 %v1939
    %2629 = vmatprep.subr.mxu0 %v1936
    %2630 = vmatpush1.msra.mxu0 %v1935
    %2631 = vmatprep.subr.mxu0 %v1932
    %2632 = vmatpush1.msra.mxu0 %v1931
    %2633 = vmatprep.subr.mxu0 %v1928
    %2634 = vmatpush1.msra.mxu0 %v1927
    %2635 = vmatprep.subr.mxu0 %v1924
    %2636 = vmatpush1.msra.mxu0 %v1923
    %2637 = vmatprep.subr.mxu0 %v1920
    %2638 = vmatpush1.msra.mxu0 %v1919
    %2639 = vmatprep.subr.mxu0 %v1916
    %2640 = vmatpush1.msra.mxu0 %v1915
    %2641 = vmatprep.subr.mxu0 %v1912
    %2642 = vmatpush1.msra.mxu0 %v1911
    %2643 = vmatprep.subr.mxu0 %v1908
    %2644 = vmatpush1.msra.mxu0 %v1907
    %2645 = vmatprep.subr.mxu0 %v1904
    %2646 = vmatpush1.msra.mxu0 %v1903
    %2647 = vmatprep.subr.mxu0 %v1900
    %2648 = vmatpush1.msra.mxu0 %v1899
    %2649 = vmatprep.subr.mxu0 %v1896
    %2650 = vmatpush1.msra.mxu0 %v1895
    %2651 = vmatprep.subr.mxu0 0.0
    %2652 = vmatpush2.msra.mxu0 0.0
    %2653 = vmatprep.subr.mxu0 0.0
    %2654 = vmatpush2.msra.mxu0 0.0
    %2655 = vmatprep.subr.mxu0 0.0
    %2656 = vmatpush2.msra.mxu0 0.0
    %2657 = vmatprep.subr.mxu0 0.0
    %2658 = vmatpush2.msra.mxu0 0.0
    %2659 = vmatprep.subr.mxu0 0.0
    %2660 = vmatpush2.msra.mxu0 0.0
    %2661 = vmatprep.subr.mxu0 0.0
    %2662 = vmatpush2.msra.mxu0 0.0
    %2663 = vmatprep.subr.mxu0 0.0
    %2664 = vmatpush2.msra.mxu0 0.0
    %2665 = vmatprep.subr.mxu0 0.0
    %2666 = vmatpush2.msra.mxu0 0.0
    %2667 = vmatprep.subr.mxu0 0.0
    %2668 = vmatpush2.msra.mxu0 0.0
    %2669 = vmatprep.subr.mxu0 0.0
    %2670 = vmatpush2.msra.mxu0 0.0
    %2671 = vmatprep.subr.mxu0 0.0
    %2672 = vmatpush2.msra.mxu0 0.0
    %2673 = vmatprep.subr.mxu0 0.0
    %2674 = vmatpush2.msra.mxu0 0.0
    %2675 = vmatprep.subr.mxu0 0.0
    %2676 = vmatpush2.msra.mxu0 0.0
    %2677 = vmatprep.subr.mxu0 0.0
    %2678 = vmatpush2.msra.mxu0 0.0
    %2679 = vmatprep.subr.mxu0 0.0
    %2680 = vmatpush2.msra.mxu0 0.0
    %2681 = vmatprep.subr.mxu0 0.0
    %2682 = vmatpush2.msra.mxu0 0.0
    %2683 = vmatprep.mubr.f32.mxu0 0.0
    %2684 = vmatmul.mubr.f32.gmra.mxu0 %v2546
    %v2685 = vpop.f32.mrf.mxu0
    %v2686 = vadd.f32 0.0, %v2685
    %v2687 = vpop.f32.mrf.mxu0
    %v2688 = vadd.f32 0.0, %v2687
    %2689 = vdwg.mxu0
    %v2694 = vcombine.low %v2615, %v2617
    %v2695 = vcombine.low %v2686, %v2688
    %v2697 = vunpack.c.l.s4 1983009808
    %v2698 = vunpack.c.0.s8 %v2697
    %v2699 = vlaneseq
    %v2700 = vshrl.u32 %v2699, 7
    %v2701 = vsub.s32 %v2698, %v2700
    %v2702 = vrot.slane %v2694, %v2701
    %v2704 = vunpack.c.l.s4 1983009808
    %v2705 = vunpack.c.0.s8 %v2704
    %v2706 = vlaneseq
    %v2707 = vshrl.u32 %v2706, 7
    %v2708 = vsub.s32 %v2705, %v2707
    %v2709 = vrot.slane %v2695, %v2708
    %v2710 = vcombine.low %v2702, %v2709
    %v2712 = vadd.f32 %v2547, %v2710
    %v2713 = vxor.u32 %v2712, 2147483648
    %v2714 = vmul.f32 %v2713, 1.442695
    %v2715 = vpow.pop %v2714
    %v2716 = vadd.f32 %v2715, 1.0
    %v2717 = vrcp.pop %v2716
    %v2718 = vmul.f32 1.0, %v2717
    %v2720 = vrot.slane %v2712, 2
    %v2722 = vxor.u32 %v2720, 2147483648
    %v2723 = vmul.f32 %v2722, 1.442695
    %v2724 = vpow.pop %v2723
    %v2725 = vadd.f32 %v2724, 1.0
    %v2726 = vrcp.pop %v2725
    %v2727 = vmul.f32 1.0, %v2726
    %v2728 = vrot.slane %v2712, 4
    %v2730 = vtanh.pop %v2728
    %v2731 = vrot.slane %v2712, 6
    %v2733 = vxor.u32 %v2731, 2147483648
    %v2734 = vmul.f32 %v2733, 1.442695
    %v2735 = vpow.pop %v2734
    %v2736 = vadd.f32 %v2735, 1.0
    %v2737 = vrcp.pop %v2736
    %v2738 = vmul.f32 1.0, %v2737
    %v2739 = vmul.f32 %v2727, %v2544
    %v2740 = vmul.f32 %v2718, %v2730
    %v2741 = vadd.f32 %v2739, %v2740
    %v2742 = vtanh.pop %v2741
    %v2743 = vmul.f32 %v2738, %v2742
    %v2744 = vld [vmem:[%s1077] sm:$0xff]
    %2745 = vmatprep.subr.mxu0 %v1954
    %2746 = vmatpush1.msra.mxu0 %v1953
    %2747 = vmatprep.subr.mxu0 %v1950
    %2748 = vmatpush1.msra.mxu0 %v1949
    %2749 = vmatprep.subr.mxu0 %v1946
    %2750 = vmatpush1.msra.mxu0 %v1945
    %2751 = vmatprep.subr.mxu0 %v1942
    %2752 = vmatpush1.msra.mxu0 %v1941
    %2753 = vmatprep.subr.mxu0 %v1938
    %2754 = vmatpush1.msra.mxu0 %v1937
    %2755 = vmatprep.subr.mxu0 %v1934
    %2756 = vmatpush1.msra.mxu0 %v1933
    %2757 = vmatprep.subr.mxu0 %v1930
    %2758 = vmatpush1.msra.mxu0 %v1929
    %2759 = vmatprep.subr.mxu0 %v1926
    %2760 = vmatpush1.msra.mxu0 %v1925
    %2761 = vmatprep.subr.mxu0 %v1922
    %2762 = vmatpush1.msra.mxu0 %v1921
    %2763 = vmatprep.subr.mxu0 %v1918
    %2764 = vmatpush1.msra.mxu0 %v1917
    %2765 = vmatprep.subr.mxu0 %v1914
    %2766 = vmatpush1.msra.mxu0 %v1913
    %2767 = vmatprep.subr.mxu0 %v1910
    %2768 = vmatpush1.msra.mxu0 %v1909
    %2769 = vmatprep.subr.mxu0 %v1906
    %2770 = vmatpush1.msra.mxu0 %v1905
    %2771 = vmatprep.subr.mxu0 %v1902
    %2772 = vmatpush1.msra.mxu0 %v1901
    %2773 = vmatprep.subr.mxu0 %v1898
    %2774 = vmatpush1.msra.mxu0 %v1897
    %2775 = vmatprep.subr.mxu0 %v1894
    %2776 = vmatpush1.msra.mxu0 %v1893
    %2777 = vmatprep.subr.mxu0 0.0
    %2778 = vmatpush2.msra.mxu0 0.0
    %2779 = vmatprep.subr.mxu0 0.0
    %2780 = vmatpush2.msra.mxu0 0.0
    %2781 = vmatprep.subr.mxu0 0.0
    %2782 = vmatpush2.msra.mxu0 0.0
    %2783 = vmatprep.subr.mxu0 0.0
    %2784 = vmatpush2.msra.mxu0 0.0
    %2785 = vmatprep.subr.mxu0 0.0
    %2786 = vmatpush2.msra.mxu0 0.0
    %2787 = vmatprep.subr.mxu0 0.0
    %2788 = vmatpush2.msra.mxu0 0.0
    %2789 = vmatprep.subr.mxu0 0.0
    %2790 = vmatpush2.msra.mxu0 0.0
    %2791 = vmatprep.subr.mxu0 0.0
    %2792 = vmatpush2.msra.mxu0 0.0
    %2793 = vmatprep.subr.mxu0 0.0
    %2794 = vmatpush2.msra.mxu0 0.0
    %2795 = vmatprep.subr.mxu0 0.0
    %2796 = vmatpush2.msra.mxu0 0.0
    %2797 = vmatprep.subr.mxu0 0.0
    %2798 = vmatpush2.msra.mxu0 0.0
    %2799 = vmatprep.subr.mxu0 0.0
    %2800 = vmatpush2.msra.mxu0 0.0
    %2801 = vmatprep.subr.mxu0 0.0
    %2802 = vmatpush2.msra.mxu0 0.0
    %2803 = vmatprep.subr.mxu0 0.0
    %2804 = vmatpush2.msra.mxu0 0.0
    %2805 = vmatprep.subr.mxu0 0.0
    %2806 = vmatpush2.msra.mxu0 0.0
    %2807 = vmatprep.subr.mxu0 0.0
    %2808 = vmatpush2.msra.mxu0 0.0
    %2809 = vmatprep.mubr.f32.mxu0 0.0
    %2810 = vmatmul.mubr.f32.gmra.mxu0 %v2743
    %v2811 = vpop.f32.mrf.mxu0
    %v2812 = vadd.f32 0.0, %v2811
    %v2813 = vpop.f32.mrf.mxu0
    %v2814 = vadd.f32 0.0, %v2813
    %2815 = vdwg.mxu0
    %2816 = vmatprep.subr.mxu0 %v1956
    %2817 = vmatpush1.msra.mxu0 %v1955
    %2818 = vmatprep.subr.mxu0 %v1952
    %2819 = vmatpush1.msra.mxu0 %v1951
    %2820 = vmatprep.subr.mxu0 %v1948
    %2821 = vmatpush1.msra.mxu0 %v1947
    %2822 = vmatprep.subr.mxu0 %v1944
    %2823 = vmatpush1.msra.mxu0 %v1943
    %2824 = vmatprep.subr.mxu0 %v1940
    %2825 = vmatpush1.msra.mxu0 %v1939
    %2826 = vmatprep.subr.mxu0 %v1936
    %2827 = vmatpush1.msra.mxu0 %v1935
    %2828 = vmatprep.subr.mxu0 %v1932
    %2829 = vmatpush1.msra.mxu0 %v1931
    %2830 = vmatprep.subr.mxu0 %v1928
    %2831 = vmatpush1.msra.mxu0 %v1927
    %2832 = vmatprep.subr.mxu0 %v1924
    %2833 = vmatpush1.msra.mxu0 %v1923
    %2834 = vmatprep.subr.mxu0 %v1920
    %2835 = vmatpush1.msra.mxu0 %v1919
    %2836 = vmatprep.subr.mxu0 %v1916
    %2837 = vmatpush1.msra.mxu0 %v1915
    %2838 = vmatprep.subr.mxu0 %v1912
    %2839 = vmatpush1.msra.mxu0 %v1911
    %2840 = vmatprep.subr.mxu0 %v1908
    %2841 = vmatpush1.msra.mxu0 %v1907
    %2842 = vmatprep.subr.mxu0 %v1904
    %2843 = vmatpush1.msra.mxu0 %v1903
    %2844 = vmatprep.subr.mxu0 %v1900
    %2845 = vmatpush1.msra.mxu0 %v1899
    %2846 = vmatprep.subr.mxu0 %v1896
    %2847 = vmatpush1.msra.mxu0 %v1895
    %2848 = vmatprep.subr.mxu0 0.0
    %2849 = vmatpush2.msra.mxu0 0.0
    %2850 = vmatprep.subr.mxu0 0.0
    %2851 = vmatpush2.msra.mxu0 0.0
    %2852 = vmatprep.subr.mxu0 0.0
    %2853 = vmatpush2.msra.mxu0 0.0
    %2854 = vmatprep.subr.mxu0 0.0
    %2855 = vmatpush2.msra.mxu0 0.0
    %2856 = vmatprep.subr.mxu0 0.0
    %2857 = vmatpush2.msra.mxu0 0.0
    %2858 = vmatprep.subr.mxu0 0.0
    %2859 = vmatpush2.msra.mxu0 0.0
    %2860 = vmatprep.subr.mxu0 0.0
    %2861 = vmatpush2.msra.mxu0 0.0
    %2862 = vmatprep.subr.mxu0 0.0
    %2863 = vmatpush2.msra.mxu0 0.0
    %2864 = vmatprep.subr.mxu0 0.0
    %2865 = vmatpush2.msra.mxu0 0.0
    %2866 = vmatprep.subr.mxu0 0.0
    %2867 = vmatpush2.msra.mxu0 0.0
    %2868 = vmatprep.subr.mxu0 0.0
    %2869 = vmatpush2.msra.mxu0 0.0
    %2870 = vmatprep.subr.mxu0 0.0
    %2871 = vmatpush2.msra.mxu0 0.0
    %2872 = vmatprep.subr.mxu0 0.0
    %2873 = vmatpush2.msra.mxu0 0.0
    %2874 = vmatprep.subr.mxu0 0.0
    %2875 = vmatpush2.msra.mxu0 0.0
    %2876 = vmatprep.subr.mxu0 0.0
    %2877 = vmatpush2.msra.mxu0 0.0
    %2878 = vmatprep.subr.mxu0 0.0
    %2879 = vmatpush2.msra.mxu0 0.0
    %2880 = vmatprep.mubr.f32.mxu0 0.0
    %2881 = vmatmul.mubr.f32.gmra.mxu0 %v2743
    %v2882 = vpop.f32.mrf.mxu0
    %v2883 = vadd.f32 0.0, %v2882
    %v2884 = vpop.f32.mrf.mxu0
    %v2885 = vadd.f32 0.0, %v2884
    %2886 = vdwg.mxu0
    %v2891 = vcombine.low %v2812, %v2814
    %v2892 = vcombine.low %v2883, %v2885
    %v2894 = vunpack.c.l.s4 1983009808
    %v2895 = vunpack.c.0.s8 %v2894
    %v2896 = vlaneseq
    %v2897 = vshrl.u32 %v2896, 7
    %v2898 = vsub.s32 %v2895, %v2897
    %v2899 = vrot.slane %v2891, %v2898
    %v2901 = vunpack.c.l.s4 1983009808
    %v2902 = vunpack.c.0.s8 %v2901
    %v2903 = vlaneseq
    %v2904 = vshrl.u32 %v2903, 7
    %v2905 = vsub.s32 %v2902, %v2904
    %v2906 = vrot.slane %v2892, %v2905
    %v2907 = vcombine.low %v2899, %v2906
    %v2909 = vadd.f32 %v2744, %v2907
    %v2910 = vxor.u32 %v2909, 2147483648
    %v2911 = vmul.f32 %v2910, 1.442695
    %v2912 = vpow.pop %v2911
    %v2913 = vadd.f32 %v2912, 1.0
    %v2914 = vrcp.pop %v2913
    %v2915 = vmul.f32 1.0, %v2914
    %v2917 = vrot.slane %v2909, 2
    %v2919 = vxor.u32 %v2917, 2147483648
    %v2920 = vmul.f32 %v2919, 1.442695
    %v2921 = vpow.pop %v2920
    %v2922 = vadd.f32 %v2921, 1.0
    %v2923 = vrcp.pop %v2922
    %v2924 = vmul.f32 1.0, %v2923
    %v2925 = vrot.slane %v2909, 4
    %v2927 = vtanh.pop %v2925
    %v2928 = vrot.slane %v2909, 6
    %v2930 = vxor.u32 %v2928, 2147483648
    %v2931 = vmul.f32 %v2930, 1.442695
    %v2932 = vpow.pop %v2931
    %v2933 = vadd.f32 %v2932, 1.0
    %v2934 = vrcp.pop %v2933
    %v2935 = vmul.f32 1.0, %v2934
    %v2936 = vmul.f32 %v2924, %v2741
    %v2937 = vmul.f32 %v2915, %v2927
    %v2938 = vadd.f32 %v2936, %v2937
    %v2939 = vtanh.pop %v2938
    %v2940 = vmul.f32 %v2935, %v2939
    %v2941 = vld [vmem:[%s1284] sm:$0xff]
    %2942 = vmatprep.subr.mxu0 %v1954
    %2943 = vmatpush1.msra.mxu0 %v1953
    %2944 = vmatprep.subr.mxu0 %v1950
    %2945 = vmatpush1.msra.mxu0 %v1949
    %2946 = vmatprep.subr.mxu0 %v1946
    %2947 = vmatpush1.msra.mxu0 %v1945
    %2948 = vmatprep.subr.mxu0 %v1942
    %2949 = vmatpush1.msra.mxu0 %v1941
    %2950 = vmatprep.subr.mxu0 %v1938
    %2951 = vmatpush1.msra.mxu0 %v1937
    %2952 = vmatprep.subr.mxu0 %v1934
    %2953 = vmatpush1.msra.mxu0 %v1933
    %2954 = vmatprep.subr.mxu0 %v1930
    %2955 = vmatpush1.msra.mxu0 %v1929
    %2956 = vmatprep.subr.mxu0 %v1926
    %2957 = vmatpush1.msra.mxu0 %v1925
    %2958 = vmatprep.subr.mxu0 %v1922
    %2959 = vmatpush1.msra.mxu0 %v1921
    %2960 = vmatprep.subr.mxu0 %v1918
    %2961 = vmatpush1.msra.mxu0 %v1917
    %2962 = vmatprep.subr.mxu0 %v1914
    %2963 = vmatpush1.msra.mxu0 %v1913
    %2964 = vmatprep.subr.mxu0 %v1910
    %2965 = vmatpush1.msra.mxu0 %v1909
    %2966 = vmatprep.subr.mxu0 %v1906
    %2967 = vmatpush1.msra.mxu0 %v1905
    %2968 = vmatprep.subr.mxu0 %v1902
    %2969 = vmatpush1.msra.mxu0 %v1901
    %2970 = vmatprep.subr.mxu0 %v1898
    %2971 = vmatpush1.msra.mxu0 %v1897
    %2972 = vmatprep.subr.mxu0 %v1894
    %2973 = vmatpush1.msra.mxu0 %v1893
    %2974 = vmatprep.subr.mxu0 0.0
    %2975 = vmatpush2.msra.mxu0 0.0
    %2976 = vmatprep.subr.mxu0 0.0
    %2977 = vmatpush2.msra.mxu0 0.0
    %2978 = vmatprep.subr.mxu0 0.0
    %2979 = vmatpush2.msra.mxu0 0.0
    %2980 = vmatprep.subr.mxu0 0.0
    %2981 = vmatpush2.msra.mxu0 0.0
    %2982 = vmatprep.subr.mxu0 0.0
    %2983 = vmatpush2.msra.mxu0 0.0
    %2984 = vmatprep.subr.mxu0 0.0
    %2985 = vmatpush2.msra.mxu0 0.0
    %2986 = vmatprep.subr.mxu0 0.0
    %2987 = vmatpush2.msra.mxu0 0.0
    %2988 = vmatprep.subr.mxu0 0.0
    %2989 = vmatpush2.msra.mxu0 0.0
    %2990 = vmatprep.subr.mxu0 0.0
    %2991 = vmatpush2.msra.mxu0 0.0
    %2992 = vmatprep.subr.mxu0 0.0
    %2993 = vmatpush2.msra.mxu0 0.0
    %2994 = vmatprep.subr.mxu0 0.0
    %2995 = vmatpush2.msra.mxu0 0.0
    %2996 = vmatprep.subr.mxu0 0.0
    %2997 = vmatpush2.msra.mxu0 0.0
    %2998 = vmatprep.subr.mxu0 0.0
    %2999 = vmatpush2.msra.mxu0 0.0
    %3000 = vmatprep.subr.mxu0 0.0
    %3001 = vmatpush2.msra.mxu0 0.0
    %3002 = vmatprep.subr.mxu0 0.0
    %3003 = vmatpush2.msra.mxu0 0.0
    %3004 = vmatprep.subr.mxu0 0.0
    %3005 = vmatpush2.msra.mxu0 0.0
    %3006 = vmatprep.mubr.f32.mxu0 0.0
    %3007 = vmatmul.mubr.f32.gmra.mxu0 %v2940
    %v3008 = vpop.f32.mrf.mxu0
    %v3009 = vadd.f32 0.0, %v3008
    %v3010 = vpop.f32.mrf.mxu0
    %v3011 = vadd.f32 0.0, %v3010
    %3012 = vdwg.mxu0
    %3013 = vmatprep.subr.mxu0 %v1956
    %3014 = vmatpush1.msra.mxu0 %v1955
    %3015 = vmatprep.subr.mxu0 %v1952
    %3016 = vmatpush1.msra.mxu0 %v1951
    %3017 = vmatprep.subr.mxu0 %v1948
    %3018 = vmatpush1.msra.mxu0 %v1947
    %3019 = vmatprep.subr.mxu0 %v1944
    %3020 = vmatpush1.msra.mxu0 %v1943
    %3021 = vmatprep.subr.mxu0 %v1940
    %3022 = vmatpush1.msra.mxu0 %v1939
    %3023 = vmatprep.subr.mxu0 %v1936
    %3024 = vmatpush1.msra.mxu0 %v1935
    %3025 = vmatprep.subr.mxu0 %v1932
    %3026 = vmatpush1.msra.mxu0 %v1931
    %3027 = vmatprep.subr.mxu0 %v1928
    %3028 = vmatpush1.msra.mxu0 %v1927
    %3029 = vmatprep.subr.mxu0 %v1924
    %3030 = vmatpush1.msra.mxu0 %v1923
    %3031 = vmatprep.subr.mxu0 %v1920
    %3032 = vmatpush1.msra.mxu0 %v1919
    %3033 = vmatprep.subr.mxu0 %v1916
    %3034 = vmatpush1.msra.mxu0 %v1915
    %3035 = vmatprep.subr.mxu0 %v1912
    %3036 = vmatpush1.msra.mxu0 %v1911
    %3037 = vmatprep.subr.mxu0 %v1908
    %3038 = vmatpush1.msra.mxu0 %v1907
    %3039 = vmatprep.subr.mxu0 %v1904
    %3040 = vmatpush1.msra.mxu0 %v1903
    %3041 = vmatprep.subr.mxu0 %v1900
    %3042 = vmatpush1.msra.mxu0 %v1899
    %3043 = vmatprep.subr.mxu0 %v1896
    %3044 = vmatpush1.msra.mxu0 %v1895
    %3045 = vmatprep.subr.mxu0 0.0
    %3046 = vmatpush2.msra.mxu0 0.0
    %3047 = vmatprep.subr.mxu0 0.0
    %3048 = vmatpush2.msra.mxu0 0.0
    %3049 = vmatprep.subr.mxu0 0.0
    %3050 = vmatpush2.msra.mxu0 0.0
    %3051 = vmatprep.subr.mxu0 0.0
    %3052 = vmatpush2.msra.mxu0 0.0
    %3053 = vmatprep.subr.mxu0 0.0
    %3054 = vmatpush2.msra.mxu0 0.0
    %3055 = vmatprep.subr.mxu0 0.0
    %3056 = vmatpush2.msra.mxu0 0.0
    %3057 = vmatprep.subr.mxu0 0.0
    %3058 = vmatpush2.msra.mxu0 0.0
    %3059 = vmatprep.subr.mxu0 0.0
    %3060 = vmatpush2.msra.mxu0 0.0
    %3061 = vmatprep.subr.mxu0 0.0
    %3062 = vmatpush2.msra.mxu0 0.0
    %3063 = vmatprep.subr.mxu0 0.0
    %3064 = vmatpush2.msra.mxu0 0.0
    %3065 = vmatprep.subr.mxu0 0.0
    %3066 = vmatpush2.msra.mxu0 0.0
    %3067 = vmatprep.subr.mxu0 0.0
    %3068 = vmatpush2.msra.mxu0 0.0
    %3069 = vmatprep.subr.mxu0 0.0
    %3070 = vmatpush2.msra.mxu0 0.0
    %3071 = vmatprep.subr.mxu0 0.0
    %3072 = vmatpush2.msra.mxu0 0.0
    %3073 = vmatprep.subr.mxu0 0.0
    %3074 = vmatpush2.msra.mxu0 0.0
    %3075 = vmatprep.subr.mxu0 0.0
    %3076 = vmatpush2.msra.mxu0 0.0
    %3077 = vmatprep.mubr.f32.mxu0 0.0
    %3078 = vmatmul.mubr.f32.gmra.mxu0 %v2940
    %v3079 = vpop.f32.mrf.mxu0
    %v3080 = vadd.f32 0.0, %v3079
    %v3081 = vpop.f32.mrf.mxu0
    %v3082 = vadd.f32 0.0, %v3081
    %3083 = vdwg.mxu0
    %v3088 = vcombine.low %v3009, %v3011
    %v3089 = vcombine.low %v3080, %v3082
    %v3091 = vunpack.c.l.s4 1983009808
    %v3092 = vunpack.c.0.s8 %v3091
    %v3093 = vlaneseq
    %v3094 = vshrl.u32 %v3093, 7
    %v3095 = vsub.s32 %v3092, %v3094
    %v3096 = vrot.slane %v3088, %v3095
    %v3098 = vunpack.c.l.s4 1983009808
    %v3099 = vunpack.c.0.s8 %v3098
    %v3100 = vlaneseq
    %v3101 = vshrl.u32 %v3100, 7
    %v3102 = vsub.s32 %v3099, %v3101
    %v3103 = vrot.slane %v3089, %v3102
    %v3104 = vcombine.low %v3096, %v3103
    %v3106 = vadd.f32 %v2941, %v3104
    %v3107 = vxor.u32 %v3106, 2147483648
    %v3108 = vmul.f32 %v3107, 1.442695
    %v3109 = vpow.pop %v3108
    %v3110 = vadd.f32 %v3109, 1.0
    %v3111 = vrcp.pop %v3110
    %v3112 = vmul.f32 1.0, %v3111
    %v3114 = vrot.slane %v3106, 2
    %v3116 = vxor.u32 %v3114, 2147483648
    %v3117 = vmul.f32 %v3116, 1.442695
    %v3118 = vpow.pop %v3117
    %v3119 = vadd.f32 %v3118, 1.0
    %v3120 = vrcp.pop %v3119
    %v3121 = vmul.f32 1.0, %v3120
    %v3122 = vrot.slane %v3106, 4
    %v3124 = vtanh.pop %v3122
    %v3125 = vrot.slane %v3106, 6
    %v3127 = vxor.u32 %v3125, 2147483648
    %v3128 = vmul.f32 %v3127, 1.442695
    %v3129 = vpow.pop %v3128
    %v3130 = vadd.f32 %v3129, 1.0
    %v3131 = vrcp.pop %v3130
    %v3132 = vmul.f32 1.0, %v3131
    %v3133 = vmul.f32 %v3121, %v2938
    %v3134 = vmul.f32 %v3112, %v3124
    %v3135 = vadd.f32 %v3133, %v3134
    %v3136 = vtanh.pop %v3135
    %v3137 = vmul.f32 %v3132, %v3136
    %v3138 = vld [vmem:[%s1491] sm:$0xff]
    %3139 = vmatprep.subr.mxu0 %v1954
    %3140 = vmatpush1.msra.mxu0 %v1953
    %3141 = vmatprep.subr.mxu0 %v1950
    %3142 = vmatpush1.msra.mxu0 %v1949
    %3143 = vmatprep.subr.mxu0 %v1946
    %3144 = vmatpush1.msra.mxu0 %v1945
    %3145 = vmatprep.subr.mxu0 %v1942
    %3146 = vmatpush1.msra.mxu0 %v1941
    %3147 = vmatprep.subr.mxu0 %v1938
    %3148 = vmatpush1.msra.mxu0 %v1937
    %3149 = vmatprep.subr.mxu0 %v1934
    %3150 = vmatpush1.msra.mxu0 %v1933
    %3151 = vmatprep.subr.mxu0 %v1930
    %3152 = vmatpush1.msra.mxu0 %v1929
    %3153 = vmatprep.subr.mxu0 %v1926
    %3154 = vmatpush1.msra.mxu0 %v1925
    %3155 = vmatprep.subr.mxu0 %v1922
    %3156 = vmatpush1.msra.mxu0 %v1921
    %3157 = vmatprep.subr.mxu0 %v1918
    %3158 = vmatpush1.msra.mxu0 %v1917
    %3159 = vmatprep.subr.mxu0 %v1914
    %3160 = vmatpush1.msra.mxu0 %v1913
    %3161 = vmatprep.subr.mxu0 %v1910
    %3162 = vmatpush1.msra.mxu0 %v1909
    %3163 = vmatprep.subr.mxu0 %v1906
    %3164 = vmatpush1.msra.mxu0 %v1905
    %3165 = vmatprep.subr.mxu0 %v1902
    %3166 = vmatpush1.msra.mxu0 %v1901
    %3167 = vmatprep.subr.mxu0 %v1898
    %3168 = vmatpush1.msra.mxu0 %v1897
    %3169 = vmatprep.subr.mxu0 %v1894
    %3170 = vmatpush1.msra.mxu0 %v1893
    %3171 = vmatprep.subr.mxu0 0.0
    %3172 = vmatpush2.msra.mxu0 0.0
    %3173 = vmatprep.subr.mxu0 0.0
    %3174 = vmatpush2.msra.mxu0 0.0
    %3175 = vmatprep.subr.mxu0 0.0
    %3176 = vmatpush2.msra.mxu0 0.0
    %3177 = vmatprep.subr.mxu0 0.0
    %3178 = vmatpush2.msra.mxu0 0.0
    %3179 = vmatprep.subr.mxu0 0.0
    %3180 = vmatpush2.msra.mxu0 0.0
    %3181 = vmatprep.subr.mxu0 0.0
    %3182 = vmatpush2.msra.mxu0 0.0
    %3183 = vmatprep.subr.mxu0 0.0
    %3184 = vmatpush2.msra.mxu0 0.0
    %3185 = vmatprep.subr.mxu0 0.0
    %3186 = vmatpush2.msra.mxu0 0.0
    %3187 = vmatprep.subr.mxu0 0.0
    %3188 = vmatpush2.msra.mxu0 0.0
    %3189 = vmatprep.subr.mxu0 0.0
    %3190 = vmatpush2.msra.mxu0 0.0
    %3191 = vmatprep.subr.mxu0 0.0
    %3192 = vmatpush2.msra.mxu0 0.0
    %3193 = vmatprep.subr.mxu0 0.0
    %3194 = vmatpush2.msra.mxu0 0.0
    %3195 = vmatprep.subr.mxu0 0.0
    %3196 = vmatpush2.msra.mxu0 0.0
    %3197 = vmatprep.subr.mxu0 0.0
    %3198 = vmatpush2.msra.mxu0 0.0
    %3199 = vmatprep.subr.mxu0 0.0
    %3200 = vmatpush2.msra.mxu0 0.0
    %3201 = vmatprep.subr.mxu0 0.0
    %3202 = vmatpush2.msra.mxu0 0.0
    %3203 = vmatprep.mubr.f32.mxu0 0.0
    %3204 = vmatmul.mubr.f32.gmra.mxu0 %v3137
    %v3205 = vpop.f32.mrf.mxu0
    %v3206 = vadd.f32 0.0, %v3205
    %v3207 = vpop.f32.mrf.mxu0
    %v3208 = vadd.f32 0.0, %v3207
    %3209 = vdwg.mxu0
    %3210 = vmatprep.subr.mxu0 %v1956
    %3211 = vmatpush1.msra.mxu0 %v1955
    %3212 = vmatprep.subr.mxu0 %v1952
    %3213 = vmatpush1.msra.mxu0 %v1951
    %3214 = vmatprep.subr.mxu0 %v1948
    %3215 = vmatpush1.msra.mxu0 %v1947
    %3216 = vmatprep.subr.mxu0 %v1944
    %3217 = vmatpush1.msra.mxu0 %v1943
    %3218 = vmatprep.subr.mxu0 %v1940
    %3219 = vmatpush1.msra.mxu0 %v1939
    %3220 = vmatprep.subr.mxu0 %v1936
    %3221 = vmatpush1.msra.mxu0 %v1935
    %3222 = vmatprep.subr.mxu0 %v1932
    %3223 = vmatpush1.msra.mxu0 %v1931
    %3224 = vmatprep.subr.mxu0 %v1928
    %3225 = vmatpush1.msra.mxu0 %v1927
    %3226 = vmatprep.subr.mxu0 %v1924
    %3227 = vmatpush1.msra.mxu0 %v1923
    %3228 = vmatprep.subr.mxu0 %v1920
    %3229 = vmatpush1.msra.mxu0 %v1919
    %3230 = vmatprep.subr.mxu0 %v1916
    %3231 = vmatpush1.msra.mxu0 %v1915
    %3232 = vmatprep.subr.mxu0 %v1912
    %3233 = vmatpush1.msra.mxu0 %v1911
    %3234 = vmatprep.subr.mxu0 %v1908
    %3235 = vmatpush1.msra.mxu0 %v1907
    %3236 = vmatprep.subr.mxu0 %v1904
    %3237 = vmatpush1.msra.mxu0 %v1903
    %3238 = vmatprep.subr.mxu0 %v1900
    %3239 = vmatpush1.msra.mxu0 %v1899
    %3240 = vmatprep.subr.mxu0 %v1896
    %3241 = vmatpush1.msra.mxu0 %v1895
    %3242 = vmatprep.subr.mxu0 0.0
    %3243 = vmatpush2.msra.mxu0 0.0
    %3244 = vmatprep.subr.mxu0 0.0
    %3245 = vmatpush2.msra.mxu0 0.0
    %3246 = vmatprep.subr.mxu0 0.0
    %3247 = vmatpush2.msra.mxu0 0.0
    %3248 = vmatprep.subr.mxu0 0.0
    %3249 = vmatpush2.msra.mxu0 0.0
    %3250 = vmatprep.subr.mxu0 0.0
    %3251 = vmatpush2.msra.mxu0 0.0
    %3252 = vmatprep.subr.mxu0 0.0
    %3253 = vmatpush2.msra.mxu0 0.0
    %3254 = vmatprep.subr.mxu0 0.0
    %3255 = vmatpush2.msra.mxu0 0.0
    %3256 = vmatprep.subr.mxu0 0.0
    %3257 = vmatpush2.msra.mxu0 0.0
    %3258 = vmatprep.subr.mxu0 0.0
    %3259 = vmatpush2.msra.mxu0 0.0
    %3260 = vmatprep.subr.mxu0 0.0
    %3261 = vmatpush2.msra.mxu0 0.0
    %3262 = vmatprep.subr.mxu0 0.0
    %3263 = vmatpush2.msra.mxu0 0.0
    %3264 = vmatprep.subr.mxu0 0.0
    %3265 = vmatpush2.msra.mxu0 0.0
    %3266 = vmatprep.subr.mxu0 0.0
    %3267 = vmatpush2.msra.mxu0 0.0
    %3268 = vmatprep.subr.mxu0 0.0
    %3269 = vmatpush2.msra.mxu0 0.0
    %3270 = vmatprep.subr.mxu0 0.0
    %3271 = vmatpush2.msra.mxu0 0.0
    %3272 = vmatprep.subr.mxu0 0.0
    %3273 = vmatpush2.msra.mxu0 0.0
    %3274 = vmatprep.mubr.f32.mxu0 0.0
    %3275 = vmatmul.mubr.f32.gmra.mxu0 %v3137
    %v3276 = vpop.f32.mrf.mxu0
    %v3277 = vadd.f32 0.0, %v3276
    %v3278 = vpop.f32.mrf.mxu0
    %v3279 = vadd.f32 0.0, %v3278
    %3280 = vdwg.mxu0
    %v3285 = vcombine.low %v3206, %v3208
    %v3286 = vcombine.low %v3277, %v3279
    %v3288 = vunpack.c.l.s4 1983009808
    %v3289 = vunpack.c.0.s8 %v3288
    %v3290 = vlaneseq
    %v3291 = vshrl.u32 %v3290, 7
    %v3292 = vsub.s32 %v3289, %v3291
    %v3293 = vrot.slane %v3285, %v3292
    %v3295 = vunpack.c.l.s4 1983009808
    %v3296 = vunpack.c.0.s8 %v3295
    %v3297 = vlaneseq
    %v3298 = vshrl.u32 %v3297, 7
    %v3299 = vsub.s32 %v3296, %v3298
    %v3300 = vrot.slane %v3286, %v3299
    %v3301 = vcombine.low %v3293, %v3300
    %v3303 = vadd.f32 %v3138, %v3301
    %v3304 = vxor.u32 %v3303, 2147483648
    %v3305 = vmul.f32 %v3304, 1.442695
    %v3306 = vpow.pop %v3305
    %v3307 = vadd.f32 %v3306, 1.0
    %v3308 = vrcp.pop %v3307
    %v3309 = vmul.f32 1.0, %v3308
    %v3311 = vrot.slane %v3303, 2
    %v3313 = vxor.u32 %v3311, 2147483648
    %v3314 = vmul.f32 %v3313, 1.442695
    %v3315 = vpow.pop %v3314
    %v3316 = vadd.f32 %v3315, 1.0
    %v3317 = vrcp.pop %v3316
    %v3318 = vmul.f32 1.0, %v3317
    %v3319 = vrot.slane %v3303, 4
    %v3321 = vtanh.pop %v3319
    %v3322 = vrot.slane %v3303, 6
    %v3324 = vxor.u32 %v3322, 2147483648
    %v3325 = vmul.f32 %v3324, 1.442695
    %v3326 = vpow.pop %v3325
    %v3327 = vadd.f32 %v3326, 1.0
    %v3328 = vrcp.pop %v3327
    %v3329 = vmul.f32 1.0, %v3328
    %v3330 = vmul.f32 %v3318, %v3135
    %v3331 = vmul.f32 %v3309, %v3321
    %v3332 = vadd.f32 %v3330, %v3331
    %v3333 = vtanh.pop %v3332
    %v3334 = vmul.f32 %v3329, %v3333
    %v3335 = vld [vmem:[%s1698] sm:$0xff]
    %3336 = vmatprep.subr.mxu0 %v1954
    %3337 = vmatpush1.msra.mxu0 %v1953
    %3338 = vmatprep.subr.mxu0 %v1950
    %3339 = vmatpush1.msra.mxu0 %v1949
    %3340 = vmatprep.subr.mxu0 %v1946
    %3341 = vmatpush1.msra.mxu0 %v1945
    %3342 = vmatprep.subr.mxu0 %v1942
    %3343 = vmatpush1.msra.mxu0 %v1941
    %3344 = vmatprep.subr.mxu0 %v1938
    %3345 = vmatpush1.msra.mxu0 %v1937
    %3346 = vmatprep.subr.mxu0 %v1934
    %3347 = vmatpush1.msra.mxu0 %v1933
    %3348 = vmatprep.subr.mxu0 %v1930
    %3349 = vmatpush1.msra.mxu0 %v1929
    %3350 = vmatprep.subr.mxu0 %v1926
    %3351 = vmatpush1.msra.mxu0 %v1925
    %3352 = vmatprep.subr.mxu0 %v1922
    %3353 = vmatpush1.msra.mxu0 %v1921
    %3354 = vmatprep.subr.mxu0 %v1918
    %3355 = vmatpush1.msra.mxu0 %v1917
    %3356 = vmatprep.subr.mxu0 %v1914
    %3357 = vmatpush1.msra.mxu0 %v1913
    %3358 = vmatprep.subr.mxu0 %v1910
    %3359 = vmatpush1.msra.mxu0 %v1909
    %3360 = vmatprep.subr.mxu0 %v1906
    %3361 = vmatpush1.msra.mxu0 %v1905
    %3362 = vmatprep.subr.mxu0 %v1902
    %3363 = vmatpush1.msra.mxu0 %v1901
    %3364 = vmatprep.subr.mxu0 %v1898
    %3365 = vmatpush1.msra.mxu0 %v1897
    %3366 = vmatprep.subr.mxu0 %v1894
    %3367 = vmatpush1.msra.mxu0 %v1893
    %3368 = vmatprep.subr.mxu0 0.0
    %3369 = vmatpush2.msra.mxu0 0.0
    %3370 = vmatprep.subr.mxu0 0.0
    %3371 = vmatpush2.msra.mxu0 0.0
    %3372 = vmatprep.subr.mxu0 0.0
    %3373 = vmatpush2.msra.mxu0 0.0
    %3374 = vmatprep.subr.mxu0 0.0
    %3375 = vmatpush2.msra.mxu0 0.0
    %3376 = vmatprep.subr.mxu0 0.0
    %3377 = vmatpush2.msra.mxu0 0.0
    %3378 = vmatprep.subr.mxu0 0.0
    %3379 = vmatpush2.msra.mxu0 0.0
    %3380 = vmatprep.subr.mxu0 0.0
    %3381 = vmatpush2.msra.mxu0 0.0
    %3382 = vmatprep.subr.mxu0 0.0
    %3383 = vmatpush2.msra.mxu0 0.0
    %3384 = vmatprep.subr.mxu0 0.0
    %3385 = vmatpush2.msra.mxu0 0.0
    %3386 = vmatprep.subr.mxu0 0.0
    %3387 = vmatpush2.msra.mxu0 0.0
    %3388 = vmatprep.subr.mxu0 0.0
    %3389 = vmatpush2.msra.mxu0 0.0
    %3390 = vmatprep.subr.mxu0 0.0
    %3391 = vmatpush2.msra.mxu0 0.0
    %3392 = vmatprep.subr.mxu0 0.0
    %3393 = vmatpush2.msra.mxu0 0.0
    %3394 = vmatprep.subr.mxu0 0.0
    %3395 = vmatpush2.msra.mxu0 0.0
    %3396 = vmatprep.subr.mxu0 0.0
    %3397 = vmatpush2.msra.mxu0 0.0
    %3398 = vmatprep.subr.mxu0 0.0
    %3399 = vmatpush2.msra.mxu0 0.0
    %3400 = vmatprep.mubr.f32.mxu0 0.0
    %3401 = vmatmul.mubr.f32.gmra.mxu0 %v3334
    %v3402 = vpop.f32.mrf.mxu0
    %v3403 = vadd.f32 0.0, %v3402
    %v3404 = vpop.f32.mrf.mxu0
    %v3405 = vadd.f32 0.0, %v3404
    %3406 = vdwg.mxu0
    %3407 = vmatprep.subr.mxu0 %v1956
    %3408 = vmatpush1.msra.mxu0 %v1955
    %3409 = vmatprep.subr.mxu0 %v1952
    %3410 = vmatpush1.msra.mxu0 %v1951
    %3411 = vmatprep.subr.mxu0 %v1948
    %3412 = vmatpush1.msra.mxu0 %v1947
    %3413 = vmatprep.subr.mxu0 %v1944
    %3414 = vmatpush1.msra.mxu0 %v1943
    %3415 = vmatprep.subr.mxu0 %v1940
    %3416 = vmatpush1.msra.mxu0 %v1939
    %3417 = vmatprep.subr.mxu0 %v1936
    %3418 = vmatpush1.msra.mxu0 %v1935
    %3419 = vmatprep.subr.mxu0 %v1932
    %3420 = vmatpush1.msra.mxu0 %v1931
    %3421 = vmatprep.subr.mxu0 %v1928
    %3422 = vmatpush1.msra.mxu0 %v1927
    %3423 = vmatprep.subr.mxu0 %v1924
    %3424 = vmatpush1.msra.mxu0 %v1923
    %3425 = vmatprep.subr.mxu0 %v1920
    %3426 = vmatpush1.msra.mxu0 %v1919
    %3427 = vmatprep.subr.mxu0 %v1916
    %3428 = vmatpush1.msra.mxu0 %v1915
    %3429 = vmatprep.subr.mxu0 %v1912
    %3430 = vmatpush1.msra.mxu0 %v1911
    %3431 = vmatprep.subr.mxu0 %v1908
    %3432 = vmatpush1.msra.mxu0 %v1907
    %3433 = vmatprep.subr.mxu0 %v1904
    %3434 = vmatpush1.msra.mxu0 %v1903
    %3435 = vmatprep.subr.mxu0 %v1900
    %3436 = vmatpush1.msra.mxu0 %v1899
    %3437 = vmatprep.subr.mxu0 %v1896
    %3438 = vmatpush1.msra.mxu0 %v1895
    %3439 = vmatprep.subr.mxu0 0.0
    %3440 = vmatpush2.msra.mxu0 0.0
    %3441 = vmatprep.subr.mxu0 0.0
    %3442 = vmatpush2.msra.mxu0 0.0
    %3443 = vmatprep.subr.mxu0 0.0
    %3444 = vmatpush2.msra.mxu0 0.0
    %3445 = vmatprep.subr.mxu0 0.0
    %3446 = vmatpush2.msra.mxu0 0.0
    %3447 = vmatprep.subr.mxu0 0.0
    %3448 = vmatpush2.msra.mxu0 0.0
    %3449 = vmatprep.subr.mxu0 0.0
    %3450 = vmatpush2.msra.mxu0 0.0
    %3451 = vmatprep.subr.mxu0 0.0
    %3452 = vmatpush2.msra.mxu0 0.0
    %3453 = vmatprep.subr.mxu0 0.0
    %3454 = vmatpush2.msra.mxu0 0.0
    %3455 = vmatprep.subr.mxu0 0.0
    %3456 = vmatpush2.msra.mxu0 0.0
    %3457 = vmatprep.subr.mxu0 0.0
    %3458 = vmatpush2.msra.mxu0 0.0
    %3459 = vmatprep.subr.mxu0 0.0
    %3460 = vmatpush2.msra.mxu0 0.0
    %3461 = vmatprep.subr.mxu0 0.0
    %3462 = vmatpush2.msra.mxu0 0.0
    %3463 = vmatprep.subr.mxu0 0.0
    %3464 = vmatpush2.msra.mxu0 0.0
    %3465 = vmatprep.subr.mxu0 0.0
    %3466 = vmatpush2.msra.mxu0 0.0
    %3467 = vmatprep.subr.mxu0 0.0
    %3468 = vmatpush2.msra.mxu0 0.0
    %3469 = vmatprep.subr.mxu0 0.0
    %3470 = vmatpush2.msra.mxu0 0.0
    %3471 = vmatprep.mubr.f32.mxu0 0.0
    %3472 = vmatmul.mubr.f32.gmra.mxu0 %v3334
    %v3473 = vpop.f32.mrf.mxu0
    %v3474 = vadd.f32 0.0, %v3473
    %v3475 = vpop.f32.mrf.mxu0
    %v3476 = vadd.f32 0.0, %v3475
    %3477 = vdwg.mxu0
    %v3482 = vcombine.low %v3403, %v3405
    %v3483 = vcombine.low %v3474, %v3476
    %v3485 = vunpack.c.l.s4 1983009808
    %v3486 = vunpack.c.0.s8 %v3485
    %v3487 = vlaneseq
    %v3488 = vshrl.u32 %v3487, 7
    %v3489 = vsub.s32 %v3486, %v3488
    %v3490 = vrot.slane %v3482, %v3489
    %v3492 = vunpack.c.l.s4 1983009808
    %v3493 = vunpack.c.0.s8 %v3492
    %v3494 = vlaneseq
    %v3495 = vshrl.u32 %v3494, 7
    %v3496 = vsub.s32 %v3493, %v3495
    %v3497 = vrot.slane %v3483, %v3496
    %v3498 = vcombine.low %v3490, %v3497
    %v3500 = vadd.f32 %v3335, %v3498
    %v3501 = vxor.u32 %v3500, 2147483648
    %v3502 = vmul.f32 %v3501, 1.442695
    %v3503 = vpow.pop %v3502
    %v3504 = vadd.f32 %v3503, 1.0
    %v3505 = vrcp.pop %v3504
    %v3506 = vmul.f32 1.0, %v3505
    %v3508 = vrot.slane %v3500, 2
    %v3510 = vxor.u32 %v3508, 2147483648
    %v3511 = vmul.f32 %v3510, 1.442695
    %v3512 = vpow.pop %v3511
    %v3513 = vadd.f32 %v3512, 1.0
    %v3514 = vrcp.pop %v3513
    %v3515 = vmul.f32 1.0, %v3514
    %v3516 = vrot.slane %v3500, 4
    %v3518 = vtanh.pop %v3516
    %v3519 = vrot.slane %v3500, 6
    %v3521 = vxor.u32 %v3519, 2147483648
    %v3522 = vmul.f32 %v3521, 1.442695
    %v3523 = vpow.pop %v3522
    %v3524 = vadd.f32 %v3523, 1.0
    %v3525 = vrcp.pop %v3524
    %v3526 = vmul.f32 1.0, %v3525
    %v3527 = vmul.f32 %v3515, %v3332
    %v3528 = vmul.f32 %v3506, %v3518
    %v3529 = vadd.f32 %v3527, %v3528
    %v3530 = vtanh.pop %v3529
    %v3531 = vmul.f32 %v3526, %v3530
    %v3532 = vld [vmem:[%s6] sm:$0xff]
    %v3533 = vld [vmem:[%s6 + $0x8] sm:$0xff]
    %v3534 = vld [vmem:[%s6 + $0x10] sm:$0xff]
    %v3535 = vld [vmem:[%s6 + $0x18] sm:$0xff]
    %v3536 = vld [vmem:[%s6 + $0x20] sm:$0xff]
    %v3537 = vld [vmem:[%s6 + $0x28] sm:$0xff]
    %v3538 = vld [vmem:[%s6 + $0x30] sm:$0xff]
    %v3539 = vld [vmem:[%s6 + $0x38] sm:$0xff]
    %v3540 = vld [vmem:[%s6 + $0x40] sm:$0xff]
    %v3541 = vld [vmem:[%s6 + $0x48] sm:$0xff]
    %v3542 = vld [vmem:[%s6 + $0x50] sm:$0xff]
    %v3543 = vld [vmem:[%s6 + $0x58] sm:$0xff]
    %v3544 = vld [vmem:[%s6 + $0x60] sm:$0xff]
    %v3545 = vld [vmem:[%s6 + $0x68] sm:$0xff]
    %v3546 = vld [vmem:[%s6 + $0x70] sm:$0xff]
    %v3547 = vld [vmem:[%s6 + $0x78] sm:$0xff]
    %v3548 = vld [vmem:[%s6 + $0x80] sm:$0xff]
    %v3549 = vld [vmem:[%s6 + $0x88] sm:$0xff]
    %v3550 = vld [vmem:[%s6 + $0x90] sm:$0xff]
    %v3551 = vld [vmem:[%s6 + $0x98] sm:$0xff]
    %v3552 = vld [vmem:[%s6 + $0xa0] sm:$0xff]
    %v3553 = vld [vmem:[%s6 + $0xa8] sm:$0xff]
    %v3554 = vld [vmem:[%s6 + $0xb0] sm:$0xff]
    %v3555 = vld [vmem:[%s6 + $0xb8] sm:$0xff]
    %v3556 = vld [vmem:[%s6 + $0xc0] sm:$0xff]
    %v3557 = vld [vmem:[%s6 + $0xc8] sm:$0xff]
    %v3558 = vld [vmem:[%s6 + $0xd0] sm:$0xff]
    %v3559 = vld [vmem:[%s6 + $0xd8] sm:$0xff]
    %v3560 = vld [vmem:[%s6 + $0xe0] sm:$0xff]
    %v3561 = vld [vmem:[%s6 + $0xe8] sm:$0xff]
    %v3562 = vld [vmem:[%s6 + $0xf0] sm:$0xff]
    %v3563 = vld [vmem:[%s6 + $0xf8] sm:$0xff]
    %3564 = vmatprep.subr.mxu0 0.0
    %3565 = vmatpush1.msra.mxu0 %v3563
    %3566 = vmatprep.subr.mxu0 0.0
    %3567 = vmatpush1.msra.mxu0 %v3562
    %3568 = vmatprep.subr.mxu0 0.0
    %3569 = vmatpush1.msra.mxu0 %v3561
    %3570 = vmatprep.subr.mxu0 0.0
    %3571 = vmatpush1.msra.mxu0 %v3560
    %3572 = vmatprep.subr.mxu0 0.0
    %3573 = vmatpush1.msra.mxu0 %v3559
    %3574 = vmatprep.subr.mxu0 0.0
    %3575 = vmatpush1.msra.mxu0 %v3558
    %3576 = vmatprep.subr.mxu0 0.0
    %3577 = vmatpush1.msra.mxu0 %v3557
    %3578 = vmatprep.subr.mxu0 0.0
    %3579 = vmatpush1.msra.mxu0 %v3556
    %3580 = vmatprep.subr.mxu0 0.0
    %3581 = vmatpush1.msra.mxu0 %v3555
    %3582 = vmatprep.subr.mxu0 0.0
    %3583 = vmatpush1.msra.mxu0 %v3554
    %3584 = vmatprep.subr.mxu0 0.0
    %3585 = vmatpush1.msra.mxu0 %v3553
    %3586 = vmatprep.subr.mxu0 0.0
    %3587 = vmatpush1.msra.mxu0 %v3552
    %3588 = vmatprep.subr.mxu0 0.0
    %3589 = vmatpush1.msra.mxu0 %v3551
    %3590 = vmatprep.subr.mxu0 0.0
    %3591 = vmatpush1.msra.mxu0 %v3550
    %3592 = vmatprep.subr.mxu0 0.0
    %3593 = vmatpush1.msra.mxu0 %v3549
    %3594 = vmatprep.subr.mxu0 0.0
    %3595 = vmatpush1.msra.mxu0 %v3548
    %3596 = vmatprep.subr.mxu0 0.0
    %3597 = vmatpush2.msra.mxu0 0.0
    %3598 = vmatprep.subr.mxu0 0.0
    %3599 = vmatpush2.msra.mxu0 0.0
    %3600 = vmatprep.subr.mxu0 0.0
    %3601 = vmatpush2.msra.mxu0 0.0
    %3602 = vmatprep.subr.mxu0 0.0
    %3603 = vmatpush2.msra.mxu0 0.0
    %3604 = vmatprep.subr.mxu0 0.0
    %3605 = vmatpush2.msra.mxu0 0.0
    %3606 = vmatprep.subr.mxu0 0.0
    %3607 = vmatpush2.msra.mxu0 0.0
    %3608 = vmatprep.subr.mxu0 0.0
    %3609 = vmatpush2.msra.mxu0 0.0
    %3610 = vmatprep.subr.mxu0 0.0
    %3611 = vmatpush2.msra.mxu0 0.0
    %3612 = vmatprep.subr.mxu0 0.0
    %3613 = vmatpush2.msra.mxu0 0.0
    %3614 = vmatprep.subr.mxu0 0.0
    %3615 = vmatpush2.msra.mxu0 0.0
    %3616 = vmatprep.subr.mxu0 0.0
    %3617 = vmatpush2.msra.mxu0 0.0
    %3618 = vmatprep.subr.mxu0 0.0
    %3619 = vmatpush2.msra.mxu0 0.0
    %3620 = vmatprep.subr.mxu0 0.0
    %3621 = vmatpush2.msra.mxu0 0.0
    %3622 = vmatprep.subr.mxu0 0.0
    %3623 = vmatpush2.msra.mxu0 0.0
    %3624 = vmatprep.subr.mxu0 0.0
    %3625 = vmatpush2.msra.mxu0 0.0
    %3626 = vmatprep.subr.mxu0 0.0
    %3627 = vmatpush2.msra.mxu0 0.0
    %3628 = vmatprep.mubr.f32.mxu0 0.0
    %3629 = vmatmul.mubr.f32.gmra.mxu0 %v1891
    %v3630 = vpop.f32.mrf.mxu0
    %v3631 = vadd.f32 0.0, %v3630
    %v3632 = vpop.f32.mrf.mxu0
    %3633 = vdwg.mxu0
    %3634 = vmatprep.subr.mxu0 0.0
    %3635 = vmatpush1.msra.mxu0 %v3547
    %3636 = vmatprep.subr.mxu0 0.0
    %3637 = vmatpush1.msra.mxu0 %v3546
    %3638 = vmatprep.subr.mxu0 0.0
    %3639 = vmatpush1.msra.mxu0 %v3545
    %3640 = vmatprep.subr.mxu0 0.0
    %3641 = vmatpush1.msra.mxu0 %v3544
    %3642 = vmatprep.subr.mxu0 0.0
    %3643 = vmatpush1.msra.mxu0 %v3543
    %3644 = vmatprep.subr.mxu0 0.0
    %3645 = vmatpush1.msra.mxu0 %v3542
    %3646 = vmatprep.subr.mxu0 0.0
    %3647 = vmatpush1.msra.mxu0 %v3541
    %3648 = vmatprep.subr.mxu0 0.0
    %3649 = vmatpush1.msra.mxu0 %v3540
    %3650 = vmatprep.subr.mxu0 0.0
    %3651 = vmatpush1.msra.mxu0 %v3539
    %3652 = vmatprep.subr.mxu0 0.0
    %3653 = vmatpush1.msra.mxu0 %v3538
    %3654 = vmatprep.subr.mxu0 0.0
    %3655 = vmatpush1.msra.mxu0 %v3537
    %3656 = vmatprep.subr.mxu0 0.0
    %3657 = vmatpush1.msra.mxu0 %v3536
    %3658 = vmatprep.subr.mxu0 0.0
    %3659 = vmatpush1.msra.mxu0 %v3535
    %3660 = vmatprep.subr.mxu0 0.0
    %3661 = vmatpush1.msra.mxu0 %v3534
    %3662 = vmatprep.subr.mxu0 0.0
    %3663 = vmatpush1.msra.mxu0 %v3533
    %3664 = vmatprep.subr.mxu0 0.0
    %3665 = vmatpush1.msra.mxu0 %v3532
    %3666 = vmatprep.subr.mxu0 0.0
    %3667 = vmatpush2.msra.mxu0 0.0
    %3668 = vmatprep.subr.mxu0 0.0
    %3669 = vmatpush2.msra.mxu0 0.0
    %3670 = vmatprep.subr.mxu0 0.0
    %3671 = vmatpush2.msra.mxu0 0.0
    %3672 = vmatprep.subr.mxu0 0.0
    %3673 = vmatpush2.msra.mxu0 0.0
    %3674 = vmatprep.subr.mxu0 0.0
    %3675 = vmatpush2.msra.mxu0 0.0
    %3676 = vmatprep.subr.mxu0 0.0
    %3677 = vmatpush2.msra.mxu0 0.0
    %3678 = vmatprep.subr.mxu0 0.0
    %3679 = vmatpush2.msra.mxu0 0.0
    %3680 = vmatprep.subr.mxu0 0.0
    %3681 = vmatpush2.msra.mxu0 0.0
    %3682 = vmatprep.subr.mxu0 0.0
    %3683 = vmatpush2.msra.mxu0 0.0
    %3684 = vmatprep.subr.mxu0 0.0
    %3685 = vmatpush2.msra.mxu0 0.0
    %3686 = vmatprep.subr.mxu0 0.0
    %3687 = vmatpush2.msra.mxu0 0.0
    %3688 = vmatprep.subr.mxu0 0.0
    %3689 = vmatpush2.msra.mxu0 0.0
    %3690 = vmatprep.subr.mxu0 0.0
    %3691 = vmatpush2.msra.mxu0 0.0
    %3692 = vmatprep.subr.mxu0 0.0
    %3693 = vmatpush2.msra.mxu0 0.0
    %3694 = vmatprep.subr.mxu0 0.0
    %3695 = vmatpush2.msra.mxu0 0.0
    %3696 = vmatprep.subr.mxu0 0.0
    %3697 = vmatpush2.msra.mxu0 0.0
    %3698 = vmatprep.mubr.f32.mxu0 0.0
    %3699 = vmatmul.mubr.f32.gmra.mxu0 %v3531
    %v3700 = vpop.f32.mrf.mxu0
    %v3701 = vadd.f32 %v3631, %v3700
    %v3702 = vpop.f32.mrf.mxu0
    %3703 = vdwg.mxu0
    %v3704 = vld [vmem:[%s7] sm:$0x1]
    %v3706 = vlaneseq
    %v3707 = vshrl.u32 %v3706, 7
    %v3708 = vsub.s32 0, %v3707
    %v3709 = vrot.slane %v3704, %v3708
    %v3711 = vadd.f32 %v3701, %v3709
    %vm3712 = vcmask 17408
    %3713 = vst.msk [vmem:[#allocation6] sm:$0x3] %vm3712, %v3711
    // Predicated region
    $region38: #{tpu_custom_call.1} parent=1 // pred_check
      _
    $region39: #{tpu_custom_call.1} parent=1 // pred_check_branch
      %3715 = sbr.rel (0) target = $region41
    $region40: #{tpu_custom_call.1} parent=1 // pred_region
      %s3717 = ssub.s32 32, 32
      %3718 = vsyncadd [#allocation5], %s3717
      %s3720 = sshll.u32 [#allocation6], 4
      %s3721 = int_to_ptr.vmem [resolvable:$true] %s3720
      %3723 = dma.vmem_to_hbm [thread:$0]  %s3721, 32, %s8, [#allocation5]
    $region41: #{tpu_custom_call.1} parent=1 // pred_fallthru
      _
    // Predicated region
    $region42: #{tpu_custom_call.1} parent=1 // pred_check
      _
    $region43: #{tpu_custom_call.1} parent=1 // pred_check_branch
      %3725 = sbr.rel (0) target = $region45
    $region44: #{tpu_custom_call.1} parent=1 // pred_region
      %3726 = dma.done [#allocation5], 32
    $region45: #{tpu_custom_call.1} parent=1 // pred_fallthru
      _
    %3727 = vsyncpa [#allocation4], 1
    %3728 = vsyncpa [#allocation5], 1

</llo_original>
